<compile_context>
chip_gen: v5e
topology: v5e:2x2
jax: 0.10.0
libtpu: 0.0.40
codegen_flags: <defaults>
</compile_context>

<pallas_src>
import functools

import jax
import jax.numpy as jnp
from jax.experimental import pallas as pl
from jax.experimental.pallas import tpu as pltpu

LANE = 128      # TPU lane width   (minor vreg dim)
SUBLANE = 8     # TPU sublane width (second-minor vreg dim)
BN_EPS = 1e-5


def _round_up(x, m):
    return (x + m - 1) // m * m


def _vmem_capacity_bytes():
    try:
        return int(pltpu.get_tpu_info().vmem_capacity_bytes)
    except Exception:
        return 64 * 1024 * 1024        # conservative: v7x per-TensorCore VMEM


# ----------------------------- Pallas kernel -------------------------------

def _repblock_fused_kernel(x_ref, w_ref, b_ref, o_ref, buf_ref, col_ref, *, H, W):
    """One fused RepVGG layer (3x3 conv + bias + ReLU) per grid step.

    Grid: (N, L) -- image n ("parallel"), layer l ("arbitrary", sequential).

    x_ref  : (1, Hp, Wp, C)  bf16 spatially + channel padded input image n
    w_ref  : (1, 9*C, C)     bf16 fused weight of layer l (tap-major, t = ky*3+kx)
    b_ref  : (1, 1, C)       f32 fused bias of layer l
    o_ref  : (1, H*W, C)     f32 lane-dense output (written only at l == L-1)
    buf_ref: (2, Hp, Wp, C)  bf16 ping-pong activation scratch with zero halo
    col_ref: (H*W, 9*C)      bf16 im2col scratch
    """
    l = pl.program_id(1)
    L = pl.num_programs(1)
    C = x_ref.shape[-1]
    Hp = x_ref.shape[1]
    Wp = x_ref.shape[2]
    HW = H * W

    # --- halo init, once per image ------------------------------------------
    # Only the 1-pixel halo rows/cols (+ width-alignment columns) of the
    # ping-pong buffers must be zero; the interior is fully rewritten every
    # layer.  Done at l == 0 of each image (not program_id(0) == 0) so each
    # core's private scratch is valid even if the batch axis is core-sharded.
    @pl.when(l == 0)
    def _init_halo():
        for s in range(2):
            dst = buf_ref.at[s]
            dst[pl.ds(0, 1), :, :] = jnp.zeros((1, Wp, C), jnp.bfloat16)       # top row
            dst[pl.ds(Hp - 1, 1), :, :] = jnp.zeros((1, Wp, C), jnp.bfloat16)  # bottom row
            dst[:, pl.ds(0, 1), :] = jnp.zeros((Hp, 1, C), jnp.bfloat16)       # left col
            dst[:, pl.ds(W + 1, Wp - W - 1), :] = jnp.zeros(                   # right + align cols
                (Hp, Wp - W - 1, C), jnp.bfloat16)

    # --- im2col: 3 kx-shifted slabs -> 9 lane-aligned column blocks ----------
    def build_col(src):
        for kx in range(3):
            slab = src[:, pl.ds(kx, W), :]                  # (Hp, W, C), one shifted copy per kx
            for ky in range(3):
                t = ky * 3 + kx
                col_ref[:, pl.ds(t * C, C)] = slab[ky:ky + H].reshape(HW, C)

    @pl.when(l == 0)
    def _():
        build_col(x_ref.at[0])                              # first layer reads the padded input

    @pl.when(l > 0)
    def _():
        build_col(buf_ref.at[(l + 1) % 2])                  # previous layer's output slot

    # --- single fused K=9C bf16 MXU matmul; bias + ReLU epilogue -------------
    acc = jnp.dot(col_ref[...], w_ref[0], preferred_element_type=jnp.float32)
    res = jnp.maximum(acc + b_ref[0], 0.0)

    @pl.when(l == L - 1)
    def _():
        o_ref[0] = res                                      # lane-dense f32 store

    @pl.when(l < L - 1)
    def _():
        dst = buf_ref.at[l % 2]
        dst[pl.ds(1, H), pl.ds(1, W), :] = res.reshape(H, W, C).astype(jnp.bfloat16)


# ------------------------------ wrapper -------------------------------------

def _pack_fused_params(params, C):
    """Stack per-layer fused (3,3,Cin,Cout) HWIO weights / (Cout,) biases into a
    channel-padded, tap-major (L, 9*C, C) bf16 slab (rows match the im2col column
    layout, tap t = ky*3 + kx) and an (L, 1, C) f32 bias slab."""
    L = len(params)
    w_packed = jnp.zeros((L, 9, C, C), jnp.float32)
    b_packed = jnp.zeros((L, 1, C), jnp.float32)
    for l, (w, b) in enumerate(params):
        _, _, cin, cout = w.shape
        w_packed = w_packed.at[l, :, :cin, :cout].set(w.reshape(9, cin, cout))
        b_packed = b_packed.at[l, 0, :cout].set(b)
    return w_packed.reshape(L, 9 * C, C).astype(jnp.bfloat16), b_packed


@jax.jit
def repblock_forward_nchw(x_nchw, params):
    """RepBlock forward: NCHW in, NCHW out (matches the PyTorch module)."""
    N, Cin, H, W = x_nchw.shape
    Cout = params[-1][0].shape[-1]
    L = len(params)
    c_max = max(max(w.shape[2], w.shape[3]) for w, _ in params)
    C = _round_up(c_max, LANE)           # lane-dense channel width
    Hp = H + 2
    Wp = _round_up(W + 2, SUBLANE)       # sublane-aligned padded width
    HW = H * W

    w_packed, b_packed = _pack_fused_params(params, C)

    # NCHW -> NHWC, cast to the bf16 MXU operand dtype, single up-front zero pad:
    # 1-px halo (+ width alignment) + channel pad to C.
    x = jnp.transpose(x_nchw, (0, 2, 3, 1)).astype(jnp.bfloat16)
    x = jnp.pad(x, ((0, 0), (1, 1), (1, Wp - W - 1), (0, C - Cin)))

    # VMEM budget from the actual buffers (double-buffered pipeline IO + scratch),
    # capped below the physical capacity of this chip generation.
    bytes_io = 2 * (Hp * Wp * C * 2      # input image block (bf16)
                    + 9 * C * C * 2      # streamed per-layer weight (bf16)
                    + C * 4              # streamed per-layer bias (f32)
                    + HW * C * 4)        # output block (f32)
    bytes_scratch = 2 * Hp * Wp * C * 2 + HW * 9 * C * 2
    vmem_limit = min(max(bytes_io + bytes_scratch + (8 << 20), 32 << 20),
                     int(0.85 * _vmem_capacity_bytes()))

    kernel = functools.partial(_repblock_fused_kernel, H=H, W=W)

    out = pl.pallas_call(
        kernel,
        out_shape=jax.ShapeDtypeStruct((N, HW, C), jnp.float32),
        grid_spec=pltpu.PrefetchScalarGridSpec(
            num_scalar_prefetch=0,
            grid=(N, L),                                    # layer axis last (sequential)
            in_specs=[
                pl.BlockSpec((1, Hp, Wp, C), lambda n, l: (n, 0, 0, 0)),   # image, resident across l
                pl.BlockSpec((1, 9 * C, C), lambda n, l: (l, 0, 0)),       # streamed per-layer weight
                pl.BlockSpec((1, 1, C), lambda n, l: (l, 0, 0)),           # streamed per-layer bias
            ],
            out_specs=pl.BlockSpec((1, HW, C), lambda n, l: (n, 0, 0)),
            scratch_shapes=[
                pltpu.VMEM((2, Hp, Wp, C), jnp.bfloat16),   # ping-pong activations (zero halo)
                pltpu.VMEM((HW, 9 * C), jnp.bfloat16),      # im2col
            ],
        ),
        compiler_params=pltpu.CompilerParams(
            dimension_semantics=("parallel", "arbitrary"),
            vmem_limit_bytes=vmem_limit,
        ),
    )(x, w_packed, b_packed)

    # Crop the padded channels before the layout change; keep NCHW f32 to match
    # the PyTorch module (emit NHWC / bf16 here instead if the consumer allows).
    out = out.reshape(N, H, W, C)[..., :Cout]
    return jnp.transpose(out, (0, 3, 1, 2))


# ----------------------- RepVGG parameter construction ----------------------

def _make_bn_params(key, c):
    k1, k2, k3, k4 = jax.random.split(key, 4)
    gamma = 1.0 + 0.1 * jax.random.normal(k1, (c,), jnp.float32)
    beta = 0.1 * jax.random.normal(k2, (c,), jnp.float32)
    running_mean = 0.1 * jax.random.normal(k3, (c,), jnp.float32)
    running_var = jnp.abs(jax.random.normal(k4, (c,), jnp.float32)) + 0.5
    return gamma, beta, running_mean, running_var


def _fuse_conv_bn(w_oihw, bn):
    """Fuse conv (OIHW weight, no bias) with eval-mode BatchNorm."""
    gamma, beta, mean, var = bn
    std = jnp.sqrt(var + BN_EPS)
    t = (gamma / std).reshape(-1, 1, 1, 1)
    return w_oihw * t, beta - mean * gamma / std


def make_repvgg_block_params(key, in_ch, out_ch):
    """One RepVGGBlock fused to a single (3,3,in_ch,out_ch) HWIO weight + bias."""
    k3, kb3, k1, kb1, kid = jax.random.split(key, 5)

    # dense 3x3 conv weight (OIHW) + its BN
    w3 = 0.1 * jax.random.normal(k3, (out_ch, in_ch, 3, 3), jnp.float32)
    fw3, fb3 = _fuse_conv_bn(w3, _make_bn_params(kb3, out_ch))

    # 1x1 conv weight + its BN, padded to 3x3
    w1 = 0.1 * jax.random.normal(k1, (out_ch, in_ch, 1, 1), jnp.float32)
    fw1, fb1 = _fuse_conv_bn(w1, _make_bn_params(kb1, out_ch))
    fw1 = jnp.pad(fw1, ((0, 0), (0, 0), (1, 1), (1, 1)))

    kernel = fw3 + fw1
    bias = fb3 + fb1

    # identity BN branch only when in_ch == out_ch (stride is always 1 here)
    if in_ch == out_ch:
        id_w = jnp.zeros((in_ch, in_ch, 3, 3), jnp.float32)
        id_w = id_w.at[jnp.arange(in_ch), jnp.arange(in_ch), 1, 1].set(1.0)
        fwid, fbid = _fuse_conv_bn(id_w, _make_bn_params(kid, out_ch))
        kernel = kernel + fwid
        bias = bias + fbid

    # OIHW -> (kh, kw, Cin, Cout) for the NHWC kernel
    return jnp.transpose(kernel, (2, 3, 1, 0)), bias


def make_repblock_params(key, in_ch, out_ch, n):
    """RepBlock(in_ch, out_ch, n): RepVGGBlock(in,out) then (n-1) x (out,out)."""
    keys = jax.random.split(key, n)
    params = [make_repvgg_block_params(keys[0], in_ch, out_ch)]
    for i in range(1, n):
        params.append(make_repvgg_block_params(keys[i], out_ch, out_ch))
    return params


# ------------------------------ reference ----------------------------------

def _reference_forward_nchw(x_nchw, params):
    """Pure-JAX reference with the same bf16-operand / f32-accumulate math."""
    x = jnp.transpose(x_nchw, (0, 2, 3, 1))
    for (w, b) in params:
        y = jax.lax.conv_general_dilated(
            x.astype(jnp.bfloat16), w.astype(jnp.bfloat16),
            window_strides=(1, 1), padding=((1, 1), (1, 1)),
            dimension_numbers=("NHWC", "HWIO", "NHWC"),
            preferred_element_type=jnp.float32)
        x = jnp.maximum(y + b, 0.0)
    return jnp.transpose(x, (0, 3, 1, 2))


# --------------------------------- main -------------------------------------

if __name__ == "__main__":
    key = jax.random.PRNGKey(0)
    k_input, k_params = jax.random.split(key)

    N, Cin, H, W = 2, 4, 16, 16
    Cout = 8
    n_blocks = 2  # RepBlock(in_channels=4, out_channels=8, n=2)

    x = jax.random.normal(k_input, (N, Cin, H, W), jnp.float32)
    params = make_repblock_params(k_params, Cin, Cout, n_blocks)

    out = jax.block_until_ready(repblock_forward_nchw(x, params))

    ref = _reference_forward_nchw(x, params)
    assert out.shape == (N, Cout, H, W)
    assert jnp.allclose(out, ref, atol=2e-3, rtol=2e-3), "mismatch vs reference"

    print("KERNEL_OK")
</pallas_src>

<mosaic_0001>
module attributes {stable_mosaic.version = 11 : i64} {
  func.func @_repblock_fused_kernel(%arg0: i32, %arg1: i32, %arg2: memref<1x18x24x128xbf16, #tpu.memory_space<vmem>>, %arg3: memref<1x1152x128xbf16, #tpu.memory_space<vmem>>, %arg4: memref<1x1x128xf32, #tpu.memory_space<vmem>>, %arg5: memref<1x256x128xf32, #tpu.memory_space<vmem>>, %arg6: memref<2x18x24x128xbf16, #tpu.memory_space<vmem>>, %arg7: memref<256x1152xbf16, #tpu.memory_space<vmem>>) attributes {dimension_semantics = [#tpu.dimension_semantics<parallel>, #tpu.dimension_semantics<arbitrary>], iteration_bounds = array<i64: 2, 2>, scalar_prefetch = 0 : i64, scratch_operands = 2 : i64, tpu.core_type = #tpu.core_type<tc>, window_params = [{transform_indices = @transform_0, window_bounds = array<i64: 1, 18, 24, 128>}, {transform_indices = @transform_1, window_bounds = array<i64: 1, 1152, 128>}, {transform_indices = @transform_2, window_bounds = array<i64: 1, 1, 128>}, {transform_indices = @transform_3, window_bounds = array<i64: 1, 256, 128>}]} {
    %c0_i32 = arith.constant 0 : i32
    %0 = arith.cmpi eq, %arg1, %c0_i32 : i32
    %1 = arith.extui %0 : i1 to i32
    %c0_i32_0 = arith.constant 0 : i32
    %2 = arith.cmpi ne, %1, %c0_i32_0 : i32
    scf.if %2 {
      %cst_16 = arith.constant 0.000000e+00 : bf16
      %25 = vector.broadcast %cst_16 : bf16 to vector<1x24x128xbf16>
      %c0_i32_17 = arith.constant 0 : i32
      %c0_i32_18 = arith.constant 0 : i32
      %c0_i32_19 = arith.constant 0 : i32
      %c0_i32_20 = arith.constant 0 : i32
      %26 = tpu.memref_slice %arg6[%c0_i32_17, %c0_i32_18, %c0_i32_19, %c0_i32_20] : memref<2x18x24x128xbf16, #tpu.memory_space<vmem>> -> memref<1x18x24x128xbf16, #tpu.memory_space<vmem>>
      %27 = tpu.memref_squeeze %26 : memref<1x18x24x128xbf16, #tpu.memory_space<vmem>> -> memref<18x24x128xbf16, #tpu.memory_space<vmem>>
      %c0_21 = arith.constant 0 : index
      %c0_22 = arith.constant 0 : index
      %c0_23 = arith.constant 0 : index
      %28 = vector.load %27[%c0_21, %c0_22, %c0_23] : memref<18x24x128xbf16, #tpu.memory_space<vmem>>, vector<1x24x128xbf16>
      tpu.vector_store %27[%c0_21, %c0_22, %c0_23], %25 {strides = array<i32>} : memref<18x24x128xbf16, #tpu.memory_space<vmem>>, vector<1x24x128xbf16>,
      %cst_24 = arith.constant 0.000000e+00 : bf16
      %29 = vector.broadcast %cst_24 : bf16 to vector<1x24x128xbf16>
      %c0_i32_25 = arith.constant 0 : i32
      %c0_i32_26 = arith.constant 0 : i32
      %c0_i32_27 = arith.constant 0 : i32
      %c0_i32_28 = arith.constant 0 : i32
      %30 = tpu.memref_slice %arg6[%c0_i32_25, %c0_i32_26, %c0_i32_27, %c0_i32_28] : memref<2x18x24x128xbf16, #tpu.memory_space<vmem>> -> memref<1x18x24x128xbf16, #tpu.memory_space<vmem>>
      %31 = tpu.memref_squeeze %30 : memref<1x18x24x128xbf16, #tpu.memory_space<vmem>> -> memref<18x24x128xbf16, #tpu.memory_space<vmem>>
      %c17 = arith.constant 17 : index
      %c0_29 = arith.constant 0 : index
      %c0_30 = arith.constant 0 : index
      %32 = vector.load %31[%c17, %c0_29, %c0_30] : memref<18x24x128xbf16, #tpu.memory_space<vmem>>, vector<1x24x128xbf16>
      tpu.vector_store %31[%c17, %c0_29, %c0_30], %29 {strides = array<i32>} : memref<18x24x128xbf16, #tpu.memory_space<vmem>>, vector<1x24x128xbf16>,
      %cst_31 = arith.constant 0.000000e+00 : bf16
      %33 = vector.broadcast %cst_31 : bf16 to vector<18x1x128xbf16>
      %c0_i32_32 = arith.constant 0 : i32
      %c0_i32_33 = arith.constant 0 : i32
      %c0_i32_34 = arith.constant 0 : i32
      %c0_i32_35 = arith.constant 0 : i32
      %34 = tpu.memref_slice %arg6[%c0_i32_32, %c0_i32_33, %c0_i32_34, %c0_i32_35] : memref<2x18x24x128xbf16, #tpu.memory_space<vmem>> -> memref<1x18x24x128xbf16, #tpu.memory_space<vmem>>
      %35 = tpu.memref_squeeze %34 : memref<1x18x24x128xbf16, #tpu.memory_space<vmem>> -> memref<18x24x128xbf16, #tpu.memory_space<vmem>>
      %c0_36 = arith.constant 0 : index
      %c0_37 = arith.constant 0 : index
      %c0_38 = arith.constant 0 : index
      %36 = vector.load %35[%c0_36, %c0_37, %c0_38] : memref<18x24x128xbf16, #tpu.memory_space<vmem>>, vector<18x1x128xbf16>
      tpu.vector_store %35[%c0_36, %c0_37, %c0_38], %33 {strides = array<i32>} : memref<18x24x128xbf16, #tpu.memory_space<vmem>>, vector<18x1x128xbf16>,
      %cst_39 = arith.constant 0.000000e+00 : bf16
      %37 = vector.broadcast %cst_39 : bf16 to vector<18x7x128xbf16>
      %c0_i32_40 = arith.constant 0 : i32
      %c0_i32_41 = arith.constant 0 : i32
      %c0_i32_42 = arith.constant 0 : i32
      %c0_i32_43 = arith.constant 0 : i32
      %38 = tpu.memref_slice %arg6[%c0_i32_40, %c0_i32_41, %c0_i32_42, %c0_i32_43] : memref<2x18x24x128xbf16, #tpu.memory_space<vmem>> -> memref<1x18x24x128xbf16, #tpu.memory_space<vmem>>
      %39 = tpu.memref_squeeze %38 : memref<1x18x24x128xbf16, #tpu.memory_space<vmem>> -> memref<18x24x128xbf16, #tpu.memory_space<vmem>>
      %c0_44 = arith.constant 0 : index
      %c17_45 = arith.constant 17 : index
      %c0_46 = arith.constant 0 : index
      %40 = vector.load %39[%c0_44, %c17_45, %c0_46] : memref<18x24x128xbf16, #tpu.memory_space<vmem>>, vector<18x7x128xbf16>
      tpu.vector_store %39[%c0_44, %c17_45, %c0_46], %37 {strides = array<i32>} : memref<18x24x128xbf16, #tpu.memory_space<vmem>>, vector<18x7x128xbf16>,
      %cst_47 = arith.constant 0.000000e+00 : bf16
      %41 = vector.broadcast %cst_47 : bf16 to vector<1x24x128xbf16>
      %c1_i32_48 = arith.constant 1 : i32
      %c0_i32_49 = arith.constant 0 : i32
      %c0_i32_50 = arith.constant 0 : i32
      %c0_i32_51 = arith.constant 0 : i32
      %42 = tpu.memref_slice %arg6[%c1_i32_48, %c0_i32_49, %c0_i32_50, %c0_i32_51] : memref<2x18x24x128xbf16, #tpu.memory_space<vmem>> -> memref<1x18x24x128xbf16, #tpu.memory_space<vmem>>
      %43 = tpu.memref_squeeze %42 : memref<1x18x24x128xbf16, #tpu.memory_space<vmem>> -> memref<18x24x128xbf16, #tpu.memory_space<vmem>>
      %c0_52 = arith.constant 0 : index
      %c0_53 = arith.constant 0 : index
      %c0_54 = arith.constant 0 : index
      %44 = vector.load %43[%c0_52, %c0_53, %c0_54] : memref<18x24x128xbf16, #tpu.memory_space<vmem>>, vector<1x24x128xbf16>
      tpu.vector_store %43[%c0_52, %c0_53, %c0_54], %41 {strides = array<i32>} : memref<18x24x128xbf16, #tpu.memory_space<vmem>>, vector<1x24x128xbf16>,
      %cst_55 = arith.constant 0.000000e+00 : bf16
      %45 = vector.broadcast %cst_55 : bf16 to vector<1x24x128xbf16>
      %c1_i32_56 = arith.constant 1 : i32
      %c0_i32_57 = arith.constant 0 : i32
      %c0_i32_58 = arith.constant 0 : i32
      %c0_i32_59 = arith.constant 0 : i32
      %46 = tpu.memref_slice %arg6[%c1_i32_56, %c0_i32_57, %c0_i32_58, %c0_i32_59] : memref<2x18x24x128xbf16, #tpu.memory_space<vmem>> -> memref<1x18x24x128xbf16, #tpu.memory_space<vmem>>
      %47 = tpu.memref_squeeze %46 : memref<1x18x24x128xbf16, #tpu.memory_space<vmem>> -> memref<18x24x128xbf16, #tpu.memory_space<vmem>>
      %c17_60 = arith.constant 17 : index
      %c0_61 = arith.constant 0 : index
      %c0_62 = arith.constant 0 : index
      %48 = vector.load %47[%c17_60, %c0_61, %c0_62] : memref<18x24x128xbf16, #tpu.memory_space<vmem>>, vector<1x24x128xbf16>
      tpu.vector_store %47[%c17_60, %c0_61, %c0_62], %45 {strides = array<i32>} : memref<18x24x128xbf16, #tpu.memory_space<vmem>>, vector<1x24x128xbf16>,
      %cst_63 = arith.constant 0.000000e+00 : bf16
      %49 = vector.broadcast %cst_63 : bf16 to vector<18x1x128xbf16>
      %c1_i32_64 = arith.constant 1 : i32
      %c0_i32_65 = arith.constant 0 : i32
      %c0_i32_66 = arith.constant 0 : i32
      %c0_i32_67 = arith.constant 0 : i32
      %50 = tpu.memref_slice %arg6[%c1_i32_64, %c0_i32_65, %c0_i32_66, %c0_i32_67] : memref<2x18x24x128xbf16, #tpu.memory_space<vmem>> -> memref<1x18x24x128xbf16, #tpu.memory_space<vmem>>
      %51 = tpu.memref_squeeze %50 : memref<1x18x24x128xbf16, #tpu.memory_space<vmem>> -> memref<18x24x128xbf16, #tpu.memory_space<vmem>>
      %c0_68 = arith.constant 0 : index
      %c0_69 = arith.constant 0 : index
      %c0_70 = arith.constant 0 : index
      %52 = vector.load %51[%c0_68, %c0_69, %c0_70] : memref<18x24x128xbf16, #tpu.memory_space<vmem>>, vector<18x1x128xbf16>
      tpu.vector_store %51[%c0_68, %c0_69, %c0_70], %49 {strides = array<i32>} : memref<18x24x128xbf16, #tpu.memory_space<vmem>>, vector<18x1x128xbf16>,
      %cst_71 = arith.constant 0.000000e+00 : bf16
      %53 = vector.broadcast %cst_71 : bf16 to vector<18x7x128xbf16>
      %c1_i32_72 = arith.constant 1 : i32
      %c0_i32_73 = arith.constant 0 : i32
      %c0_i32_74 = arith.constant 0 : i32
      %c0_i32_75 = arith.constant 0 : i32
      %54 = tpu.memref_slice %arg6[%c1_i32_72, %c0_i32_73, %c0_i32_74, %c0_i32_75] : memref<2x18x24x128xbf16, #tpu.memory_space<vmem>> -> memref<1x18x24x128xbf16, #tpu.memory_space<vmem>>
      %55 = tpu.memref_squeeze %54 : memref<1x18x24x128xbf16, #tpu.memory_space<vmem>> -> memref<18x24x128xbf16, #tpu.memory_space<vmem>>
      %c0_76 = arith.constant 0 : index
      %c17_77 = arith.constant 17 : index
      %c0_78 = arith.constant 0 : index
      %56 = vector.load %55[%c0_76, %c17_77, %c0_78] : memref<18x24x128xbf16, #tpu.memory_space<vmem>>, vector<18x7x128xbf16>
      tpu.vector_store %55[%c0_76, %c17_77, %c0_78], %53 {strides = array<i32>} : memref<18x24x128xbf16, #tpu.memory_space<vmem>>, vector<18x7x128xbf16>,
    } else {
    }
    %c0_i32_1 = arith.constant 0 : i32
    %3 = arith.cmpi eq, %arg1, %c0_i32_1 : i32
    %4 = arith.extui %3 : i1 to i32
    %c0_i32_2 = arith.constant 0 : i32
    %5 = arith.cmpi ne, %4, %c0_i32_2 : i32
    scf.if %5 {
      %c0_i32_16 = arith.constant 0 : i32
      %c0_i32_17 = arith.constant 0 : i32
      %c0_i32_18 = arith.constant 0 : i32
      %c0_i32_19 = arith.constant 0 : i32
      %25 = tpu.memref_slice %arg2[%c0_i32_16, %c0_i32_17, %c0_i32_18, %c0_i32_19] : memref<1x18x24x128xbf16, #tpu.memory_space<vmem>> -> memref<1x18x24x128xbf16, #tpu.memory_space<vmem>>
      %26 = tpu.memref_squeeze %25 : memref<1x18x24x128xbf16, #tpu.memory_space<vmem>> -> memref<18x24x128xbf16, #tpu.memory_space<vmem>>
      %c0_20 = arith.constant 0 : index
      %c0_21 = arith.constant 0 : index
      %c0_22 = arith.constant 0 : index
      %27 = vector.load %26[%c0_20, %c0_21, %c0_22] : memref<18x24x128xbf16, #tpu.memory_space<vmem>>, vector<18x16x128xbf16>
      %28 = vector.extract_strided_slice %27 {offsets = [0, 0, 0], sizes = [16, 16, 128], strides = [1, 1, 1]} : vector<18x16x128xbf16> to vector<16x16x128xbf16>
      %29 = vector.shape_cast %28 : vector<16x16x128xbf16> to vector<256x128xbf16>
      %c0_23 = arith.constant 0 : index
      %c0_24 = arith.constant 0 : index
      %30 = vector.load %arg7[%c0_23, %c0_24] : memref<256x1152xbf16, #tpu.memory_space<vmem>>, vector<256x128xbf16>
      tpu.vector_store %arg7[%c0_23, %c0_24], %29 {strides = array<i32>} : memref<256x1152xbf16, #tpu.memory_space<vmem>>, vector<256x128xbf16>,
      %31 = vector.extract_strided_slice %27 {offsets = [1, 0, 0], sizes = [16, 16, 128], strides = [1, 1, 1]} : vector<18x16x128xbf16> to vector<16x16x128xbf16>
      %32 = vector.shape_cast %31 : vector<16x16x128xbf16> to vector<256x128xbf16>
      %c0_25 = arith.constant 0 : index
      %c384 = arith.constant 384 : index
      %33 = vector.load %arg7[%c0_25, %c384] : memref<256x1152xbf16, #tpu.memory_space<vmem>>, vector<256x128xbf16>
      tpu.vector_store %arg7[%c0_25, %c384], %32 {strides = array<i32>} : memref<256x1152xbf16, #tpu.memory_space<vmem>>, vector<256x128xbf16>,
      %34 = vector.extract_strided_slice %27 {offsets = [2, 0, 0], sizes = [16, 16, 128], strides = [1, 1, 1]} : vector<18x16x128xbf16> to vector<16x16x128xbf16>
      %35 = vector.shape_cast %34 : vector<16x16x128xbf16> to vector<256x128xbf16>
      %c0_26 = arith.constant 0 : index
      %c768 = arith.constant 768 : index
      %36 = vector.load %arg7[%c0_26, %c768] : memref<256x1152xbf16, #tpu.memory_space<vmem>>, vector<256x128xbf16>
      tpu.vector_store %arg7[%c0_26, %c768], %35 {strides = array<i32>} : memref<256x1152xbf16, #tpu.memory_space<vmem>>, vector<256x128xbf16>,
      %c0_i32_27 = arith.constant 0 : i32
      %c0_i32_28 = arith.constant 0 : i32
      %c0_i32_29 = arith.constant 0 : i32
      %c0_i32_30 = arith.constant 0 : i32
      %37 = tpu.memref_slice %arg2[%c0_i32_27, %c0_i32_28, %c0_i32_29, %c0_i32_30] : memref<1x18x24x128xbf16, #tpu.memory_space<vmem>> -> memref<1x18x24x128xbf16, #tpu.memory_space<vmem>>
      %38 = tpu.memref_squeeze %37 : memref<1x18x24x128xbf16, #tpu.memory_space<vmem>> -> memref<18x24x128xbf16, #tpu.memory_space<vmem>>
      %c0_31 = arith.constant 0 : index
      %c1 = arith.constant 1 : index
      %c0_32 = arith.constant 0 : index
      %39 = vector.load %38[%c0_31, %c1, %c0_32] : memref<18x24x128xbf16, #tpu.memory_space<vmem>>, vector<18x16x128xbf16>
      %40 = vector.extract_strided_slice %39 {offsets = [0, 0, 0], sizes = [16, 16, 128], strides = [1, 1, 1]} : vector<18x16x128xbf16> to vector<16x16x128xbf16>
      %41 = vector.shape_cast %40 : vector<16x16x128xbf16> to vector<256x128xbf16>
      %c0_33 = arith.constant 0 : index
      %c128 = arith.constant 128 : index
      %42 = vector.load %arg7[%c0_33, %c128] : memref<256x1152xbf16, #tpu.memory_space<vmem>>, vector<256x128xbf16>
      tpu.vector_store %arg7[%c0_33, %c128], %41 {strides = array<i32>} : memref<256x1152xbf16, #tpu.memory_space<vmem>>, vector<256x128xbf16>,
      %43 = vector.extract_strided_slice %39 {offsets = [1, 0, 0], sizes = [16, 16, 128], strides = [1, 1, 1]} : vector<18x16x128xbf16> to vector<16x16x128xbf16>
      %44 = vector.shape_cast %43 : vector<16x16x128xbf16> to vector<256x128xbf16>
      %c0_34 = arith.constant 0 : index
      %c512 = arith.constant 512 : index
      %45 = vector.load %arg7[%c0_34, %c512] : memref<256x1152xbf16, #tpu.memory_space<vmem>>, vector<256x128xbf16>
      tpu.vector_store %arg7[%c0_34, %c512], %44 {strides = array<i32>} : memref<256x1152xbf16, #tpu.memory_space<vmem>>, vector<256x128xbf16>,
      %46 = vector.extract_strided_slice %39 {offsets = [2, 0, 0], sizes = [16, 16, 128], strides = [1, 1, 1]} : vector<18x16x128xbf16> to vector<16x16x128xbf16>
      %47 = vector.shape_cast %46 : vector<16x16x128xbf16> to vector<256x128xbf16>
      %c0_35 = arith.constant 0 : index
      %c896 = arith.constant 896 : index
      %48 = vector.load %arg7[%c0_35, %c896] : memref<256x1152xbf16, #tpu.memory_space<vmem>>, vector<256x128xbf16>
      tpu.vector_store %arg7[%c0_35, %c896], %47 {strides = array<i32>} : memref<256x1152xbf16, #tpu.memory_space<vmem>>, vector<256x128xbf16>,
      %c0_i32_36 = arith.constant 0 : i32
      %c0_i32_37 = arith.constant 0 : i32
      %c0_i32_38 = arith.constant 0 : i32
      %c0_i32_39 = arith.constant 0 : i32
      %49 = tpu.memref_slice %arg2[%c0_i32_36, %c0_i32_37, %c0_i32_38, %c0_i32_39] : memref<1x18x24x128xbf16, #tpu.memory_space<vmem>> -> memref<1x18x24x128xbf16, #tpu.memory_space<vmem>>
      %50 = tpu.memref_squeeze %49 : memref<1x18x24x128xbf16, #tpu.memory_space<vmem>> -> memref<18x24x128xbf16, #tpu.memory_space<vmem>>
      %c0_40 = arith.constant 0 : index
      %c2 = arith.constant 2 : index
      %c0_41 = arith.constant 0 : index
      %51 = vector.load %50[%c0_40, %c2, %c0_41] : memref<18x24x128xbf16, #tpu.memory_space<vmem>>, vector<18x16x128xbf16>
      %52 = vector.extract_strided_slice %51 {offsets = [0, 0, 0], sizes = [16, 16, 128], strides = [1, 1, 1]} : vector<18x16x128xbf16> to vector<16x16x128xbf16>
      %53 = vector.shape_cast %52 : vector<16x16x128xbf16> to vector<256x128xbf16>
      %c0_42 = arith.constant 0 : index
      %c256 = arith.constant 256 : index
      %54 = vector.load %arg7[%c0_42, %c256] : memref<256x1152xbf16, #tpu.memory_space<vmem>>, vector<256x128xbf16>
      tpu.vector_store %arg7[%c0_42, %c256], %53 {strides = array<i32>} : memref<256x1152xbf16, #tpu.memory_space<vmem>>, vector<256x128xbf16>,
      %55 = vector.extract_strided_slice %51 {offsets = [1, 0, 0], sizes = [16, 16, 128], strides = [1, 1, 1]} : vector<18x16x128xbf16> to vector<16x16x128xbf16>
      %56 = vector.shape_cast %55 : vector<16x16x128xbf16> to vector<256x128xbf16>
      %c0_43 = arith.constant 0 : index
      %c640 = arith.constant 640 : index
      %57 = vector.load %arg7[%c0_43, %c640] : memref<256x1152xbf16, #tpu.memory_space<vmem>>, vector<256x128xbf16>
      tpu.vector_store %arg7[%c0_43, %c640], %56 {strides = array<i32>} : memref<256x1152xbf16, #tpu.memory_space<vmem>>, vector<256x128xbf16>,
      %58 = vector.extract_strided_slice %51 {offsets = [2, 0, 0], sizes = [16, 16, 128], strides = [1, 1, 1]} : vector<18x16x128xbf16> to vector<16x16x128xbf16>
      %59 = vector.shape_cast %58 : vector<16x16x128xbf16> to vector<256x128xbf16>
      %c0_44 = arith.constant 0 : index
      %c1024 = arith.constant 1024 : index
      %60 = vector.load %arg7[%c0_44, %c1024] : memref<256x1152xbf16, #tpu.memory_space<vmem>>, vector<256x128xbf16>
      tpu.vector_store %arg7[%c0_44, %c1024], %59 {strides = array<i32>} : memref<256x1152xbf16, #tpu.memory_space<vmem>>, vector<256x128xbf16>,
    } else {
    }
    %c0_i32_3 = arith.constant 0 : i32
    %6 = arith.cmpi sgt, %arg1, %c0_i32_3 : i32
    %7 = arith.extui %6 : i1 to i32
    %c0_i32_4 = arith.constant 0 : i32
    %8 = arith.cmpi ne, %7, %c0_i32_4 : i32
    scf.if %8 {
      %c1_i32_16 = arith.constant 1 : i32
      %25 = arith.addi %arg1, %c1_i32_16 : i32
      %c2_i32 = arith.constant 2 : i32
      %c0_i32_17 = arith.constant 0 : i32
      %26 = arith.cmpi eq, %c2_i32, %c0_i32_17 : i32
      %c1_i32_18 = arith.constant 1 : i32
      %27 = arith.select %26, %c1_i32_18, %c2_i32 : i32
      %28 = arith.remsi %25, %27 : i32
      %c0_i32_19 = arith.constant 0 : i32
      %29 = arith.cmpi ne, %28, %c0_i32_19 : i32
      %c0_i32_20 = arith.constant 0 : i32
      %30 = arith.cmpi slt, %28, %c0_i32_20 : i32
      %c0_i32_21 = arith.constant 0 : i32
      %31 = arith.cmpi slt, %27, %c0_i32_21 : i32
      %32 = arith.xori %30, %31 : i1
      %33 = arith.andi %32, %29 : i1
      %34 = arith.addi %28, %27 : i32
      %35 = arith.select %33, %34, %28 : i32
      %c0_i32_22 = arith.constant 0 : i32
      %c0_i32_23 = arith.constant 0 : i32
      %c0_i32_24 = arith.constant 0 : i32
      %36 = tpu.memref_slice %arg6[%35, %c0_i32_22, %c0_i32_23, %c0_i32_24] : memref<2x18x24x128xbf16, #tpu.memory_space<vmem>> -> memref<1x18x24x128xbf16, #tpu.memory_space<vmem>>
      %37 = tpu.memref_squeeze %36 : memref<1x18x24x128xbf16, #tpu.memory_space<vmem>> -> memref<18x24x128xbf16, #tpu.memory_space<vmem>>
      %c0_25 = arith.constant 0 : index
      %c0_26 = arith.constant 0 : index
      %c0_27 = arith.constant 0 : index
      %38 = vector.load %37[%c0_25, %c0_26, %c0_27] : memref<18x24x128xbf16, #tpu.memory_space<vmem>>, vector<18x16x128xbf16>
      %39 = vector.extract_strided_slice %38 {offsets = [0, 0, 0], sizes = [16, 16, 128], strides = [1, 1, 1]} : vector<18x16x128xbf16> to vector<16x16x128xbf16>
      %40 = vector.shape_cast %39 : vector<16x16x128xbf16> to vector<256x128xbf16>
      %c0_28 = arith.constant 0 : index
      %c0_29 = arith.constant 0 : index
      %41 = vector.load %arg7[%c0_28, %c0_29] : memref<256x1152xbf16, #tpu.memory_space<vmem>>, vector<256x128xbf16>
      tpu.vector_store %arg7[%c0_28, %c0_29], %40 {strides = array<i32>} : memref<256x1152xbf16, #tpu.memory_space<vmem>>, vector<256x128xbf16>,
      %42 = vector.extract_strided_slice %38 {offsets = [1, 0, 0], sizes = [16, 16, 128], strides = [1, 1, 1]} : vector<18x16x128xbf16> to vector<16x16x128xbf16>
      %43 = vector.shape_cast %42 : vector<16x16x128xbf16> to vector<256x128xbf16>
      %c0_30 = arith.constant 0 : index
      %c384 = arith.constant 384 : index
      %44 = vector.load %arg7[%c0_30, %c384] : memref<256x1152xbf16, #tpu.memory_space<vmem>>, vector<256x128xbf16>
      tpu.vector_store %arg7[%c0_30, %c384], %43 {strides = array<i32>} : memref<256x1152xbf16, #tpu.memory_space<vmem>>, vector<256x128xbf16>,
      %45 = vector.extract_strided_slice %38 {offsets = [2, 0, 0], sizes = [16, 16, 128], strides = [1, 1, 1]} : vector<18x16x128xbf16> to vector<16x16x128xbf16>
      %46 = vector.shape_cast %45 : vector<16x16x128xbf16> to vector<256x128xbf16>
      %c0_31 = arith.constant 0 : index
      %c768 = arith.constant 768 : index
      %47 = vector.load %arg7[%c0_31, %c768] : memref<256x1152xbf16, #tpu.memory_space<vmem>>, vector<256x128xbf16>
      tpu.vector_store %arg7[%c0_31, %c768], %46 {strides = array<i32>} : memref<256x1152xbf16, #tpu.memory_space<vmem>>, vector<256x128xbf16>,
      %c0_i32_32 = arith.constant 0 : i32
      %c0_i32_33 = arith.constant 0 : i32
      %c0_i32_34 = arith.constant 0 : i32
      %48 = tpu.memref_slice %arg6[%35, %c0_i32_32, %c0_i32_33, %c0_i32_34] : memref<2x18x24x128xbf16, #tpu.memory_space<vmem>> -> memref<1x18x24x128xbf16, #tpu.memory_space<vmem>>
      %49 = tpu.memref_squeeze %48 : memref<1x18x24x128xbf16, #tpu.memory_space<vmem>> -> memref<18x24x128xbf16, #tpu.memory_space<vmem>>
      %c0_35 = arith.constant 0 : index
      %c1 = arith.constant 1 : index
      %c0_36 = arith.constant 0 : index
      %50 = vector.load %49[%c0_35, %c1, %c0_36] : memref<18x24x128xbf16, #tpu.memory_space<vmem>>, vector<18x16x128xbf16>
      %51 = vector.extract_strided_slice %50 {offsets = [0, 0, 0], sizes = [16, 16, 128], strides = [1, 1, 1]} : vector<18x16x128xbf16> to vector<16x16x128xbf16>
      %52 = vector.shape_cast %51 : vector<16x16x128xbf16> to vector<256x128xbf16>
      %c0_37 = arith.constant 0 : index
      %c128 = arith.constant 128 : index
      %53 = vector.load %arg7[%c0_37, %c128] : memref<256x1152xbf16, #tpu.memory_space<vmem>>, vector<256x128xbf16>
      tpu.vector_store %arg7[%c0_37, %c128], %52 {strides = array<i32>} : memref<256x1152xbf16, #tpu.memory_space<vmem>>, vector<256x128xbf16>,
      %54 = vector.extract_strided_slice %50 {offsets = [1, 0, 0], sizes = [16, 16, 128], strides = [1, 1, 1]} : vector<18x16x128xbf16> to vector<16x16x128xbf16>
      %55 = vector.shape_cast %54 : vector<16x16x128xbf16> to vector<256x128xbf16>
      %c0_38 = arith.constant 0 : index
      %c512 = arith.constant 512 : index
      %56 = vector.load %arg7[%c0_38, %c512] : memref<256x1152xbf16, #tpu.memory_space<vmem>>, vector<256x128xbf16>
      tpu.vector_store %arg7[%c0_38, %c512], %55 {strides = array<i32>} : memref<256x1152xbf16, #tpu.memory_space<vmem>>, vector<256x128xbf16>,
      %57 = vector.extract_strided_slice %50 {offsets = [2, 0, 0], sizes = [16, 16, 128], strides = [1, 1, 1]} : vector<18x16x128xbf16> to vector<16x16x128xbf16>
      %58 = vector.shape_cast %57 : vector<16x16x128xbf16> to vector<256x128xbf16>
      %c0_39 = arith.constant 0 : index
      %c896 = arith.constant 896 : index
      %59 = vector.load %arg7[%c0_39, %c896] : memref<256x1152xbf16, #tpu.memory_space<vmem>>, vector<256x128xbf16>
      tpu.vector_store %arg7[%c0_39, %c896], %58 {strides = array<i32>} : memref<256x1152xbf16, #tpu.memory_space<vmem>>, vector<256x128xbf16>,
      %c0_i32_40 = arith.constant 0 : i32
      %c0_i32_41 = arith.constant 0 : i32
      %c0_i32_42 = arith.constant 0 : i32
      %60 = tpu.memref_slice %arg6[%35, %c0_i32_40, %c0_i32_41, %c0_i32_42] : memref<2x18x24x128xbf16, #tpu.memory_space<vmem>> -> memref<1x18x24x128xbf16, #tpu.memory_space<vmem>>
      %61 = tpu.memref_squeeze %60 : memref<1x18x24x128xbf16, #tpu.memory_space<vmem>> -> memref<18x24x128xbf16, #tpu.memory_space<vmem>>
      %c0_43 = arith.constant 0 : index
      %c2 = arith.constant 2 : index
      %c0_44 = arith.constant 0 : index
      %62 = vector.load %61[%c0_43, %c2, %c0_44] : memref<18x24x128xbf16, #tpu.memory_space<vmem>>, vector<18x16x128xbf16>
      %63 = vector.extract_strided_slice %62 {offsets = [0, 0, 0], sizes = [16, 16, 128], strides = [1, 1, 1]} : vector<18x16x128xbf16> to vector<16x16x128xbf16>
      %64 = vector.shape_cast %63 : vector<16x16x128xbf16> to vector<256x128xbf16>
      %c0_45 = arith.constant 0 : index
      %c256 = arith.constant 256 : index
      %65 = vector.load %arg7[%c0_45, %c256] : memref<256x1152xbf16, #tpu.memory_space<vmem>>, vector<256x128xbf16>
      tpu.vector_store %arg7[%c0_45, %c256], %64 {strides = array<i32>} : memref<256x1152xbf16, #tpu.memory_space<vmem>>, vector<256x128xbf16>,
      %66 = vector.extract_strided_slice %62 {offsets = [1, 0, 0], sizes = [16, 16, 128], strides = [1, 1, 1]} : vector<18x16x128xbf16> to vector<16x16x128xbf16>
      %67 = vector.shape_cast %66 : vector<16x16x128xbf16> to vector<256x128xbf16>
      %c0_46 = arith.constant 0 : index
      %c640 = arith.constant 640 : index
      %68 = vector.load %arg7[%c0_46, %c640] : memref<256x1152xbf16, #tpu.memory_space<vmem>>, vector<256x128xbf16>
      tpu.vector_store %arg7[%c0_46, %c640], %67 {strides = array<i32>} : memref<256x1152xbf16, #tpu.memory_space<vmem>>, vector<256x128xbf16>,
      %69 = vector.extract_strided_slice %62 {offsets = [2, 0, 0], sizes = [16, 16, 128], strides = [1, 1, 1]} : vector<18x16x128xbf16> to vector<16x16x128xbf16>
      %70 = vector.shape_cast %69 : vector<16x16x128xbf16> to vector<256x128xbf16>
      %c0_47 = arith.constant 0 : index
      %c1024 = arith.constant 1024 : index
      %71 = vector.load %arg7[%c0_47, %c1024] : memref<256x1152xbf16, #tpu.memory_space<vmem>>, vector<256x128xbf16>
      tpu.vector_store %arg7[%c0_47, %c1024], %70 {strides = array<i32>} : memref<256x1152xbf16, #tpu.memory_space<vmem>>, vector<256x128xbf16>,
    } else {
    }
    %c0 = arith.constant 0 : index
    %c0_5 = arith.constant 0 : index
    %9 = vector.load %arg7[%c0, %c0_5] : memref<256x1152xbf16, #tpu.memory_space<vmem>>, vector<256x1152xbf16>
    %c0_6 = arith.constant 0 : index
    %c0_7 = arith.constant 0 : index
    %c0_8 = arith.constant 0 : index
    %10 = vector.load %arg3[%c0_6, %c0_7, %c0_8] : memref<1x1152x128xbf16, #tpu.memory_space<vmem>>, vector<1x1152x128xbf16>
    %11 = vector.shape_cast %10 : vector<1x1152x128xbf16> to vector<1152x128xbf16>
    %cst = arith.constant dense<0.000000e+00> : vector<256x128xf32>
    %12 = tpu.matmul %9, %11, %cst {dimension_numbers = #tpu.dot_dimension_numbers<[1], [0], [0], [1], [0, 0, 1, 1], [], []>} : vector<256x1152xbf16>, vector<1152x128xbf16>, vector<256x128xf32> -> vector<256x128xf32>
    %c0_9 = arith.constant 0 : index
    %c0_10 = arith.constant 0 : index
    %c0_11 = arith.constant 0 : index
    %13 = vector.load %arg4[%c0_9, %c0_10, %c0_11] : memref<1x1x128xf32, #tpu.memory_space<vmem>>, vector<1x1x128xf32>
    %14 = vector.shape_cast %13 : vector<1x1x128xf32> to vector<1x128xf32>
    %15 = vector.broadcast %14 : vector<1x128xf32> to vector<256x128xf32>
    %16 = arith.addf %12, %15 : vector<256x128xf32>
    %cst_12 = arith.constant 0.000000e+00 : f32
    %17 = vector.broadcast %cst_12 : f32 to vector<256x128xf32>
    %18 = arith.maximumf %16, %17 : vector<256x128xf32>
    %c1_i32 = arith.constant 1 : i32
    %19 = arith.cmpi eq, %arg1, %c1_i32 : i32
    %20 = arith.extui %19 : i1 to i32
    %c0_i32_13 = arith.constant 0 : i32
    %21 = arith.cmpi ne, %20, %c0_i32_13 : i32
    scf.if %21 {
      %c0_16 = arith.constant 0 : index
      %c0_17 = arith.constant 0 : index
      %c0_18 = arith.constant 0 : index
      %25 = vector.load %arg5[%c0_16, %c0_17, %c0_18] : memref<1x256x128xf32, #tpu.memory_space<vmem>>, vector<1x256x128xf32>
      %26 = vector.shape_cast %25 : vector<1x256x128xf32> to vector<256x128xf32>
      %27 = vector.shape_cast %18 : vector<256x128xf32> to vector<1x256x128xf32>
      tpu.vector_store %arg5[%c0_16, %c0_17, %c0_18], %27 {strides = array<i32>} : memref<1x256x128xf32, #tpu.memory_space<vmem>>, vector<1x256x128xf32>,
    } else {
    }
    %c1_i32_14 = arith.constant 1 : i32
    %22 = arith.cmpi slt, %arg1, %c1_i32_14 : i32
    %23 = arith.extui %22 : i1 to i32
    %c0_i32_15 = arith.constant 0 : i32
    %24 = arith.cmpi ne, %23, %c0_i32_15 : i32
    scf.if %24 {
      %c2_i32 = arith.constant 2 : i32
      %c0_i32_16 = arith.constant 0 : i32
      %25 = arith.cmpi eq, %c2_i32, %c0_i32_16 : i32
      %c1_i32_17 = arith.constant 1 : i32
      %26 = arith.select %25, %c1_i32_17, %c2_i32 : i32
      %27 = arith.remsi %arg1, %26 : i32
      %c0_i32_18 = arith.constant 0 : i32
      %28 = arith.cmpi ne, %27, %c0_i32_18 : i32
      %c0_i32_19 = arith.constant 0 : i32
      %29 = arith.cmpi slt, %27, %c0_i32_19 : i32
      %c0_i32_20 = arith.constant 0 : i32
      %30 = arith.cmpi slt, %26, %c0_i32_20 : i32
      %31 = arith.xori %29, %30 : i1
      %32 = arith.andi %31, %28 : i1
      %33 = arith.addi %27, %26 : i32
      %34 = arith.select %32, %33, %27 : i32
      %35 = vector.shape_cast %18 : vector<256x128xf32> to vector<16x16x128xf32>
      %36 = arith.truncf %35 : vector<16x16x128xf32> to vector<16x16x128xbf16>
      %c0_i32_21 = arith.constant 0 : i32
      %c0_i32_22 = arith.constant 0 : i32
      %c0_i32_23 = arith.constant 0 : i32
      %37 = tpu.memref_slice %arg6[%34, %c0_i32_21, %c0_i32_22, %c0_i32_23] : memref<2x18x24x128xbf16, #tpu.memory_space<vmem>> -> memref<1x18x24x128xbf16, #tpu.memory_space<vmem>>
      %38 = tpu.memref_squeeze %37 : memref<1x18x24x128xbf16, #tpu.memory_space<vmem>> -> memref<18x24x128xbf16, #tpu.memory_space<vmem>>
      %c1 = arith.constant 1 : index
      %c1_24 = arith.constant 1 : index
      %c0_25 = arith.constant 0 : index
      %39 = vector.load %38[%c1, %c1_24, %c0_25] : memref<18x24x128xbf16, #tpu.memory_space<vmem>>, vector<16x16x128xbf16>
      tpu.vector_store %38[%c1, %c1_24, %c0_25], %36 {strides = array<i32>} : memref<18x24x128xbf16, #tpu.memory_space<vmem>>, vector<16x16x128xbf16>,
    } else {
    }
    return
  }
  func.func @transform_0(%arg0: i32, %arg1: i32) -> (i32, i32, i32, i32) {
    %c0_i32 = arith.constant 0 : i32
    %c0_i32_0 = arith.constant 0 : i32
    %c0_i32_1 = arith.constant 0 : i32
    %c0_i32_2 = arith.constant 0 : i32
    return %arg0, %c0_i32, %c0_i32_0, %c0_i32_1 : i32, i32, i32, i32
  }
  func.func @transform_1(%arg0: i32, %arg1: i32) -> (i32, i32, i32) {
    %c0_i32 = arith.constant 0 : i32
    %c0_i32_0 = arith.constant 0 : i32
    %c0_i32_1 = arith.constant 0 : i32
    return %arg1, %c0_i32, %c0_i32_0 : i32, i32, i32
  }
  func.func @transform_2(%arg0: i32, %arg1: i32) -> (i32, i32, i32) {
    %c0_i32 = arith.constant 0 : i32
    %c0_i32_0 = arith.constant 0 : i32
    %c0_i32_1 = arith.constant 0 : i32
    return %arg1, %c0_i32, %c0_i32_0 : i32, i32, i32
  }
  func.func @transform_3(%arg0: i32, %arg1: i32) -> (i32, i32, i32) {
    %c0_i32 = arith.constant 0 : i32
    %c0_i32_0 = arith.constant 0 : i32
    %c0_i32_1 = arith.constant 0 : i32
    return %arg0, %c0_i32, %c0_i32_0 : i32, i32, i32
  }
}

</mosaic_0001>

<llo_original>
// kernel: repblock_forward_nchw.1
$region0: #{repblock_forward_nchw.1}
  #allocation0 [shape = 'u32[]', space=smem, size = 0x4, offset = 0x4, fixed_abs, tag = 'smem constant byte address 0x4 - core index']
  #allocation1 [shape = 'u32[72,128]{1,0:T(1,128)}', space=vmem, size = 0x9000, scoped, tag = 'internal scratch']
  #allocation2 [shape = 'bf16[2,18,24,128]{3,2,1,0:T(8,128)(2,1)}', space=vmem, size = 0x36000, scoped, tag = 'scratch operand']
  #allocation3 [shape = 'bf16[256,1152]{1,0:T(8,128)(2,1)}', space=vmem, size = 0x90000, scoped, tag = 'scratch operand']
  %s0 = inlined_call_operand.vmem [shape: bf16[2,18,24,128], index: 0, kind: input, shape index: {}]
  %s1 = inlined_call_operand.vmem [shape: bf16[2,1152,128], index: 1, kind: input, shape index: {}]
  %s2 = inlined_call_operand.vmem [shape: f32[2,1,128], index: 2, kind: input, shape index: {}]
  %s3 = inlined_call_operand.vmem [shape: f32[2,256,128], index: 3, kind: output, shape index: {}]
  %s4 = sld [smem:[#allocation0]]
  $region61: #{repblock_forward_nchw.1} parent=0
    _
  %s6 = ssub.s32 1, %s4
  %s7 = scalar_select 0, %s6, %s4
  loop: start=0, step=1, limit=6
  $region2: #{repblock_forward_nchw.1} parent=0 // loop_pre_header
    _
  $region3: #{repblock_forward_nchw.1} parent=0 // loop_header
    %s9 = sphi 0, %s13
    %p10 = scmp.ge.s32.totalorder %s9, 6
    %s16 = sphi 0, %s28
    %s17 = sphi 0, %s24
    %s18 = sphi 0, %s16
    %s19 = sphi 0, %s17
    %s20 = sphi 0, %s18
    %s21 = sphi 0, %s19
    %s31 = sphi 0, %s33
    %s34 = sphi 0, %s31
    %s35 = sphi 0, %s34
    %s51 = sphi 0, %s35
    %s57 = sphi 0, %s59
    %s60 = sphi 0, %s57
    %s61 = sphi 0, %s60
    %s77 = sphi 0, %s61
    %s83 = sphi 0, %s85
    %s86 = sphi 0, %s83
    %s87 = sphi 0, %s86
    %s103 = sphi 0, %s87
    %s109 = sphi 0, %s111
    %s112 = sphi 0, %s109
    %s113 = sphi 0, %s112
    %s129 = sphi 0, %s113
  $region4: #{repblock_forward_nchw.1} parent=0 // loop_header_branch
    %12 = sbr.rel (%p10) target = $region8
  $region5: #{repblock_forward_nchw.1} parent=0 // loop_body
    %s14 = ssub.s32 %s9, 1
    %s15 = ssub.s32 %s9, 2
    %s22 = sadd.s32 1, %s17
    %p23 = scmp.ge.s32.totalorder %s22, 2
    %s24 = scalar_select %p23, 0, %s22
    %s25 = sadd.s32 1, %s16
    %s26 = scalar_select %p23, %s25, %s16
    %p27 = scmp.ge.s32.totalorder %s26, 2
    %s28 = scalar_select %p27, 0, %s26
    %s29 = ssub.s32 %s16, %s28
    %p30 = scmp.eq.s32.totalorder %s29, 0
    %s32 = sadd.s32 %s31, 1
    %s33 = scalar_select %p30, %s31, %s32
    %p36 = pneg %p30
    %p37 = scmp.eq.s32.totalorder %s9, 3
    %p38 = por %p36, %p37
    %p39 = scmp.ne.s32.totalorder %s31, %s34
    %p40 = scmp.eq.s32.totalorder %s9, 0
    %p41 = por %p39, %p40
    %p42 = scmp.ne.s32.totalorder %s31, %s34
    %p43 = scmp.eq.s32.totalorder %s14, 3
    %p44 = por %p42, %p43
    %p45 = scmp.ne.s32.totalorder %s34, %s35
    %p46 = scmp.eq.s32.totalorder %s14, 0
    %p47 = por %p45, %p46
    %p48 = scmp.ne.s32.totalorder %s34, %s35
    %p49 = scmp.eq.s32.totalorder %s15, 3
    %p50 = por %p48, %p49
    %p52 = scmp.ne.s32.totalorder %s35, %s51
    %p53 = scmp.eq.s32.totalorder %s15, 0
    %p54 = por %p52, %p53
    %s55 = ssub.s32 %s17, %s24
    %p56 = scmp.eq.s32.totalorder %s55, 0
    %s58 = sadd.s32 %s57, 1
    %s59 = scalar_select %p56, %s57, %s58
    %p62 = pneg %p56
    %p63 = scmp.eq.s32.totalorder %s9, 3
    %p64 = por %p62, %p63
    %p65 = scmp.ne.s32.totalorder %s57, %s60
    %p66 = scmp.eq.s32.totalorder %s9, 0
    %p67 = por %p65, %p66
    %p68 = scmp.ne.s32.totalorder %s57, %s60
    %p69 = scmp.eq.s32.totalorder %s14, 3
    %p70 = por %p68, %p69
    %p71 = scmp.ne.s32.totalorder %s60, %s61
    %p72 = scmp.eq.s32.totalorder %s14, 0
    %p73 = por %p71, %p72
    %p74 = scmp.ne.s32.totalorder %s60, %s61
    %p75 = scmp.eq.s32.totalorder %s15, 3
    %p76 = por %p74, %p75
    %p78 = scmp.ne.s32.totalorder %s61, %s77
    %p79 = scmp.eq.s32.totalorder %s15, 0
    %p80 = por %p78, %p79
    %s81 = ssub.s32 %s17, %s24
    %p82 = scmp.eq.s32.totalorder %s81, 0
    %s84 = sadd.s32 %s83, 1
    %s85 = scalar_select %p82, %s83, %s84
    %p88 = pneg %p82
    %p89 = scmp.eq.s32.totalorder %s9, 3
    %p90 = por %p88, %p89
    %p91 = scmp.ne.s32.totalorder %s83, %s86
    %p92 = scmp.eq.s32.totalorder %s9, 0
    %p93 = por %p91, %p92
    %p94 = scmp.ne.s32.totalorder %s83, %s86
    %p95 = scmp.eq.s32.totalorder %s14, 3
    %p96 = por %p94, %p95
    %p97 = scmp.ne.s32.totalorder %s86, %s87
    %p98 = scmp.eq.s32.totalorder %s14, 0
    %p99 = por %p97, %p98
    %p100 = scmp.ne.s32.totalorder %s86, %s87
    %p101 = scmp.eq.s32.totalorder %s15, 3
    %p102 = por %p100, %p101
    %p104 = scmp.ne.s32.totalorder %s87, %s103
    %p105 = scmp.eq.s32.totalorder %s15, 0
    %p106 = por %p104, %p105
    %s107 = ssub.s32 %s16, %s28
    %p108 = scmp.eq.s32.totalorder %s107, 0
    %s110 = sadd.s32 %s109, 1
    %s111 = scalar_select %p108, %s109, %s110
    %p114 = pneg %p108
    %p115 = scmp.eq.s32.totalorder %s9, 3
    %p116 = por %p114, %p115
    %p117 = scmp.ne.s32.totalorder %s109, %s112
    %p118 = scmp.eq.s32.totalorder %s9, 0
    %p119 = por %p117, %p118
    %p120 = scmp.ne.s32.totalorder %s109, %s112
    %p121 = scmp.eq.s32.totalorder %s14, 3
    %p122 = por %p120, %p121
    %p123 = scmp.ne.s32.totalorder %s112, %s113
    %p124 = scmp.eq.s32.totalorder %s14, 0
    %p125 = por %p123, %p124
    %p126 = scmp.ne.s32.totalorder %s112, %s113
    %p127 = scmp.eq.s32.totalorder %s15, 3
    %p128 = por %p126, %p127
    %p130 = scmp.ne.s32.totalorder %s113, %s129
    %p131 = scmp.eq.s32.totalorder %s15, 0
    %p132 = por %p130, %p131
    %p133 = scmp.le.s32.totalorder 1, %s9
    %p134 = scmp.lt.s32.totalorder %s9, 5
    %p135 = pnand %p133, %p134
    %p136 = pneg %p135
    // Predicated region
    $region9: #{repblock_forward_nchw.1} parent=5 // pred_check
      _
    $region10: #{repblock_forward_nchw.1} parent=5 // pred_check_branch
      %138 = sbr.rel (%p135) target = $region12
    $region11: #{repblock_forward_nchw.1} parent=5 // pred_region
      %s139 = ssub.s32 %s9, 1
    $region12: #{repblock_forward_nchw.1} parent=5 // pred_fallthru
      _
    %p140 = scmp.lt.s32.totalorder %s9, 4
    // Predicated region
    $region13: #{repblock_forward_nchw.1} parent=5 // pred_check
      %p141 = pneg %p140
    $region14: #{repblock_forward_nchw.1} parent=5 // pred_check_branch
      %143 = sbr.rel (%p141) target = $region16
    $region15: #{repblock_forward_nchw.1} parent=5 // pred_region
      // Predicated region
      $region17: #{repblock_forward_nchw.1} parent=15 // pred_check
        %p144 = pneg %p41
      $region18: #{repblock_forward_nchw.1} parent=15 // pred_check_branch
        %146 = sbr.rel (%p144) target = $region20
      $region19: #{repblock_forward_nchw.1} parent=15 // pred_region
        %p147 = scmp.lt.s32.totalorder %s16, 1
        %s148 = scalar_select %p147, %s16, 1
        %s149 = smul.addr %s148, 54
        %s150 = smul.addr %s149, 4
        %s151 = scalar_lea.vmem %s0, %s150
      $region20: #{repblock_forward_nchw.1} parent=15 // pred_fallthru
        _
      // Predicated region
      $region21: #{repblock_forward_nchw.1} parent=15 // pred_check
        %p152 = pneg %p67
      $region22: #{repblock_forward_nchw.1} parent=15 // pred_check_branch
        %154 = sbr.rel (%p152) target = $region24
      $region23: #{repblock_forward_nchw.1} parent=15 // pred_region
        %p155 = scmp.lt.s32.totalorder %s17, 1
        %s156 = scalar_select %p155, %s17, 1
        %s157 = smul.addr %s156, 144
        %s158 = smul.addr %s157, 4
        %s159 = scalar_lea.vmem %s1, %s158
      $region24: #{repblock_forward_nchw.1} parent=15 // pred_fallthru
        _
      // Predicated region
      $region25: #{repblock_forward_nchw.1} parent=15 // pred_check
        %p160 = pneg %p93
      $region26: #{repblock_forward_nchw.1} parent=15 // pred_check_branch
        %162 = sbr.rel (%p160) target = $region28
      $region27: #{repblock_forward_nchw.1} parent=15 // pred_region
        %p163 = scmp.lt.s32.totalorder %s17, 1
        %s164 = scalar_select %p163, %s17, 1
        %s165 = scalar_lea.vmem %s2, %s164
      $region28: #{repblock_forward_nchw.1} parent=15 // pred_fallthru
        _
    $region16: #{repblock_forward_nchw.1} parent=5 // pred_fallthru
      _
    %p166 = scmp.le.s32.totalorder 1, %s9
    %p167 = scmp.lt.s32.totalorder %s9, 5
    %p168 = pnand %p166, %p167
    %p169 = pneg %p168
    // Predicated region
    $region29: #{repblock_forward_nchw.1} parent=5 // pred_check
      _
    $region30: #{repblock_forward_nchw.1} parent=5 // pred_check_branch
      %171 = sbr.rel (%p168) target = $region32
    $region31: #{repblock_forward_nchw.1} parent=5 // pred_region
      %s172 = ssub.s32 %s9, 1
      %p173 = scmp.lt.s32.totalorder %s18, 1
      %s174 = scalar_select %p173, %s18, 1
      %s175 = smul.addr %s174, 54
      %s176 = smul.addr %s175, 4
      %s177 = scalar_lea.vmem %s0, %s176
      %p178 = pneg %p47
      %p179 = pneg %p44
      %p180 = scmp.lt.s32.totalorder %s19, 1
      %s181 = scalar_select %p180, %s19, 1
      %s182 = smul.addr %s181, 144
      %s183 = smul.addr %s182, 4
      %s184 = scalar_lea.vmem %s1, %s183
      %p185 = pneg %p73
      %p186 = pneg %p70
      %p187 = scmp.lt.s32.totalorder %s19, 1
      %s188 = scalar_select %p187, %s19, 1
      %s189 = scalar_lea.vmem %s2, %s188
      %p190 = pneg %p99
      %p191 = pneg %p96
      %p192 = pneg %p125
      %p193 = pneg %p122
      %p194 = scmp.lt.s32.totalorder %s18, 1
      %s195 = scalar_select %p194, %s18, 1
      %s196 = smul.addr %s195, 32
      %s197 = smul.addr %s196, 8
      %s198 = scalar_lea.vmem %s3, %s197
      %p199 = scmp.lt.s32.totalorder %s18, 1
      %s200 = scalar_select %p199, %s18, 1
      %s201 = smul.addr %s200, 54
      %s202 = smul.addr %s201, 4
      %s203 = scalar_lea.vmem %s0, %s202
      %p204 = scmp.lt.s32.totalorder %s19, 1
      %s205 = scalar_select %p204, %s19, 1
      %s206 = smul.addr %s205, 144
      %s207 = smul.addr %s206, 4
      %s208 = scalar_lea.vmem %s1, %s207
      %p209 = scmp.lt.s32.totalorder %s19, 1
      %s210 = scalar_select %p209, %s19, 1
      %s211 = scalar_lea.vmem %s2, %s210
      %p212 = scmp.lt.s32.totalorder %s18, 1
      %s213 = scalar_select %p212, %s18, 1
      %s214 = smul.addr %s213, 32
      %s215 = smul.addr %s214, 8
      %s216 = scalar_lea.vmem %s3, %s215
      %p218 = scmp.eq.s32.totalorder %s19, 0
      // Predicated region
      $region33: #{repblock_forward_nchw.1} parent=31 // pred_check
        %p219 = pneg %p218
      $region34: #{repblock_forward_nchw.1} parent=31 // pred_check_branch
        %221 = sbr.rel (%p219) target = $region36
      $region35: #{repblock_forward_nchw.1} parent=31 // pred_region
        %222 = vst [vmem:[#allocation2] sm:$0xf] 0
        %223 = vst [vmem:[#allocation2 + $0x4] sm:$0xf] 0
        %224 = vst [vmem:[#allocation2 + $0x8] sm:$0xf] 0
        %s225 = scalar_lea.vmem [#allocation2], 204
        %226 = vst [vmem:[%s225] sm:$0xf] 0
        %227 = vst [vmem:[%s225 + $0x4] sm:$0xf] 0
        %228 = vst [vmem:[%s225 + $0x8] sm:$0xf] 0
        %vm229 = vcmask 1040384
        %vm230 = vsmask.f32 256
        %vm231 = vmand %vm229, %vm230
        %v232 = vld [vmem:[#allocation2] sm:$0x1]
        %v233 = vsel %vm231, 0, %v232
        %234 = vst [vmem:[#allocation2] sm:$0x1] %v233
        %v235 = vld [vmem:[#allocation2 + $0xc] sm:$0x1]
        %v236 = vsel %vm231, 0, %v235
        %237 = vst [vmem:[#allocation2 + $0xc] sm:$0x1] %v236
        %v238 = vld [vmem:[#allocation2 + $0x18] sm:$0x1]
        %v239 = vsel %vm231, 0, %v238
        %240 = vst [vmem:[#allocation2 + $0x18] sm:$0x1] %v239
        %v241 = vld [vmem:[#allocation2 + $0x24] sm:$0x1]
        %v242 = vsel %vm231, 0, %v241
        %243 = vst [vmem:[#allocation2 + $0x24] sm:$0x1] %v242
        %v244 = vld [vmem:[#allocation2 + $0x30] sm:$0x1]
        %v245 = vsel %vm231, 0, %v244
        %246 = vst [vmem:[#allocation2 + $0x30] sm:$0x1] %v245
        %v247 = vld [vmem:[#allocation2 + $0x3c] sm:$0x1]
        %v248 = vsel %vm231, 0, %v247
        %249 = vst [vmem:[#allocation2 + $0x3c] sm:$0x1] %v248
        %v250 = vld [vmem:[#allocation2 + $0x48] sm:$0x1]
        %v251 = vsel %vm231, 0, %v250
        %252 = vst [vmem:[#allocation2 + $0x48] sm:$0x1] %v251
        %v253 = vld [vmem:[#allocation2 + $0x54] sm:$0x1]
        %v254 = vsel %vm231, 0, %v253
        %255 = vst [vmem:[#allocation2 + $0x54] sm:$0x1] %v254
        %v256 = vld [vmem:[#allocation2 + $0x60] sm:$0x1]
        %v257 = vsel %vm231, 0, %v256
        %258 = vst [vmem:[#allocation2 + $0x60] sm:$0x1] %v257
        %v259 = vld [vmem:[#allocation2 + $0x6c] sm:$0x1]
        %v260 = vsel %vm231, 0, %v259
        %261 = vst [vmem:[#allocation2 + $0x6c] sm:$0x1] %v260
        %v262 = vld [vmem:[#allocation2 + $0x78] sm:$0x1]
        %v263 = vsel %vm231, 0, %v262
        %264 = vst [vmem:[#allocation2 + $0x78] sm:$0x1] %v263
        %v265 = vld [vmem:[#allocation2 + $0x84] sm:$0x1]
        %v266 = vsel %vm231, 0, %v265
        %267 = vst [vmem:[#allocation2 + $0x84] sm:$0x1] %v266
        %v268 = vld [vmem:[#allocation2 + $0x90] sm:$0x1]
        %v269 = vsel %vm231, 0, %v268
        %270 = vst [vmem:[#allocation2 + $0x90] sm:$0x1] %v269
        %v271 = vld [vmem:[#allocation2 + $0x9c] sm:$0x1]
        %v272 = vsel %vm231, 0, %v271
        %273 = vst [vmem:[#allocation2 + $0x9c] sm:$0x1] %v272
        %v274 = vld [vmem:[#allocation2 + $0xa8] sm:$0x1]
        %v275 = vsel %vm231, 0, %v274
        %276 = vst [vmem:[#allocation2 + $0xa8] sm:$0x1] %v275
        %v277 = vld [vmem:[#allocation2 + $0xb4] sm:$0x1]
        %v278 = vsel %vm231, 0, %v277
        %279 = vst [vmem:[#allocation2 + $0xb4] sm:$0x1] %v278
        %v280 = vld [vmem:[#allocation2 + $0xc0] sm:$0x1]
        %v281 = vsel %vm231, 0, %v280
        %282 = vst [vmem:[#allocation2 + $0xc0] sm:$0x1] %v281
        %v283 = vld [vmem:[#allocation2 + $0xcc] sm:$0x1]
        %v284 = vsel %vm231, 0, %v283
        %285 = vst [vmem:[#allocation2 + $0xcc] sm:$0x1] %v284
        %vm286 = vcmask 1043456
        %vm287 = vsmask.f32 7938
        %vm288 = vmand %vm286, %vm287
        %v289 = vld [vmem:[#allocation2 + $0x8] sm:$0xf]
        %v290 = vsel %vm288, 0, %v289
        %291 = vst [vmem:[#allocation2 + $0x8] sm:$0xf] %v290
        %v292 = vld [vmem:[#allocation2 + $0x14] sm:$0xf]
        %v293 = vsel %vm288, 0, %v292
        %294 = vst [vmem:[#allocation2 + $0x14] sm:$0xf] %v293
        %v295 = vld [vmem:[#allocation2 + $0x20] sm:$0xf]
        %v296 = vsel %vm288, 0, %v295
        %297 = vst [vmem:[#allocation2 + $0x20] sm:$0xf] %v296
        %v298 = vld [vmem:[#allocation2 + $0x2c] sm:$0xf]
        %v299 = vsel %vm288, 0, %v298
        %300 = vst [vmem:[#allocation2 + $0x2c] sm:$0xf] %v299
        %v301 = vld [vmem:[#allocation2 + $0x38] sm:$0xf]
        %v302 = vsel %vm288, 0, %v301
        %303 = vst [vmem:[#allocation2 + $0x38] sm:$0xf] %v302
        %v304 = vld [vmem:[#allocation2 + $0x44] sm:$0xf]
        %v305 = vsel %vm288, 0, %v304
        %306 = vst [vmem:[#allocation2 + $0x44] sm:$0xf] %v305
        %v307 = vld [vmem:[#allocation2 + $0x50] sm:$0xf]
        %v308 = vsel %vm288, 0, %v307
        %309 = vst [vmem:[#allocation2 + $0x50] sm:$0xf] %v308
        %v310 = vld [vmem:[#allocation2 + $0x5c] sm:$0xf]
        %v311 = vsel %vm288, 0, %v310
        %312 = vst [vmem:[#allocation2 + $0x5c] sm:$0xf] %v311
        %v313 = vld [vmem:[#allocation2 + $0x68] sm:$0xf]
        %v314 = vsel %vm288, 0, %v313
        %315 = vst [vmem:[#allocation2 + $0x68] sm:$0xf] %v314
        %v316 = vld [vmem:[#allocation2 + $0x74] sm:$0xf]
        %v317 = vsel %vm288, 0, %v316
        %318 = vst [vmem:[#allocation2 + $0x74] sm:$0xf] %v317
        %v319 = vld [vmem:[#allocation2 + $0x80] sm:$0xf]
        %v320 = vsel %vm288, 0, %v319
        %321 = vst [vmem:[#allocation2 + $0x80] sm:$0xf] %v320
        %v322 = vld [vmem:[#allocation2 + $0x8c] sm:$0xf]
        %v323 = vsel %vm288, 0, %v322
        %324 = vst [vmem:[#allocation2 + $0x8c] sm:$0xf] %v323
        %v325 = vld [vmem:[#allocation2 + $0x98] sm:$0xf]
        %v326 = vsel %vm288, 0, %v325
        %327 = vst [vmem:[#allocation2 + $0x98] sm:$0xf] %v326
        %v328 = vld [vmem:[#allocation2 + $0xa4] sm:$0xf]
        %v329 = vsel %vm288, 0, %v328
        %330 = vst [vmem:[#allocation2 + $0xa4] sm:$0xf] %v329
        %v331 = vld [vmem:[#allocation2 + $0xb0] sm:$0xf]
        %v332 = vsel %vm288, 0, %v331
        %333 = vst [vmem:[#allocation2 + $0xb0] sm:$0xf] %v332
        %v334 = vld [vmem:[#allocation2 + $0xbc] sm:$0xf]
        %v335 = vsel %vm288, 0, %v334
        %336 = vst [vmem:[#allocation2 + $0xbc] sm:$0xf] %v335
        %v337 = vld [vmem:[#allocation2 + $0xc8] sm:$0xf]
        %v338 = vsel %vm288, 0, %v337
        %339 = vst [vmem:[#allocation2 + $0xc8] sm:$0xf] %v338
        %v340 = vld [vmem:[#allocation2 + $0xd4] sm:$0xf]
        %v341 = vsel %vm288, 0, %v340
        %342 = vst [vmem:[#allocation2 + $0xd4] sm:$0xf] %v341
        %s343 = scalar_lea.vmem [#allocation2], 216
        %344 = vst [vmem:[%s343] sm:$0xf] 0
        %345 = vst [vmem:[%s343 + $0x4] sm:$0xf] 0
        %346 = vst [vmem:[%s343 + $0x8] sm:$0xf] 0
        %s347 = scalar_lea.vmem %s343, 204 [#allocation2]
        %348 = vst [vmem:[%s347] sm:$0xf] 0
        %349 = vst [vmem:[%s347 + $0x4] sm:$0xf] 0
        %350 = vst [vmem:[%s347 + $0x8] sm:$0xf] 0
        %v351 = vld [vmem:[%s343] sm:$0x1]
        %v352 = vsel %vm231, 0, %v351
        %353 = vst [vmem:[%s343] sm:$0x1] %v352
        %v354 = vld [vmem:[%s343 + $0xc] sm:$0x1]
        %v355 = vsel %vm231, 0, %v354
        %356 = vst [vmem:[%s343 + $0xc] sm:$0x1] %v355
        %v357 = vld [vmem:[%s343 + $0x18] sm:$0x1]
        %v358 = vsel %vm231, 0, %v357
        %359 = vst [vmem:[%s343 + $0x18] sm:$0x1] %v358
        %v360 = vld [vmem:[%s343 + $0x24] sm:$0x1]
        %v361 = vsel %vm231, 0, %v360
        %362 = vst [vmem:[%s343 + $0x24] sm:$0x1] %v361
        %v363 = vld [vmem:[%s343 + $0x30] sm:$0x1]
        %v364 = vsel %vm231, 0, %v363
        %365 = vst [vmem:[%s343 + $0x30] sm:$0x1] %v364
        %v366 = vld [vmem:[%s343 + $0x3c] sm:$0x1]
        %v367 = vsel %vm231, 0, %v366
        %368 = vst [vmem:[%s343 + $0x3c] sm:$0x1] %v367
        %v369 = vld [vmem:[%s343 + $0x48] sm:$0x1]
        %v370 = vsel %vm231, 0, %v369
        %371 = vst [vmem:[%s343 + $0x48] sm:$0x1] %v370
        %v372 = vld [vmem:[%s343 + $0x54] sm:$0x1]
        %v373 = vsel %vm231, 0, %v372
        %374 = vst [vmem:[%s343 + $0x54] sm:$0x1] %v373
        %v375 = vld [vmem:[%s343 + $0x60] sm:$0x1]
        %v376 = vsel %vm231, 0, %v375
        %377 = vst [vmem:[%s343 + $0x60] sm:$0x1] %v376
        %v378 = vld [vmem:[%s343 + $0x6c] sm:$0x1]
        %v379 = vsel %vm231, 0, %v378
        %380 = vst [vmem:[%s343 + $0x6c] sm:$0x1] %v379
        %v381 = vld [vmem:[%s343 + $0x78] sm:$0x1]
        %v382 = vsel %vm231, 0, %v381
        %383 = vst [vmem:[%s343 + $0x78] sm:$0x1] %v382
        %v384 = vld [vmem:[%s343 + $0x84] sm:$0x1]
        %v385 = vsel %vm231, 0, %v384
        %386 = vst [vmem:[%s343 + $0x84] sm:$0x1] %v385
        %v387 = vld [vmem:[%s343 + $0x90] sm:$0x1]
        %v388 = vsel %vm231, 0, %v387
        %389 = vst [vmem:[%s343 + $0x90] sm:$0x1] %v388
        %v390 = vld [vmem:[%s343 + $0x9c] sm:$0x1]
        %v391 = vsel %vm231, 0, %v390
        %392 = vst [vmem:[%s343 + $0x9c] sm:$0x1] %v391
        %v393 = vld [vmem:[%s343 + $0xa8] sm:$0x1]
        %v394 = vsel %vm231, 0, %v393
        %395 = vst [vmem:[%s343 + $0xa8] sm:$0x1] %v394
        %v396 = vld [vmem:[%s343 + $0xb4] sm:$0x1]
        %v397 = vsel %vm231, 0, %v396
        %398 = vst [vmem:[%s343 + $0xb4] sm:$0x1] %v397
        %v399 = vld [vmem:[%s343 + $0xc0] sm:$0x1]
        %v400 = vsel %vm231, 0, %v399
        %401 = vst [vmem:[%s343 + $0xc0] sm:$0x1] %v400
        %v402 = vld [vmem:[%s343 + $0xcc] sm:$0x1]
        %v403 = vsel %vm231, 0, %v402
        %404 = vst [vmem:[%s343 + $0xcc] sm:$0x1] %v403
        %v405 = vld [vmem:[%s343 + $0x8] sm:$0xf]
        %v406 = vsel %vm288, 0, %v405
        %407 = vst [vmem:[%s343 + $0x8] sm:$0xf] %v406
        %v408 = vld [vmem:[%s343 + $0x14] sm:$0xf]
        %v409 = vsel %vm288, 0, %v408
        %410 = vst [vmem:[%s343 + $0x14] sm:$0xf] %v409
        %v411 = vld [vmem:[%s343 + $0x20] sm:$0xf]
        %v412 = vsel %vm288, 0, %v411
        %413 = vst [vmem:[%s343 + $0x20] sm:$0xf] %v412
        %v414 = vld [vmem:[%s343 + $0x2c] sm:$0xf]
        %v415 = vsel %vm288, 0, %v414
        %416 = vst [vmem:[%s343 + $0x2c] sm:$0xf] %v415
        %v417 = vld [vmem:[%s343 + $0x38] sm:$0xf]
        %v418 = vsel %vm288, 0, %v417
        %419 = vst [vmem:[%s343 + $0x38] sm:$0xf] %v418
        %v420 = vld [vmem:[%s343 + $0x44] sm:$0xf]
        %v421 = vsel %vm288, 0, %v420
        %422 = vst [vmem:[%s343 + $0x44] sm:$0xf] %v421
        %v423 = vld [vmem:[%s343 + $0x50] sm:$0xf]
        %v424 = vsel %vm288, 0, %v423
        %425 = vst [vmem:[%s343 + $0x50] sm:$0xf] %v424
        %v426 = vld [vmem:[%s343 + $0x5c] sm:$0xf]
        %v427 = vsel %vm288, 0, %v426
        %428 = vst [vmem:[%s343 + $0x5c] sm:$0xf] %v427
        %v429 = vld [vmem:[%s343 + $0x68] sm:$0xf]
        %v430 = vsel %vm288, 0, %v429
        %431 = vst [vmem:[%s343 + $0x68] sm:$0xf] %v430
        %v432 = vld [vmem:[%s343 + $0x74] sm:$0xf]
        %v433 = vsel %vm288, 0, %v432
        %434 = vst [vmem:[%s343 + $0x74] sm:$0xf] %v433
        %v435 = vld [vmem:[%s343 + $0x80] sm:$0xf]
        %v436 = vsel %vm288, 0, %v435
        %437 = vst [vmem:[%s343 + $0x80] sm:$0xf] %v436
        %v438 = vld [vmem:[%s343 + $0x8c] sm:$0xf]
        %v439 = vsel %vm288, 0, %v438
        %440 = vst [vmem:[%s343 + $0x8c] sm:$0xf] %v439
        %v441 = vld [vmem:[%s343 + $0x98] sm:$0xf]
        %v442 = vsel %vm288, 0, %v441
        %443 = vst [vmem:[%s343 + $0x98] sm:$0xf] %v442
        %v444 = vld [vmem:[%s343 + $0xa4] sm:$0xf]
        %v445 = vsel %vm288, 0, %v444
        %446 = vst [vmem:[%s343 + $0xa4] sm:$0xf] %v445
        %v447 = vld [vmem:[%s343 + $0xb0] sm:$0xf]
        %v448 = vsel %vm288, 0, %v447
        %449 = vst [vmem:[%s343 + $0xb0] sm:$0xf] %v448
        %v450 = vld [vmem:[%s343 + $0xbc] sm:$0xf]
        %v451 = vsel %vm288, 0, %v450
        %452 = vst [vmem:[%s343 + $0xbc] sm:$0xf] %v451
        %v453 = vld [vmem:[%s343 + $0xc8] sm:$0xf]
        %v454 = vsel %vm288, 0, %v453
        %455 = vst [vmem:[%s343 + $0xc8] sm:$0xf] %v454
        %v456 = vld [vmem:[%s343 + $0xd4] sm:$0xf]
        %v457 = vsel %vm288, 0, %v456
        %458 = vst [vmem:[%s343 + $0xd4] sm:$0xf] %v457
        %v459 = vld [vmem:[%s203] sm:$0xf]
        %v460 = vld [vmem:[%s203 + $0x4] sm:$0xf]
        %v461 = vld [vmem:[%s203 + $0xc] sm:$0xf]
        %v462 = vld [vmem:[%s203 + $0x10] sm:$0xf]
        %v463 = vld [vmem:[%s203 + $0x18] sm:$0xf]
        %v464 = vld [vmem:[%s203 + $0x1c] sm:$0xf]
        %v465 = vld [vmem:[%s203 + $0x24] sm:$0xf]
        %v466 = vld [vmem:[%s203 + $0x28] sm:$0xf]
        %v467 = vld [vmem:[%s203 + $0x30] sm:$0xf]
        %v468 = vld [vmem:[%s203 + $0x34] sm:$0xf]
        %v469 = vld [vmem:[%s203 + $0x3c] sm:$0xf]
        %v470 = vld [vmem:[%s203 + $0x40] sm:$0xf]
        %v471 = vld [vmem:[%s203 + $0x48] sm:$0xf]
        %v472 = vld [vmem:[%s203 + $0x4c] sm:$0xf]
        %v473 = vld [vmem:[%s203 + $0x54] sm:$0xf]
        %v474 = vld [vmem:[%s203 + $0x58] sm:$0xf]
        %v475 = vld [vmem:[%s203 + $0x60] sm:$0xf]
        %v476 = vld [vmem:[%s203 + $0x64] sm:$0xf]
        %v477 = vld [vmem:[%s203 + $0x6c] sm:$0xf]
        %v478 = vld [vmem:[%s203 + $0x70] sm:$0xf]
        %v479 = vld [vmem:[%s203 + $0x78] sm:$0xf]
        %v480 = vld [vmem:[%s203 + $0x7c] sm:$0xf]
        %v481 = vld [vmem:[%s203 + $0x84] sm:$0xf]
        %v482 = vld [vmem:[%s203 + $0x88] sm:$0xf]
        %v483 = vld [vmem:[%s203 + $0x90] sm:$0xf]
        %v484 = vld [vmem:[%s203 + $0x94] sm:$0xf]
        %v485 = vld [vmem:[%s203 + $0x9c] sm:$0xf]
        %v486 = vld [vmem:[%s203 + $0xa0] sm:$0xf]
        %v487 = vld [vmem:[%s203 + $0xa8] sm:$0xf]
        %v488 = vld [vmem:[%s203 + $0xac] sm:$0xf]
        %v489 = vld [vmem:[%s203 + $0xb4] sm:$0xf]
        %v490 = vld [vmem:[%s203 + $0xb8] sm:$0xf]
        %v491 = vld [vmem:[%s203 + $0xc0] sm:$0xf]
        %v492 = vld [vmem:[%s203 + $0xc4] sm:$0xf]
        %v493 = vld [vmem:[%s203 + $0xcc] sm:$0xf]
        %v494 = vld [vmem:[%s203 + $0xd0] sm:$0xf]
        %495 = vst [vmem:[#allocation3] sm:$0xf] %v459
        %496 = vst [vmem:[#allocation3 + $0x24] sm:$0xf] %v460
        %497 = vst [vmem:[#allocation3 + $0x48] sm:$0xf] %v461
        %498 = vst [vmem:[#allocation3 + $0x6c] sm:$0xf] %v462
        %499 = vst [vmem:[#allocation3 + $0x90] sm:$0xf] %v463
        %500 = vst [vmem:[#allocation3 + $0xb4] sm:$0xf] %v464
        %501 = vst [vmem:[#allocation3 + $0xd8] sm:$0xf] %v465
        %502 = vst [vmem:[#allocation3 + $0xfc] sm:$0xf] %v466
        %503 = vst [vmem:[#allocation3 + $0x120] sm:$0xf] %v467
        %504 = vst [vmem:[#allocation3 + $0x144] sm:$0xf] %v468
        %505 = vst [vmem:[#allocation3 + $0x168] sm:$0xf] %v469
        %506 = vst [vmem:[#allocation3 + $0x18c] sm:$0xf] %v470
        %507 = vst [vmem:[#allocation3 + $0x1b0] sm:$0xf] %v471
        %508 = vst [vmem:[#allocation3 + $0x1d4] sm:$0xf] %v472
        %509 = vst [vmem:[#allocation3 + $0x1f8] sm:$0xf] %v473
        %510 = vst [vmem:[#allocation3 + $0x21c] sm:$0xf] %v474
        %511 = vst [vmem:[#allocation3 + $0x240] sm:$0xf] %v475
        %512 = vst [vmem:[#allocation3 + $0x264] sm:$0xf] %v476
        %513 = vst [vmem:[#allocation3 + $0x288] sm:$0xf] %v477
        %514 = vst [vmem:[#allocation3 + $0x2ac] sm:$0xf] %v478
        %515 = vst [vmem:[#allocation3 + $0x2d0] sm:$0xf] %v479
        %516 = vst [vmem:[#allocation3 + $0x2f4] sm:$0xf] %v480
        %517 = vst [vmem:[#allocation3 + $0x318] sm:$0xf] %v481
        %518 = vst [vmem:[#allocation3 + $0x33c] sm:$0xf] %v482
        %519 = vst [vmem:[#allocation3 + $0x360] sm:$0xf] %v483
        %520 = vst [vmem:[#allocation3 + $0x384] sm:$0xf] %v484
        %521 = vst [vmem:[#allocation3 + $0x3a8] sm:$0xf] %v485
        %522 = vst [vmem:[#allocation3 + $0x3cc] sm:$0xf] %v486
        %523 = vst [vmem:[#allocation3 + $0x3f0] sm:$0xf] %v487
        %524 = vst [vmem:[#allocation3 + $0x414] sm:$0xf] %v488
        %525 = vst [vmem:[#allocation3 + $0x438] sm:$0xf] %v489
        %526 = vst [vmem:[#allocation3 + $0x45c] sm:$0xf] %v490
        %527 = vst [vmem:[#allocation3 + $0xc] sm:$0xf] %v461
        %528 = vst [vmem:[#allocation3 + $0x30] sm:$0xf] %v462
        %529 = vst [vmem:[#allocation3 + $0x54] sm:$0xf] %v463
        %530 = vst [vmem:[#allocation3 + $0x78] sm:$0xf] %v464
        %531 = vst [vmem:[#allocation3 + $0x9c] sm:$0xf] %v465
        %532 = vst [vmem:[#allocation3 + $0xc0] sm:$0xf] %v466
        %533 = vst [vmem:[#allocation3 + $0xe4] sm:$0xf] %v467
        %534 = vst [vmem:[#allocation3 + $0x108] sm:$0xf] %v468
        %535 = vst [vmem:[#allocation3 + $0x12c] sm:$0xf] %v469
        %536 = vst [vmem:[#allocation3 + $0x150] sm:$0xf] %v470
        %537 = vst [vmem:[#allocation3 + $0x174] sm:$0xf] %v471
        %538 = vst [vmem:[#allocation3 + $0x198] sm:$0xf] %v472
        %539 = vst [vmem:[#allocation3 + $0x1bc] sm:$0xf] %v473
        %540 = vst [vmem:[#allocation3 + $0x1e0] sm:$0xf] %v474
        %541 = vst [vmem:[#allocation3 + $0x204] sm:$0xf] %v475
        %542 = vst [vmem:[#allocation3 + $0x228] sm:$0xf] %v476
        %543 = vst [vmem:[#allocation3 + $0x24c] sm:$0xf] %v477
        %544 = vst [vmem:[#allocation3 + $0x270] sm:$0xf] %v478
        %545 = vst [vmem:[#allocation3 + $0x294] sm:$0xf] %v479
        %546 = vst [vmem:[#allocation3 + $0x2b8] sm:$0xf] %v480
        %547 = vst [vmem:[#allocation3 + $0x2dc] sm:$0xf] %v481
        %548 = vst [vmem:[#allocation3 + $0x300] sm:$0xf] %v482
        %549 = vst [vmem:[#allocation3 + $0x324] sm:$0xf] %v483
        %550 = vst [vmem:[#allocation3 + $0x348] sm:$0xf] %v484
        %551 = vst [vmem:[#allocation3 + $0x36c] sm:$0xf] %v485
        %552 = vst [vmem:[#allocation3 + $0x390] sm:$0xf] %v486
        %553 = vst [vmem:[#allocation3 + $0x3b4] sm:$0xf] %v487
        %554 = vst [vmem:[#allocation3 + $0x3d8] sm:$0xf] %v488
        %555 = vst [vmem:[#allocation3 + $0x3fc] sm:$0xf] %v489
        %556 = vst [vmem:[#allocation3 + $0x420] sm:$0xf] %v490
        %557 = vst [vmem:[#allocation3 + $0x444] sm:$0xf] %v491
        %558 = vst [vmem:[#allocation3 + $0x468] sm:$0xf] %v492
        %559 = vst [vmem:[#allocation3 + $0x18] sm:$0xf] %v463
        %560 = vst [vmem:[#allocation3 + $0x3c] sm:$0xf] %v464
        %561 = vst [vmem:[#allocation3 + $0x60] sm:$0xf] %v465
        %562 = vst [vmem:[#allocation3 + $0x84] sm:$0xf] %v466
        %563 = vst [vmem:[#allocation3 + $0xa8] sm:$0xf] %v467
        %564 = vst [vmem:[#allocation3 + $0xcc] sm:$0xf] %v468
        %565 = vst [vmem:[#allocation3 + $0xf0] sm:$0xf] %v469
        %566 = vst [vmem:[#allocation3 + $0x114] sm:$0xf] %v470
        %567 = vst [vmem:[#allocation3 + $0x138] sm:$0xf] %v471
        %568 = vst [vmem:[#allocation3 + $0x15c] sm:$0xf] %v472
        %569 = vst [vmem:[#allocation3 + $0x180] sm:$0xf] %v473
        %570 = vst [vmem:[#allocation3 + $0x1a4] sm:$0xf] %v474
        %571 = vst [vmem:[#allocation3 + $0x1c8] sm:$0xf] %v475
        %572 = vst [vmem:[#allocation3 + $0x1ec] sm:$0xf] %v476
        %573 = vst [vmem:[#allocation3 + $0x210] sm:$0xf] %v477
        %574 = vst [vmem:[#allocation3 + $0x234] sm:$0xf] %v478
        %575 = vst [vmem:[#allocation3 + $0x258] sm:$0xf] %v479
        %576 = vst [vmem:[#allocation3 + $0x27c] sm:$0xf] %v480
        %577 = vst [vmem:[#allocation3 + $0x2a0] sm:$0xf] %v481
        %578 = vst [vmem:[#allocation3 + $0x2c4] sm:$0xf] %v482
        %579 = vst [vmem:[#allocation3 + $0x2e8] sm:$0xf] %v483
        %580 = vst [vmem:[#allocation3 + $0x30c] sm:$0xf] %v484
        %581 = vst [vmem:[#allocation3 + $0x330] sm:$0xf] %v485
        %582 = vst [vmem:[#allocation3 + $0x354] sm:$0xf] %v486
        %583 = vst [vmem:[#allocation3 + $0x378] sm:$0xf] %v487
        %584 = vst [vmem:[#allocation3 + $0x39c] sm:$0xf] %v488
        %585 = vst [vmem:[#allocation3 + $0x3c0] sm:$0xf] %v489
        %586 = vst [vmem:[#allocation3 + $0x3e4] sm:$0xf] %v490
        %587 = vst [vmem:[#allocation3 + $0x408] sm:$0xf] %v491
        %588 = vst [vmem:[#allocation3 + $0x42c] sm:$0xf] %v492
        %589 = vst [vmem:[#allocation3 + $0x450] sm:$0xf] %v493
        %590 = vst [vmem:[#allocation3 + $0x474] sm:$0xf] %v494
        %v591 = vld [vmem:[%s203] sm:$0xf]
        %v592 = vld [vmem:[%s203 + $0x4] sm:$0xf]
        %v593 = vld [vmem:[%s203 + $0x8] sm:$0x1]
        %v594 = vld [vmem:[%s203 + $0xc] sm:$0xf]
        %v595 = vld [vmem:[%s203 + $0x10] sm:$0xf]
        %v596 = vld [vmem:[%s203 + $0x14] sm:$0x1]
        %v597 = vld [vmem:[%s203 + $0x18] sm:$0xf]
        %v598 = vld [vmem:[%s203 + $0x1c] sm:$0xf]
        %v599 = vld [vmem:[%s203 + $0x20] sm:$0x1]
        %v600 = vld [vmem:[%s203 + $0x24] sm:$0xf]
        %v601 = vld [vmem:[%s203 + $0x28] sm:$0xf]
        %v602 = vld [vmem:[%s203 + $0x2c] sm:$0x1]
        %v603 = vld [vmem:[%s203 + $0x30] sm:$0xf]
        %v604 = vld [vmem:[%s203 + $0x34] sm:$0xf]
        %v605 = vld [vmem:[%s203 + $0x38] sm:$0x1]
        %v606 = vld [vmem:[%s203 + $0x3c] sm:$0xf]
        %v607 = vld [vmem:[%s203 + $0x40] sm:$0xf]
        %v608 = vld [vmem:[%s203 + $0x44] sm:$0x1]
        %v609 = vld [vmem:[%s203 + $0x48] sm:$0xf]
        %v610 = vld [vmem:[%s203 + $0x4c] sm:$0xf]
        %v611 = vld [vmem:[%s203 + $0x50] sm:$0x1]
        %v612 = vld [vmem:[%s203 + $0x54] sm:$0xf]
        %v613 = vld [vmem:[%s203 + $0x58] sm:$0xf]
        %v614 = vld [vmem:[%s203 + $0x5c] sm:$0x1]
        %v615 = vld [vmem:[%s203 + $0x60] sm:$0xf]
        %v616 = vld [vmem:[%s203 + $0x64] sm:$0xf]
        %v617 = vld [vmem:[%s203 + $0x68] sm:$0x1]
        %v618 = vld [vmem:[%s203 + $0x6c] sm:$0xf]
        %v619 = vld [vmem:[%s203 + $0x70] sm:$0xf]
        %v620 = vld [vmem:[%s203 + $0x74] sm:$0x1]
        %v621 = vld [vmem:[%s203 + $0x78] sm:$0xf]
        %v622 = vld [vmem:[%s203 + $0x7c] sm:$0xf]
        %v623 = vld [vmem:[%s203 + $0x80] sm:$0x1]
        %v624 = vld [vmem:[%s203 + $0x84] sm:$0xf]
        %v625 = vld [vmem:[%s203 + $0x88] sm:$0xf]
        %v626 = vld [vmem:[%s203 + $0x8c] sm:$0x1]
        %v627 = vld [vmem:[%s203 + $0x90] sm:$0xf]
        %v628 = vld [vmem:[%s203 + $0x94] sm:$0xf]
        %v629 = vld [vmem:[%s203 + $0x98] sm:$0x1]
        %v630 = vld [vmem:[%s203 + $0x9c] sm:$0xf]
        %v631 = vld [vmem:[%s203 + $0xa0] sm:$0xf]
        %v632 = vld [vmem:[%s203 + $0xa4] sm:$0x1]
        %v633 = vld [vmem:[%s203 + $0xa8] sm:$0xf]
        %v634 = vld [vmem:[%s203 + $0xac] sm:$0xf]
        %v635 = vld [vmem:[%s203 + $0xb0] sm:$0x1]
        %v636 = vld [vmem:[%s203 + $0xb4] sm:$0xf]
        %v637 = vld [vmem:[%s203 + $0xb8] sm:$0xf]
        %v638 = vld [vmem:[%s203 + $0xbc] sm:$0x1]
        %v639 = vld [vmem:[%s203 + $0xc0] sm:$0xf]
        %v640 = vld [vmem:[%s203 + $0xc4] sm:$0xf]
        %v641 = vld [vmem:[%s203 + $0xc8] sm:$0x1]
        %v642 = vld [vmem:[%s203 + $0xcc] sm:$0xf]
        %v643 = vld [vmem:[%s203 + $0xd0] sm:$0xf]
        %v644 = vld [vmem:[%s203 + $0xd4] sm:$0x1]
        %vm645 = vsmask.f32 3328
        %vm646 = vsmask.f32 7440
        %vm647 = vmor %vm645, %vm646
        %v649 = vshrl.u32 %v591, 16
        %v651 = vrot.slane %v649, 4
        %v652 = vshll.u32 %v591, 16
        %v654 = vrot.slane %v652, 5
        %v655 = vor.u32 %v651, %v654
        %v656 = vrot.slane %v655, 4
        %v658 = vshll.u32 %v592, 16
        %v660 = vrot.slane %v658, 5
        %v661 = vsel %vm647, %v656, %v660
        %v662 = vshrl.u32 %v592, 16
        %v664 = vrot.slane %v662, 4
        %v665 = vor.u32 %v664, %v660
        %v666 = vrot.slane %v665, 4
        %v668 = vshll.u32 %v593, 16
        %v670 = vrot.slane %v668, 5
        %v671 = vsel %vm647, %v666, %v670
        %v673 = vshrl.u32 %v594, 16
        %v675 = vrot.slane %v673, 4
        %v676 = vshll.u32 %v594, 16
        %v678 = vrot.slane %v676, 5
        %v679 = vor.u32 %v675, %v678
        %v680 = vrot.slane %v679, 4
        %v682 = vshll.u32 %v595, 16
        %v684 = vrot.slane %v682, 5
        %v685 = vsel %vm647, %v680, %v684
        %v686 = vshrl.u32 %v595, 16
        %v688 = vrot.slane %v686, 4
        %v689 = vor.u32 %v688, %v684
        %v690 = vrot.slane %v689, 4
        %v692 = vshll.u32 %v596, 16
        %v694 = vrot.slane %v692, 5
        %v695 = vsel %vm647, %v690, %v694
        %v697 = vshrl.u32 %v597, 16
        %v699 = vrot.slane %v697, 4
        %v700 = vshll.u32 %v597, 16
        %v702 = vrot.slane %v700, 5
        %v703 = vor.u32 %v699, %v702
        %v704 = vrot.slane %v703, 4
        %v706 = vshll.u32 %v598, 16
        %v708 = vrot.slane %v706, 5
        %v709 = vsel %vm647, %v704, %v708
        %v710 = vshrl.u32 %v598, 16
        %v712 = vrot.slane %v710, 4
        %v713 = vor.u32 %v712, %v708
        %v714 = vrot.slane %v713, 4
        %v716 = vshll.u32 %v599, 16
        %v718 = vrot.slane %v716, 5
        %v719 = vsel %vm647, %v714, %v718
        %v721 = vshrl.u32 %v600, 16
        %v723 = vrot.slane %v721, 4
        %v724 = vshll.u32 %v600, 16
        %v726 = vrot.slane %v724, 5
        %v727 = vor.u32 %v723, %v726
        %v728 = vrot.slane %v727, 4
        %v730 = vshll.u32 %v601, 16
        %v732 = vrot.slane %v730, 5
        %v733 = vsel %vm647, %v728, %v732
        %v734 = vshrl.u32 %v601, 16
        %v736 = vrot.slane %v734, 4
        %v737 = vor.u32 %v736, %v732
        %v738 = vrot.slane %v737, 4
        %v740 = vshll.u32 %v602, 16
        %v742 = vrot.slane %v740, 5
        %v743 = vsel %vm647, %v738, %v742
        %v745 = vshrl.u32 %v603, 16
        %v747 = vrot.slane %v745, 4
        %v748 = vshll.u32 %v603, 16
        %v750 = vrot.slane %v748, 5
        %v751 = vor.u32 %v747, %v750
        %v752 = vrot.slane %v751, 4
        %v754 = vshll.u32 %v604, 16
        %v756 = vrot.slane %v754, 5
        %v757 = vsel %vm647, %v752, %v756
        %v758 = vshrl.u32 %v604, 16
        %v760 = vrot.slane %v758, 4
        %v761 = vor.u32 %v760, %v756
        %v762 = vrot.slane %v761, 4
        %v764 = vshll.u32 %v605, 16
        %v766 = vrot.slane %v764, 5
        %v767 = vsel %vm647, %v762, %v766
        %v769 = vshrl.u32 %v606, 16
        %v771 = vrot.slane %v769, 4
        %v772 = vshll.u32 %v606, 16
        %v774 = vrot.slane %v772, 5
        %v775 = vor.u32 %v771, %v774
        %v776 = vrot.slane %v775, 4
        %v778 = vshll.u32 %v607, 16
        %v780 = vrot.slane %v778, 5
        %v781 = vsel %vm647, %v776, %v780
        %v782 = vshrl.u32 %v607, 16
        %v784 = vrot.slane %v782, 4
        %v785 = vor.u32 %v784, %v780
        %v786 = vrot.slane %v785, 4
        %v788 = vshll.u32 %v608, 16
        %v790 = vrot.slane %v788, 5
        %v791 = vsel %vm647, %v786, %v790
        %v793 = vshrl.u32 %v609, 16
        %v795 = vrot.slane %v793, 4
        %v796 = vshll.u32 %v609, 16
        %v798 = vrot.slane %v796, 5
        %v799 = vor.u32 %v795, %v798
        %v800 = vrot.slane %v799, 4
        %v802 = vshll.u32 %v610, 16
        %v804 = vrot.slane %v802, 5
        %v805 = vsel %vm647, %v800, %v804
        %v806 = vshrl.u32 %v610, 16
        %v808 = vrot.slane %v806, 4
        %v809 = vor.u32 %v808, %v804
        %v810 = vrot.slane %v809, 4
        %v812 = vshll.u32 %v611, 16
        %v814 = vrot.slane %v812, 5
        %v815 = vsel %vm647, %v810, %v814
        %v817 = vshrl.u32 %v612, 16
        %v819 = vrot.slane %v817, 4
        %v820 = vshll.u32 %v612, 16
        %v822 = vrot.slane %v820, 5
        %v823 = vor.u32 %v819, %v822
        %v824 = vrot.slane %v823, 4
        %v826 = vshll.u32 %v613, 16
        %v828 = vrot.slane %v826, 5
        %v829 = vsel %vm647, %v824, %v828
        %v830 = vshrl.u32 %v613, 16
        %v832 = vrot.slane %v830, 4
        %v833 = vor.u32 %v832, %v828
        %v834 = vrot.slane %v833, 4
        %v836 = vshll.u32 %v614, 16
        %v838 = vrot.slane %v836, 5
        %v839 = vsel %vm647, %v834, %v838
        %v841 = vshrl.u32 %v615, 16
        %v843 = vrot.slane %v841, 4
        %v844 = vshll.u32 %v615, 16
        %v846 = vrot.slane %v844, 5
        %v847 = vor.u32 %v843, %v846
        %v848 = vrot.slane %v847, 4
        %v850 = vshll.u32 %v616, 16
        %v852 = vrot.slane %v850, 5
        %v853 = vsel %vm647, %v848, %v852
        %v854 = vshrl.u32 %v616, 16
        %v856 = vrot.slane %v854, 4
        %v857 = vor.u32 %v856, %v852
        %v858 = vrot.slane %v857, 4
        %v860 = vshll.u32 %v617, 16
        %v862 = vrot.slane %v860, 5
        %v863 = vsel %vm647, %v858, %v862
        %v865 = vshrl.u32 %v618, 16
        %v867 = vrot.slane %v865, 4
        %v868 = vshll.u32 %v618, 16
        %v870 = vrot.slane %v868, 5
        %v871 = vor.u32 %v867, %v870
        %v872 = vrot.slane %v871, 4
        %v874 = vshll.u32 %v619, 16
        %v876 = vrot.slane %v874, 5
        %v877 = vsel %vm647, %v872, %v876
        %v878 = vshrl.u32 %v619, 16
        %v880 = vrot.slane %v878, 4
        %v881 = vor.u32 %v880, %v876
        %v882 = vrot.slane %v881, 4
        %v884 = vshll.u32 %v620, 16
        %v886 = vrot.slane %v884, 5
        %v887 = vsel %vm647, %v882, %v886
        %v889 = vshrl.u32 %v621, 16
        %v891 = vrot.slane %v889, 4
        %v892 = vshll.u32 %v621, 16
        %v894 = vrot.slane %v892, 5
        %v895 = vor.u32 %v891, %v894
        %v896 = vrot.slane %v895, 4
        %v898 = vshll.u32 %v622, 16
        %v900 = vrot.slane %v898, 5
        %v901 = vsel %vm647, %v896, %v900
        %v902 = vshrl.u32 %v622, 16
        %v904 = vrot.slane %v902, 4
        %v905 = vor.u32 %v904, %v900
        %v906 = vrot.slane %v905, 4
        %v908 = vshll.u32 %v623, 16
        %v910 = vrot.slane %v908, 5
        %v911 = vsel %vm647, %v906, %v910
        %v913 = vshrl.u32 %v624, 16
        %v915 = vrot.slane %v913, 4
        %v916 = vshll.u32 %v624, 16
        %v918 = vrot.slane %v916, 5
        %v919 = vor.u32 %v915, %v918
        %v920 = vrot.slane %v919, 4
        %v922 = vshll.u32 %v625, 16
        %v924 = vrot.slane %v922, 5
        %v925 = vsel %vm647, %v920, %v924
        %v926 = vshrl.u32 %v625, 16
        %v928 = vrot.slane %v926, 4
        %v929 = vor.u32 %v928, %v924
        %v930 = vrot.slane %v929, 4
        %v932 = vshll.u32 %v626, 16
        %v934 = vrot.slane %v932, 5
        %v935 = vsel %vm647, %v930, %v934
        %v937 = vshrl.u32 %v627, 16
        %v939 = vrot.slane %v937, 4
        %v940 = vshll.u32 %v627, 16
        %v942 = vrot.slane %v940, 5
        %v943 = vor.u32 %v939, %v942
        %v944 = vrot.slane %v943, 4
        %v946 = vshll.u32 %v628, 16
        %v948 = vrot.slane %v946, 5
        %v949 = vsel %vm647, %v944, %v948
        %v950 = vshrl.u32 %v628, 16
        %v952 = vrot.slane %v950, 4
        %v953 = vor.u32 %v952, %v948
        %v954 = vrot.slane %v953, 4
        %v956 = vshll.u32 %v629, 16
        %v958 = vrot.slane %v956, 5
        %v959 = vsel %vm647, %v954, %v958
        %v961 = vshrl.u32 %v630, 16
        %v963 = vrot.slane %v961, 4
        %v964 = vshll.u32 %v630, 16
        %v966 = vrot.slane %v964, 5
        %v967 = vor.u32 %v963, %v966
        %v968 = vrot.slane %v967, 4
        %v970 = vshll.u32 %v631, 16
        %v972 = vrot.slane %v970, 5
        %v973 = vsel %vm647, %v968, %v972
        %v974 = vshrl.u32 %v631, 16
        %v976 = vrot.slane %v974, 4
        %v977 = vor.u32 %v976, %v972
        %v978 = vrot.slane %v977, 4
        %v980 = vshll.u32 %v632, 16
        %v982 = vrot.slane %v980, 5
        %v983 = vsel %vm647, %v978, %v982
        %v985 = vshrl.u32 %v633, 16
        %v987 = vrot.slane %v985, 4
        %v988 = vshll.u32 %v633, 16
        %v990 = vrot.slane %v988, 5
        %v991 = vor.u32 %v987, %v990
        %v992 = vrot.slane %v991, 4
        %v994 = vshll.u32 %v634, 16
        %v996 = vrot.slane %v994, 5
        %v997 = vsel %vm647, %v992, %v996
        %v998 = vshrl.u32 %v634, 16
        %v1000 = vrot.slane %v998, 4
        %v1001 = vor.u32 %v1000, %v996
        %v1002 = vrot.slane %v1001, 4
        %v1004 = vshll.u32 %v635, 16
        %v1006 = vrot.slane %v1004, 5
        %v1007 = vsel %vm647, %v1002, %v1006
        %v1009 = vshrl.u32 %v636, 16
        %v1011 = vrot.slane %v1009, 4
        %v1012 = vshll.u32 %v636, 16
        %v1014 = vrot.slane %v1012, 5
        %v1015 = vor.u32 %v1011, %v1014
        %v1016 = vrot.slane %v1015, 4
        %v1018 = vshll.u32 %v637, 16
        %v1020 = vrot.slane %v1018, 5
        %v1021 = vsel %vm647, %v1016, %v1020
        %v1022 = vshrl.u32 %v637, 16
        %v1024 = vrot.slane %v1022, 4
        %v1025 = vor.u32 %v1024, %v1020
        %v1026 = vrot.slane %v1025, 4
        %v1028 = vshll.u32 %v638, 16
        %v1030 = vrot.slane %v1028, 5
        %v1031 = vsel %vm647, %v1026, %v1030
        %1064 = vst [vmem:[#allocation3 + $0x4] sm:$0xf] %v661
        %1065 = vst [vmem:[#allocation3 + $0x28] sm:$0xf] %v671
        %1066 = vst [vmem:[#allocation3 + $0x4c] sm:$0xf] %v685
        %1067 = vst [vmem:[#allocation3 + $0x70] sm:$0xf] %v695
        %1068 = vst [vmem:[#allocation3 + $0x94] sm:$0xf] %v709
        %1069 = vst [vmem:[#allocation3 + $0xb8] sm:$0xf] %v719
        %1070 = vst [vmem:[#allocation3 + $0xdc] sm:$0xf] %v733
        %1071 = vst [vmem:[#allocation3 + $0x100] sm:$0xf] %v743
        %1072 = vst [vmem:[#allocation3 + $0x124] sm:$0xf] %v757
        %1073 = vst [vmem:[#allocation3 + $0x148] sm:$0xf] %v767
        %1074 = vst [vmem:[#allocation3 + $0x16c] sm:$0xf] %v781
        %1075 = vst [vmem:[#allocation3 + $0x190] sm:$0xf] %v791
        %1076 = vst [vmem:[#allocation3 + $0x1b4] sm:$0xf] %v805
        %1077 = vst [vmem:[#allocation3 + $0x1d8] sm:$0xf] %v815
        %1078 = vst [vmem:[#allocation3 + $0x1fc] sm:$0xf] %v829
        %1079 = vst [vmem:[#allocation3 + $0x220] sm:$0xf] %v839
        %1080 = vst [vmem:[#allocation3 + $0x244] sm:$0xf] %v853
        %1081 = vst [vmem:[#allocation3 + $0x268] sm:$0xf] %v863
        %1082 = vst [vmem:[#allocation3 + $0x28c] sm:$0xf] %v877
        %1083 = vst [vmem:[#allocation3 + $0x2b0] sm:$0xf] %v887
        %1084 = vst [vmem:[#allocation3 + $0x2d4] sm:$0xf] %v901
        %1085 = vst [vmem:[#allocation3 + $0x2f8] sm:$0xf] %v911
        %1086 = vst [vmem:[#allocation3 + $0x31c] sm:$0xf] %v925
        %1087 = vst [vmem:[#allocation3 + $0x340] sm:$0xf] %v935
        %1088 = vst [vmem:[#allocation3 + $0x364] sm:$0xf] %v949
        %1089 = vst [vmem:[#allocation3 + $0x388] sm:$0xf] %v959
        %1090 = vst [vmem:[#allocation3 + $0x3ac] sm:$0xf] %v973
        %1091 = vst [vmem:[#allocation3 + $0x3d0] sm:$0xf] %v983
        %1092 = vst [vmem:[#allocation3 + $0x3f4] sm:$0xf] %v997
        %1093 = vst [vmem:[#allocation3 + $0x418] sm:$0xf] %v1007
        %1094 = vst [vmem:[#allocation3 + $0x43c] sm:$0xf] %v1021
        %1095 = vst [vmem:[#allocation3 + $0x460] sm:$0xf] %v1031
        %v1097 = vshrl.u32 %v639, 16
        %v1099 = vrot.slane %v1097, 4
        %v1100 = vshll.u32 %v639, 16
        %v1102 = vrot.slane %v1100, 5
        %v1103 = vor.u32 %v1099, %v1102
        %v1104 = vrot.slane %v1103, 4
        %v1106 = vshll.u32 %v640, 16
        %v1108 = vrot.slane %v1106, 5
        %v1109 = vsel %vm647, %v1104, %v1108
        %v1110 = vshrl.u32 %v640, 16
        %v1112 = vrot.slane %v1110, 4
        %v1113 = vor.u32 %v1112, %v1108
        %v1114 = vrot.slane %v1113, 4
        %v1116 = vshll.u32 %v641, 16
        %v1118 = vrot.slane %v1116, 5
        %v1119 = vsel %vm647, %v1114, %v1118
        %1122 = vst [vmem:[#allocation3 + $0x10] sm:$0xf] %v685
        %1123 = vst [vmem:[#allocation3 + $0x34] sm:$0xf] %v695
        %1124 = vst [vmem:[#allocation3 + $0x58] sm:$0xf] %v709
        %1125 = vst [vmem:[#allocation3 + $0x7c] sm:$0xf] %v719
        %1126 = vst [vmem:[#allocation3 + $0xa0] sm:$0xf] %v733
        %1127 = vst [vmem:[#allocation3 + $0xc4] sm:$0xf] %v743
        %1128 = vst [vmem:[#allocation3 + $0xe8] sm:$0xf] %v757
        %1129 = vst [vmem:[#allocation3 + $0x10c] sm:$0xf] %v767
        %1130 = vst [vmem:[#allocation3 + $0x130] sm:$0xf] %v781
        %1131 = vst [vmem:[#allocation3 + $0x154] sm:$0xf] %v791
        %1132 = vst [vmem:[#allocation3 + $0x178] sm:$0xf] %v805
        %1133 = vst [vmem:[#allocation3 + $0x19c] sm:$0xf] %v815
        %1134 = vst [vmem:[#allocation3 + $0x1c0] sm:$0xf] %v829
        %1135 = vst [vmem:[#allocation3 + $0x1e4] sm:$0xf] %v839
        %1136 = vst [vmem:[#allocation3 + $0x208] sm:$0xf] %v853
        %1137 = vst [vmem:[#allocation3 + $0x22c] sm:$0xf] %v863
        %1138 = vst [vmem:[#allocation3 + $0x250] sm:$0xf] %v877
        %1139 = vst [vmem:[#allocation3 + $0x274] sm:$0xf] %v887
        %1140 = vst [vmem:[#allocation3 + $0x298] sm:$0xf] %v901
        %1141 = vst [vmem:[#allocation3 + $0x2bc] sm:$0xf] %v911
        %1142 = vst [vmem:[#allocation3 + $0x2e0] sm:$0xf] %v925
        %1143 = vst [vmem:[#allocation3 + $0x304] sm:$0xf] %v935
        %1144 = vst [vmem:[#allocation3 + $0x328] sm:$0xf] %v949
        %1145 = vst [vmem:[#allocation3 + $0x34c] sm:$0xf] %v959
        %1146 = vst [vmem:[#allocation3 + $0x370] sm:$0xf] %v973
        %1147 = vst [vmem:[#allocation3 + $0x394] sm:$0xf] %v983
        %1148 = vst [vmem:[#allocation3 + $0x3b8] sm:$0xf] %v997
        %1149 = vst [vmem:[#allocation3 + $0x3dc] sm:$0xf] %v1007
        %1150 = vst [vmem:[#allocation3 + $0x400] sm:$0xf] %v1021
        %1151 = vst [vmem:[#allocation3 + $0x424] sm:$0xf] %v1031
        %1152 = vst [vmem:[#allocation3 + $0x448] sm:$0xf] %v1109
        %1153 = vst [vmem:[#allocation3 + $0x46c] sm:$0xf] %v1119
        %v1155 = vshrl.u32 %v642, 16
        %v1157 = vrot.slane %v1155, 4
        %v1158 = vshll.u32 %v642, 16
        %v1160 = vrot.slane %v1158, 5
        %v1161 = vor.u32 %v1157, %v1160
        %v1162 = vrot.slane %v1161, 4
        %v1164 = vshll.u32 %v643, 16
        %v1166 = vrot.slane %v1164, 5
        %v1167 = vsel %vm647, %v1162, %v1166
        %v1168 = vshrl.u32 %v643, 16
        %v1170 = vrot.slane %v1168, 4
        %v1171 = vor.u32 %v1170, %v1166
        %v1172 = vrot.slane %v1171, 4
        %v1174 = vshll.u32 %v644, 16
        %v1176 = vrot.slane %v1174, 5
        %v1177 = vsel %vm647, %v1172, %v1176
        %1180 = vst [vmem:[#allocation3 + $0x1c] sm:$0xf] %v709
        %1181 = vst [vmem:[#allocation3 + $0x40] sm:$0xf] %v719
        %1182 = vst [vmem:[#allocation3 + $0x64] sm:$0xf] %v733
        %1183 = vst [vmem:[#allocation3 + $0x88] sm:$0xf] %v743
        %1184 = vst [vmem:[#allocation3 + $0xac] sm:$0xf] %v757
        %1185 = vst [vmem:[#allocation3 + $0xd0] sm:$0xf] %v767
        %1186 = vst [vmem:[#allocation3 + $0xf4] sm:$0xf] %v781
        %1187 = vst [vmem:[#allocation3 + $0x118] sm:$0xf] %v791
        %1188 = vst [vmem:[#allocation3 + $0x13c] sm:$0xf] %v805
        %1189 = vst [vmem:[#allocation3 + $0x160] sm:$0xf] %v815
        %1190 = vst [vmem:[#allocation3 + $0x184] sm:$0xf] %v829
        %1191 = vst [vmem:[#allocation3 + $0x1a8] sm:$0xf] %v839
        %1192 = vst [vmem:[#allocation3 + $0x1cc] sm:$0xf] %v853
        %1193 = vst [vmem:[#allocation3 + $0x1f0] sm:$0xf] %v863
        %1194 = vst [vmem:[#allocation3 + $0x214] sm:$0xf] %v877
        %1195 = vst [vmem:[#allocation3 + $0x238] sm:$0xf] %v887
        %1196 = vst [vmem:[#allocation3 + $0x25c] sm:$0xf] %v901
        %1197 = vst [vmem:[#allocation3 + $0x280] sm:$0xf] %v911
        %1198 = vst [vmem:[#allocation3 + $0x2a4] sm:$0xf] %v925
        %1199 = vst [vmem:[#allocation3 + $0x2c8] sm:$0xf] %v935
        %1200 = vst [vmem:[#allocation3 + $0x2ec] sm:$0xf] %v949
        %1201 = vst [vmem:[#allocation3 + $0x310] sm:$0xf] %v959
        %1202 = vst [vmem:[#allocation3 + $0x334] sm:$0xf] %v973
        %1203 = vst [vmem:[#allocation3 + $0x358] sm:$0xf] %v983
        %1204 = vst [vmem:[#allocation3 + $0x37c] sm:$0xf] %v997
        %1205 = vst [vmem:[#allocation3 + $0x3a0] sm:$0xf] %v1007
        %1206 = vst [vmem:[#allocation3 + $0x3c4] sm:$0xf] %v1021
        %1207 = vst [vmem:[#allocation3 + $0x3e8] sm:$0xf] %v1031
        %1208 = vst [vmem:[#allocation3 + $0x40c] sm:$0xf] %v1109
        %1209 = vst [vmem:[#allocation3 + $0x430] sm:$0xf] %v1119
        %1210 = vst [vmem:[#allocation3 + $0x454] sm:$0xf] %v1167
        %1211 = vst [vmem:[#allocation3 + $0x478] sm:$0xf] %v1177
        %v1212 = vld [vmem:[%s203] sm:$0xe]
        %v1213 = vld [vmem:[%s203 + $0x4] sm:$0xf]
        %v1214 = vld [vmem:[%s203 + $0x8] sm:$0x1]
        %v1215 = vld [vmem:[%s203 + $0xc] sm:$0xe]
        %v1216 = vld [vmem:[%s203 + $0x10] sm:$0xf]
        %v1217 = vld [vmem:[%s203 + $0x14] sm:$0x1]
        %v1218 = vld [vmem:[%s203 + $0x18] sm:$0xe]
        %v1219 = vld [vmem:[%s203 + $0x1c] sm:$0xf]
        %v1220 = vld [vmem:[%s203 + $0x20] sm:$0x1]
        %v1221 = vld [vmem:[%s203 + $0x24] sm:$0xe]
        %v1222 = vld [vmem:[%s203 + $0x28] sm:$0xf]
        %v1223 = vld [vmem:[%s203 + $0x2c] sm:$0x1]
        %v1224 = vld [vmem:[%s203 + $0x30] sm:$0xe]
        %v1225 = vld [vmem:[%s203 + $0x34] sm:$0xf]
        %v1226 = vld [vmem:[%s203 + $0x38] sm:$0x1]
        %v1227 = vld [vmem:[%s203 + $0x3c] sm:$0xe]
        %v1228 = vld [vmem:[%s203 + $0x40] sm:$0xf]
        %v1229 = vld [vmem:[%s203 + $0x44] sm:$0x1]
        %v1230 = vld [vmem:[%s203 + $0x48] sm:$0xe]
        %v1231 = vld [vmem:[%s203 + $0x4c] sm:$0xf]
        %v1232 = vld [vmem:[%s203 + $0x50] sm:$0x1]
        %v1233 = vld [vmem:[%s203 + $0x54] sm:$0xe]
        %v1234 = vld [vmem:[%s203 + $0x58] sm:$0xf]
        %v1235 = vld [vmem:[%s203 + $0x5c] sm:$0x1]
        %v1236 = vld [vmem:[%s203 + $0x60] sm:$0xe]
        %v1237 = vld [vmem:[%s203 + $0x64] sm:$0xf]
        %v1238 = vld [vmem:[%s203 + $0x68] sm:$0x1]
        %v1239 = vld [vmem:[%s203 + $0x6c] sm:$0xe]
        %v1240 = vld [vmem:[%s203 + $0x70] sm:$0xf]
        %v1241 = vld [vmem:[%s203 + $0x74] sm:$0x1]
        %v1242 = vld [vmem:[%s203 + $0x78] sm:$0xe]
        %v1243 = vld [vmem:[%s203 + $0x7c] sm:$0xf]
        %v1244 = vld [vmem:[%s203 + $0x80] sm:$0x1]
        %v1245 = vld [vmem:[%s203 + $0x84] sm:$0xe]
        %v1246 = vld [vmem:[%s203 + $0x88] sm:$0xf]
        %v1247 = vld [vmem:[%s203 + $0x8c] sm:$0x1]
        %v1248 = vld [vmem:[%s203 + $0x90] sm:$0xe]
        %v1249 = vld [vmem:[%s203 + $0x94] sm:$0xf]
        %v1250 = vld [vmem:[%s203 + $0x98] sm:$0x1]
        %v1251 = vld [vmem:[%s203 + $0x9c] sm:$0xe]
        %v1252 = vld [vmem:[%s203 + $0xa0] sm:$0xf]
        %v1253 = vld [vmem:[%s203 + $0xa4] sm:$0x1]
        %v1254 = vld [vmem:[%s203 + $0xa8] sm:$0xe]
        %v1255 = vld [vmem:[%s203 + $0xac] sm:$0xf]
        %v1256 = vld [vmem:[%s203 + $0xb0] sm:$0x1]
        %v1257 = vld [vmem:[%s203 + $0xb4] sm:$0xe]
        %v1258 = vld [vmem:[%s203 + $0xb8] sm:$0xf]
        %v1259 = vld [vmem:[%s203 + $0xbc] sm:$0x1]
        %v1260 = vld [vmem:[%s203 + $0xc0] sm:$0xe]
        %v1261 = vld [vmem:[%s203 + $0xc4] sm:$0xf]
        %v1262 = vld [vmem:[%s203 + $0xc8] sm:$0x1]
        %v1263 = vld [vmem:[%s203 + $0xcc] sm:$0xe]
        %v1264 = vld [vmem:[%s203 + $0xd0] sm:$0xf]
        %v1265 = vld [vmem:[%s203 + $0xd4] sm:$0x1]
        %vm1314 = vcmask 1042432
        %vm1315 = vcmask 1046532
        %vm1316 = vmor %vm1314, %vm1315
        %v1317 = vrot.slane %v1212, 5
        %v1318 = vrot.slane %v1317, 4
        %v1319 = vrot.slane %v1213, 5
        %v1320 = vsel %vm1316, %v1318, %v1319
        %v1321 = vrot.slane %v1319, 4
        %v1322 = vrot.slane %v1214, 5
        %v1323 = vsel %vm1316, %v1321, %v1322
        %v1324 = vrot.slane %v1215, 5
        %v1325 = vrot.slane %v1324, 4
        %v1326 = vrot.slane %v1216, 5
        %v1327 = vsel %vm1316, %v1325, %v1326
        %v1328 = vrot.slane %v1326, 4
        %v1329 = vrot.slane %v1217, 5
        %v1330 = vsel %vm1316, %v1328, %v1329
        %v1331 = vrot.slane %v1218, 5
        %v1332 = vrot.slane %v1331, 4
        %v1333 = vrot.slane %v1219, 5
        %v1334 = vsel %vm1316, %v1332, %v1333
        %v1335 = vrot.slane %v1333, 4
        %v1336 = vrot.slane %v1220, 5
        %v1337 = vsel %vm1316, %v1335, %v1336
        %v1338 = vrot.slane %v1221, 5
        %v1339 = vrot.slane %v1338, 4
        %v1340 = vrot.slane %v1222, 5
        %v1341 = vsel %vm1316, %v1339, %v1340
        %v1342 = vrot.slane %v1340, 4
        %v1343 = vrot.slane %v1223, 5
        %v1344 = vsel %vm1316, %v1342, %v1343
        %v1345 = vrot.slane %v1224, 5
        %v1346 = vrot.slane %v1345, 4
        %v1347 = vrot.slane %v1225, 5
        %v1348 = vsel %vm1316, %v1346, %v1347
        %v1349 = vrot.slane %v1347, 4
        %v1350 = vrot.slane %v1226, 5
        %v1351 = vsel %vm1316, %v1349, %v1350
        %v1352 = vrot.slane %v1227, 5
        %v1353 = vrot.slane %v1352, 4
        %v1354 = vrot.slane %v1228, 5
        %v1355 = vsel %vm1316, %v1353, %v1354
        %v1356 = vrot.slane %v1354, 4
        %v1357 = vrot.slane %v1229, 5
        %v1358 = vsel %vm1316, %v1356, %v1357
        %v1359 = vrot.slane %v1230, 5
        %v1360 = vrot.slane %v1359, 4
        %v1361 = vrot.slane %v1231, 5
        %v1362 = vsel %vm1316, %v1360, %v1361
        %v1363 = vrot.slane %v1361, 4
        %v1364 = vrot.slane %v1232, 5
        %v1365 = vsel %vm1316, %v1363, %v1364
        %v1366 = vrot.slane %v1233, 5
        %v1367 = vrot.slane %v1366, 4
        %v1368 = vrot.slane %v1234, 5
        %v1369 = vsel %vm1316, %v1367, %v1368
        %v1370 = vrot.slane %v1368, 4
        %v1371 = vrot.slane %v1235, 5
        %v1372 = vsel %vm1316, %v1370, %v1371
        %v1373 = vrot.slane %v1236, 5
        %v1374 = vrot.slane %v1373, 4
        %v1375 = vrot.slane %v1237, 5
        %v1376 = vsel %vm1316, %v1374, %v1375
        %v1377 = vrot.slane %v1375, 4
        %v1378 = vrot.slane %v1238, 5
        %v1379 = vsel %vm1316, %v1377, %v1378
        %v1380 = vrot.slane %v1239, 5
        %v1381 = vrot.slane %v1380, 4
        %v1382 = vrot.slane %v1240, 5
        %v1383 = vsel %vm1316, %v1381, %v1382
        %v1384 = vrot.slane %v1382, 4
        %v1385 = vrot.slane %v1241, 5
        %v1386 = vsel %vm1316, %v1384, %v1385
        %v1387 = vrot.slane %v1242, 5
        %v1388 = vrot.slane %v1387, 4
        %v1389 = vrot.slane %v1243, 5
        %v1390 = vsel %vm1316, %v1388, %v1389
        %v1391 = vrot.slane %v1389, 4
        %v1392 = vrot.slane %v1244, 5
        %v1393 = vsel %vm1316, %v1391, %v1392
        %v1394 = vrot.slane %v1245, 5
        %v1395 = vrot.slane %v1394, 4
        %v1396 = vrot.slane %v1246, 5
        %v1397 = vsel %vm1316, %v1395, %v1396
        %v1398 = vrot.slane %v1396, 4
        %v1399 = vrot.slane %v1247, 5
        %v1400 = vsel %vm1316, %v1398, %v1399
        %v1401 = vrot.slane %v1248, 5
        %v1402 = vrot.slane %v1401, 4
        %v1403 = vrot.slane %v1249, 5
        %v1404 = vsel %vm1316, %v1402, %v1403
        %v1405 = vrot.slane %v1403, 4
        %v1406 = vrot.slane %v1250, 5
        %v1407 = vsel %vm1316, %v1405, %v1406
        %v1408 = vrot.slane %v1251, 5
        %v1409 = vrot.slane %v1408, 4
        %v1410 = vrot.slane %v1252, 5
        %v1411 = vsel %vm1316, %v1409, %v1410
        %v1412 = vrot.slane %v1410, 4
        %v1413 = vrot.slane %v1253, 5
        %v1414 = vsel %vm1316, %v1412, %v1413
        %v1415 = vrot.slane %v1254, 5
        %v1416 = vrot.slane %v1415, 4
        %v1417 = vrot.slane %v1255, 5
        %v1418 = vsel %vm1316, %v1416, %v1417
        %v1419 = vrot.slane %v1417, 4
        %v1420 = vrot.slane %v1256, 5
        %v1421 = vsel %vm1316, %v1419, %v1420
        %v1422 = vrot.slane %v1257, 5
        %v1423 = vrot.slane %v1422, 4
        %v1424 = vrot.slane %v1258, 5
        %v1425 = vsel %vm1316, %v1423, %v1424
        %v1426 = vrot.slane %v1424, 4
        %v1427 = vrot.slane %v1259, 5
        %v1428 = vsel %vm1316, %v1426, %v1427
        %1461 = vst [vmem:[#allocation3 + $0x8] sm:$0xf] %v1320
        %1462 = vst [vmem:[#allocation3 + $0x2c] sm:$0xf] %v1323
        %1463 = vst [vmem:[#allocation3 + $0x50] sm:$0xf] %v1327
        %1464 = vst [vmem:[#allocation3 + $0x74] sm:$0xf] %v1330
        %1465 = vst [vmem:[#allocation3 + $0x98] sm:$0xf] %v1334
        %1466 = vst [vmem:[#allocation3 + $0xbc] sm:$0xf] %v1337
        %1467 = vst [vmem:[#allocation3 + $0xe0] sm:$0xf] %v1341
        %1468 = vst [vmem:[#allocation3 + $0x104] sm:$0xf] %v1344
        %1469 = vst [vmem:[#allocation3 + $0x128] sm:$0xf] %v1348
        %1470 = vst [vmem:[#allocation3 + $0x14c] sm:$0xf] %v1351
        %1471 = vst [vmem:[#allocation3 + $0x170] sm:$0xf] %v1355
        %1472 = vst [vmem:[#allocation3 + $0x194] sm:$0xf] %v1358
        %1473 = vst [vmem:[#allocation3 + $0x1b8] sm:$0xf] %v1362
        %1474 = vst [vmem:[#allocation3 + $0x1dc] sm:$0xf] %v1365
        %1475 = vst [vmem:[#allocation3 + $0x200] sm:$0xf] %v1369
        %1476 = vst [vmem:[#allocation3 + $0x224] sm:$0xf] %v1372
        %1477 = vst [vmem:[#allocation3 + $0x248] sm:$0xf] %v1376
        %1478 = vst [vmem:[#allocation3 + $0x26c] sm:$0xf] %v1379
        %1479 = vst [vmem:[#allocation3 + $0x290] sm:$0xf] %v1383
        %1480 = vst [vmem:[#allocation3 + $0x2b4] sm:$0xf] %v1386
        %1481 = vst [vmem:[#allocation3 + $0x2d8] sm:$0xf] %v1390
        %1482 = vst [vmem:[#allocation3 + $0x2fc] sm:$0xf] %v1393
        %1483 = vst [vmem:[#allocation3 + $0x320] sm:$0xf] %v1397
        %1484 = vst [vmem:[#allocation3 + $0x344] sm:$0xf] %v1400
        %1485 = vst [vmem:[#allocation3 + $0x368] sm:$0xf] %v1404
        %1486 = vst [vmem:[#allocation3 + $0x38c] sm:$0xf] %v1407
        %1487 = vst [vmem:[#allocation3 + $0x3b0] sm:$0xf] %v1411
        %1488 = vst [vmem:[#allocation3 + $0x3d4] sm:$0xf] %v1414
        %1489 = vst [vmem:[#allocation3 + $0x3f8] sm:$0xf] %v1418
        %1490 = vst [vmem:[#allocation3 + $0x41c] sm:$0xf] %v1421
        %1491 = vst [vmem:[#allocation3 + $0x440] sm:$0xf] %v1425
        %1492 = vst [vmem:[#allocation3 + $0x464] sm:$0xf] %v1428
        %v1496 = vrot.slane %v1260, 5
        %v1497 = vrot.slane %v1496, 4
        %v1498 = vrot.slane %v1261, 5
        %v1499 = vsel %vm1316, %v1497, %v1498
        %v1500 = vrot.slane %v1498, 4
        %v1501 = vrot.slane %v1262, 5
        %v1502 = vsel %vm1316, %v1500, %v1501
        %1505 = vst [vmem:[#allocation3 + $0x14] sm:$0xf] %v1327
        %1506 = vst [vmem:[#allocation3 + $0x38] sm:$0xf] %v1330
        %1507 = vst [vmem:[#allocation3 + $0x5c] sm:$0xf] %v1334
        %1508 = vst [vmem:[#allocation3 + $0x80] sm:$0xf] %v1337
        %1509 = vst [vmem:[#allocation3 + $0xa4] sm:$0xf] %v1341
        %1510 = vst [vmem:[#allocation3 + $0xc8] sm:$0xf] %v1344
        %1511 = vst [vmem:[#allocation3 + $0xec] sm:$0xf] %v1348
        %1512 = vst [vmem:[#allocation3 + $0x110] sm:$0xf] %v1351
        %1513 = vst [vmem:[#allocation3 + $0x134] sm:$0xf] %v1355
        %1514 = vst [vmem:[#allocation3 + $0x158] sm:$0xf] %v1358
        %1515 = vst [vmem:[#allocation3 + $0x17c] sm:$0xf] %v1362
        %1516 = vst [vmem:[#allocation3 + $0x1a0] sm:$0xf] %v1365
        %1517 = vst [vmem:[#allocation3 + $0x1c4] sm:$0xf] %v1369
        %1518 = vst [vmem:[#allocation3 + $0x1e8] sm:$0xf] %v1372
        %1519 = vst [vmem:[#allocation3 + $0x20c] sm:$0xf] %v1376
        %1520 = vst [vmem:[#allocation3 + $0x230] sm:$0xf] %v1379
        %1521 = vst [vmem:[#allocation3 + $0x254] sm:$0xf] %v1383
        %1522 = vst [vmem:[#allocation3 + $0x278] sm:$0xf] %v1386
        %1523 = vst [vmem:[#allocation3 + $0x29c] sm:$0xf] %v1390
        %1524 = vst [vmem:[#allocation3 + $0x2c0] sm:$0xf] %v1393
        %1525 = vst [vmem:[#allocation3 + $0x2e4] sm:$0xf] %v1397
        %1526 = vst [vmem:[#allocation3 + $0x308] sm:$0xf] %v1400
        %1527 = vst [vmem:[#allocation3 + $0x32c] sm:$0xf] %v1404
        %1528 = vst [vmem:[#allocation3 + $0x350] sm:$0xf] %v1407
        %1529 = vst [vmem:[#allocation3 + $0x374] sm:$0xf] %v1411
        %1530 = vst [vmem:[#allocation3 + $0x398] sm:$0xf] %v1414
        %1531 = vst [vmem:[#allocation3 + $0x3bc] sm:$0xf] %v1418
        %1532 = vst [vmem:[#allocation3 + $0x3e0] sm:$0xf] %v1421
        %1533 = vst [vmem:[#allocation3 + $0x404] sm:$0xf] %v1425
        %1534 = vst [vmem:[#allocation3 + $0x428] sm:$0xf] %v1428
        %1535 = vst [vmem:[#allocation3 + $0x44c] sm:$0xf] %v1499
        %1536 = vst [vmem:[#allocation3 + $0x470] sm:$0xf] %v1502
        %v1540 = vrot.slane %v1263, 5
        %v1541 = vrot.slane %v1540, 4
        %v1542 = vrot.slane %v1264, 5
        %v1543 = vsel %vm1316, %v1541, %v1542
        %v1544 = vrot.slane %v1542, 4
        %v1545 = vrot.slane %v1265, 5
        %v1546 = vsel %vm1316, %v1544, %v1545
        %1549 = vst [vmem:[#allocation3 + $0x20] sm:$0xf] %v1334
        %1550 = vst [vmem:[#allocation3 + $0x44] sm:$0xf] %v1337
        %1551 = vst [vmem:[#allocation3 + $0x68] sm:$0xf] %v1341
        %1552 = vst [vmem:[#allocation3 + $0x8c] sm:$0xf] %v1344
        %1553 = vst [vmem:[#allocation3 + $0xb0] sm:$0xf] %v1348
        %1554 = vst [vmem:[#allocation3 + $0xd4] sm:$0xf] %v1351
        %1555 = vst [vmem:[#allocation3 + $0xf8] sm:$0xf] %v1355
        %1556 = vst [vmem:[#allocation3 + $0x11c] sm:$0xf] %v1358
        %1557 = vst [vmem:[#allocation3 + $0x140] sm:$0xf] %v1362
        %1558 = vst [vmem:[#allocation3 + $0x164] sm:$0xf] %v1365
        %1559 = vst [vmem:[#allocation3 + $0x188] sm:$0xf] %v1369
        %1560 = vst [vmem:[#allocation3 + $0x1ac] sm:$0xf] %v1372
        %1561 = vst [vmem:[#allocation3 + $0x1d0] sm:$0xf] %v1376
        %1562 = vst [vmem:[#allocation3 + $0x1f4] sm:$0xf] %v1379
        %1563 = vst [vmem:[#allocation3 + $0x218] sm:$0xf] %v1383
        %1564 = vst [vmem:[#allocation3 + $0x23c] sm:$0xf] %v1386
        %1565 = vst [vmem:[#allocation3 + $0x260] sm:$0xf] %v1390
        %1566 = vst [vmem:[#allocation3 + $0x284] sm:$0xf] %v1393
        %1567 = vst [vmem:[#allocation3 + $0x2a8] sm:$0xf] %v1397
        %1568 = vst [vmem:[#allocation3 + $0x2cc] sm:$0xf] %v1400
        %1569 = vst [vmem:[#allocation3 + $0x2f0] sm:$0xf] %v1404
        %1570 = vst [vmem:[#allocation3 + $0x314] sm:$0xf] %v1407
        %1571 = vst [vmem:[#allocation3 + $0x338] sm:$0xf] %v1411
        %1572 = vst [vmem:[#allocation3 + $0x35c] sm:$0xf] %v1414
        %1573 = vst [vmem:[#allocation3 + $0x380] sm:$0xf] %v1418
        %1574 = vst [vmem:[#allocation3 + $0x3a4] sm:$0xf] %v1421
        %1575 = vst [vmem:[#allocation3 + $0x3c8] sm:$0xf] %v1425
        %1576 = vst [vmem:[#allocation3 + $0x3ec] sm:$0xf] %v1428
        %1577 = vst [vmem:[#allocation3 + $0x410] sm:$0xf] %v1499
        %1578 = vst [vmem:[#allocation3 + $0x434] sm:$0xf] %v1502
        %1579 = vst [vmem:[#allocation3 + $0x458] sm:$0xf] %v1543
        %1580 = vst [vmem:[#allocation3 + $0x47c] sm:$0xf] %v1546
      $region36: #{repblock_forward_nchw.1} parent=31 // pred_fallthru
        _
      %p1581 = scmp.gt.s32.totalorder %s19, 0
      // Predicated region
      $region37: #{repblock_forward_nchw.1} parent=31 // pred_check
        %p1582 = pneg %p1581
      $region38: #{repblock_forward_nchw.1} parent=31 // pred_check_branch
        %1584 = sbr.rel (%p1582) target = $region40
      $region39: #{repblock_forward_nchw.1} parent=31 // pred_region
        %s1585 = sadd.s32 %s19, 1
        %p1586 = scmp.lt.s32.totalorder %s1585, 0
        %s1587 = ssub.s32 0, %s1585
        %s1588 = scalar_select %p1586, %s1587, %s1585
        %s1589 = sand.u32 %s1588, 1
        %s1590 = ssub.s32 0, %s1589
        %s1591 = scalar_select %p1586, %s1590, %s1589
        %p1592 = scmp.ne.s32.totalorder %s1591, 0
        %p1593 = scmp.lt.s32.totalorder %s1591, 0
        %p1594 = pnand %p1593, %p1592
        %p1595 = pneg %p1594
        %s1596 = sadd.s32 %s1591, 2
        %s1597 = scalar_select %p1595, %s1596, %s1591
        %s1598 = smul.u32 %s1597, 54
        %s1599 = smul.addr %s1598, 4
        %s1600 = scalar_lea.vmem [#allocation2], %s1599
        %v1601 = vld [vmem:[%s1600] sm:$0xf]
        %v1602 = vld [vmem:[%s1600 + $0x4] sm:$0xf]
        %v1603 = vld [vmem:[%s1600 + $0xc] sm:$0xf]
        %v1604 = vld [vmem:[%s1600 + $0x10] sm:$0xf]
        %v1605 = vld [vmem:[%s1600 + $0x18] sm:$0xf]
        %v1606 = vld [vmem:[%s1600 + $0x1c] sm:$0xf]
        %v1607 = vld [vmem:[%s1600 + $0x24] sm:$0xf]
        %v1608 = vld [vmem:[%s1600 + $0x28] sm:$0xf]
        %v1609 = vld [vmem:[%s1600 + $0x30] sm:$0xf]
        %v1610 = vld [vmem:[%s1600 + $0x34] sm:$0xf]
        %v1611 = vld [vmem:[%s1600 + $0x3c] sm:$0xf]
        %v1612 = vld [vmem:[%s1600 + $0x40] sm:$0xf]
        %v1613 = vld [vmem:[%s1600 + $0x48] sm:$0xf]
        %v1614 = vld [vmem:[%s1600 + $0x4c] sm:$0xf]
        %v1615 = vld [vmem:[%s1600 + $0x54] sm:$0xf]
        %v1616 = vld [vmem:[%s1600 + $0x58] sm:$0xf]
        %v1617 = vld [vmem:[%s1600 + $0x60] sm:$0xf]
        %v1618 = vld [vmem:[%s1600 + $0x64] sm:$0xf]
        %v1619 = vld [vmem:[%s1600 + $0x6c] sm:$0xf]
        %v1620 = vld [vmem:[%s1600 + $0x70] sm:$0xf]
        %v1621 = vld [vmem:[%s1600 + $0x78] sm:$0xf]
        %v1622 = vld [vmem:[%s1600 + $0x7c] sm:$0xf]
        %v1623 = vld [vmem:[%s1600 + $0x84] sm:$0xf]
        %v1624 = vld [vmem:[%s1600 + $0x88] sm:$0xf]
        %v1625 = vld [vmem:[%s1600 + $0x90] sm:$0xf]
        %v1626 = vld [vmem:[%s1600 + $0x94] sm:$0xf]
        %v1627 = vld [vmem:[%s1600 + $0x9c] sm:$0xf]
        %v1628 = vld [vmem:[%s1600 + $0xa0] sm:$0xf]
        %v1629 = vld [vmem:[%s1600 + $0xa8] sm:$0xf]
        %v1630 = vld [vmem:[%s1600 + $0xac] sm:$0xf]
        %v1631 = vld [vmem:[%s1600 + $0xb4] sm:$0xf]
        %v1632 = vld [vmem:[%s1600 + $0xb8] sm:$0xf]
        %v1633 = vld [vmem:[%s1600 + $0xc0] sm:$0xf]
        %v1634 = vld [vmem:[%s1600 + $0xc4] sm:$0xf]
        %v1635 = vld [vmem:[%s1600 + $0xcc] sm:$0xf]
        %v1636 = vld [vmem:[%s1600 + $0xd0] sm:$0xf]
        %1637 = vst [vmem:[#allocation3] sm:$0xf] %v1601
        %1638 = vst [vmem:[#allocation3 + $0x24] sm:$0xf] %v1602
        %1639 = vst [vmem:[#allocation3 + $0x48] sm:$0xf] %v1603
        %1640 = vst [vmem:[#allocation3 + $0x6c] sm:$0xf] %v1604
        %1641 = vst [vmem:[#allocation3 + $0x90] sm:$0xf] %v1605
        %1642 = vst [vmem:[#allocation3 + $0xb4] sm:$0xf] %v1606
        %1643 = vst [vmem:[#allocation3 + $0xd8] sm:$0xf] %v1607
        %1644 = vst [vmem:[#allocation3 + $0xfc] sm:$0xf] %v1608
        %1645 = vst [vmem:[#allocation3 + $0x120] sm:$0xf] %v1609
        %1646 = vst [vmem:[#allocation3 + $0x144] sm:$0xf] %v1610
        %1647 = vst [vmem:[#allocation3 + $0x168] sm:$0xf] %v1611
        %1648 = vst [vmem:[#allocation3 + $0x18c] sm:$0xf] %v1612
        %1649 = vst [vmem:[#allocation3 + $0x1b0] sm:$0xf] %v1613
        %1650 = vst [vmem:[#allocation3 + $0x1d4] sm:$0xf] %v1614
        %1651 = vst [vmem:[#allocation3 + $0x1f8] sm:$0xf] %v1615
        %1652 = vst [vmem:[#allocation3 + $0x21c] sm:$0xf] %v1616
        %1653 = vst [vmem:[#allocation3 + $0x240] sm:$0xf] %v1617
        %1654 = vst [vmem:[#allocation3 + $0x264] sm:$0xf] %v1618
        %1655 = vst [vmem:[#allocation3 + $0x288] sm:$0xf] %v1619
        %1656 = vst [vmem:[#allocation3 + $0x2ac] sm:$0xf] %v1620
        %1657 = vst [vmem:[#allocation3 + $0x2d0] sm:$0xf] %v1621
        %1658 = vst [vmem:[#allocation3 + $0x2f4] sm:$0xf] %v1622
        %1659 = vst [vmem:[#allocation3 + $0x318] sm:$0xf] %v1623
        %1660 = vst [vmem:[#allocation3 + $0x33c] sm:$0xf] %v1624
        %1661 = vst [vmem:[#allocation3 + $0x360] sm:$0xf] %v1625
        %1662 = vst [vmem:[#allocation3 + $0x384] sm:$0xf] %v1626
        %1663 = vst [vmem:[#allocation3 + $0x3a8] sm:$0xf] %v1627
        %1664 = vst [vmem:[#allocation3 + $0x3cc] sm:$0xf] %v1628
        %1665 = vst [vmem:[#allocation3 + $0x3f0] sm:$0xf] %v1629
        %1666 = vst [vmem:[#allocation3 + $0x414] sm:$0xf] %v1630
        %1667 = vst [vmem:[#allocation3 + $0x438] sm:$0xf] %v1631
        %1668 = vst [vmem:[#allocation3 + $0x45c] sm:$0xf] %v1632
        %1669 = vst [vmem:[#allocation3 + $0xc] sm:$0xf] %v1603
        %1670 = vst [vmem:[#allocation3 + $0x30] sm:$0xf] %v1604
        %1671 = vst [vmem:[#allocation3 + $0x54] sm:$0xf] %v1605
        %1672 = vst [vmem:[#allocation3 + $0x78] sm:$0xf] %v1606
        %1673 = vst [vmem:[#allocation3 + $0x9c] sm:$0xf] %v1607
        %1674 = vst [vmem:[#allocation3 + $0xc0] sm:$0xf] %v1608
        %1675 = vst [vmem:[#allocation3 + $0xe4] sm:$0xf] %v1609
        %1676 = vst [vmem:[#allocation3 + $0x108] sm:$0xf] %v1610
        %1677 = vst [vmem:[#allocation3 + $0x12c] sm:$0xf] %v1611
        %1678 = vst [vmem:[#allocation3 + $0x150] sm:$0xf] %v1612
        %1679 = vst [vmem:[#allocation3 + $0x174] sm:$0xf] %v1613
        %1680 = vst [vmem:[#allocation3 + $0x198] sm:$0xf] %v1614
        %1681 = vst [vmem:[#allocation3 + $0x1bc] sm:$0xf] %v1615
        %1682 = vst [vmem:[#allocation3 + $0x1e0] sm:$0xf] %v1616
        %1683 = vst [vmem:[#allocation3 + $0x204] sm:$0xf] %v1617
        %1684 = vst [vmem:[#allocation3 + $0x228] sm:$0xf] %v1618
        %1685 = vst [vmem:[#allocation3 + $0x24c] sm:$0xf] %v1619
        %1686 = vst [vmem:[#allocation3 + $0x270] sm:$0xf] %v1620
        %1687 = vst [vmem:[#allocation3 + $0x294] sm:$0xf] %v1621
        %1688 = vst [vmem:[#allocation3 + $0x2b8] sm:$0xf] %v1622
        %1689 = vst [vmem:[#allocation3 + $0x2dc] sm:$0xf] %v1623
        %1690 = vst [vmem:[#allocation3 + $0x300] sm:$0xf] %v1624
        %1691 = vst [vmem:[#allocation3 + $0x324] sm:$0xf] %v1625
        %1692 = vst [vmem:[#allocation3 + $0x348] sm:$0xf] %v1626
        %1693 = vst [vmem:[#allocation3 + $0x36c] sm:$0xf] %v1627
        %1694 = vst [vmem:[#allocation3 + $0x390] sm:$0xf] %v1628
        %1695 = vst [vmem:[#allocation3 + $0x3b4] sm:$0xf] %v1629
        %1696 = vst [vmem:[#allocation3 + $0x3d8] sm:$0xf] %v1630
        %1697 = vst [vmem:[#allocation3 + $0x3fc] sm:$0xf] %v1631
        %1698 = vst [vmem:[#allocation3 + $0x420] sm:$0xf] %v1632
        %1699 = vst [vmem:[#allocation3 + $0x444] sm:$0xf] %v1633
        %1700 = vst [vmem:[#allocation3 + $0x468] sm:$0xf] %v1634
        %1701 = vst [vmem:[#allocation3 + $0x18] sm:$0xf] %v1605
        %1702 = vst [vmem:[#allocation3 + $0x3c] sm:$0xf] %v1606
        %1703 = vst [vmem:[#allocation3 + $0x60] sm:$0xf] %v1607
        %1704 = vst [vmem:[#allocation3 + $0x84] sm:$0xf] %v1608
        %1705 = vst [vmem:[#allocation3 + $0xa8] sm:$0xf] %v1609
        %1706 = vst [vmem:[#allocation3 + $0xcc] sm:$0xf] %v1610
        %1707 = vst [vmem:[#allocation3 + $0xf0] sm:$0xf] %v1611
        %1708 = vst [vmem:[#allocation3 + $0x114] sm:$0xf] %v1612
        %1709 = vst [vmem:[#allocation3 + $0x138] sm:$0xf] %v1613
        %1710 = vst [vmem:[#allocation3 + $0x15c] sm:$0xf] %v1614
        %1711 = vst [vmem:[#allocation3 + $0x180] sm:$0xf] %v1615
        %1712 = vst [vmem:[#allocation3 + $0x1a4] sm:$0xf] %v1616
        %1713 = vst [vmem:[#allocation3 + $0x1c8] sm:$0xf] %v1617
        %1714 = vst [vmem:[#allocation3 + $0x1ec] sm:$0xf] %v1618
        %1715 = vst [vmem:[#allocation3 + $0x210] sm:$0xf] %v1619
        %1716 = vst [vmem:[#allocation3 + $0x234] sm:$0xf] %v1620
        %1717 = vst [vmem:[#allocation3 + $0x258] sm:$0xf] %v1621
        %1718 = vst [vmem:[#allocation3 + $0x27c] sm:$0xf] %v1622
        %1719 = vst [vmem:[#allocation3 + $0x2a0] sm:$0xf] %v1623
        %1720 = vst [vmem:[#allocation3 + $0x2c4] sm:$0xf] %v1624
        %1721 = vst [vmem:[#allocation3 + $0x2e8] sm:$0xf] %v1625
        %1722 = vst [vmem:[#allocation3 + $0x30c] sm:$0xf] %v1626
        %1723 = vst [vmem:[#allocation3 + $0x330] sm:$0xf] %v1627
        %1724 = vst [vmem:[#allocation3 + $0x354] sm:$0xf] %v1628
        %1725 = vst [vmem:[#allocation3 + $0x378] sm:$0xf] %v1629
        %1726 = vst [vmem:[#allocation3 + $0x39c] sm:$0xf] %v1630
        %1727 = vst [vmem:[#allocation3 + $0x3c0] sm:$0xf] %v1631
        %1728 = vst [vmem:[#allocation3 + $0x3e4] sm:$0xf] %v1632
        %1729 = vst [vmem:[#allocation3 + $0x408] sm:$0xf] %v1633
        %1730 = vst [vmem:[#allocation3 + $0x42c] sm:$0xf] %v1634
        %1731 = vst [vmem:[#allocation3 + $0x450] sm:$0xf] %v1635
        %1732 = vst [vmem:[#allocation3 + $0x474] sm:$0xf] %v1636
        %v1733 = vld [vmem:[%s1600] sm:$0xf]
        %v1734 = vld [vmem:[%s1600 + $0x4] sm:$0xf]
        %v1735 = vld [vmem:[%s1600 + $0x8] sm:$0x1]
        %v1736 = vld [vmem:[%s1600 + $0xc] sm:$0xf]
        %v1737 = vld [vmem:[%s1600 + $0x10] sm:$0xf]
        %v1738 = vld [vmem:[%s1600 + $0x14] sm:$0x1]
        %v1739 = vld [vmem:[%s1600 + $0x18] sm:$0xf]
        %v1740 = vld [vmem:[%s1600 + $0x1c] sm:$0xf]
        %v1741 = vld [vmem:[%s1600 + $0x20] sm:$0x1]
        %v1742 = vld [vmem:[%s1600 + $0x24] sm:$0xf]
        %v1743 = vld [vmem:[%s1600 + $0x28] sm:$0xf]
        %v1744 = vld [vmem:[%s1600 + $0x2c] sm:$0x1]
        %v1745 = vld [vmem:[%s1600 + $0x30] sm:$0xf]
        %v1746 = vld [vmem:[%s1600 + $0x34] sm:$0xf]
        %v1747 = vld [vmem:[%s1600 + $0x38] sm:$0x1]
        %v1748 = vld [vmem:[%s1600 + $0x3c] sm:$0xf]
        %v1749 = vld [vmem:[%s1600 + $0x40] sm:$0xf]
        %v1750 = vld [vmem:[%s1600 + $0x44] sm:$0x1]
        %v1751 = vld [vmem:[%s1600 + $0x48] sm:$0xf]
        %v1752 = vld [vmem:[%s1600 + $0x4c] sm:$0xf]
        %v1753 = vld [vmem:[%s1600 + $0x50] sm:$0x1]
        %v1754 = vld [vmem:[%s1600 + $0x54] sm:$0xf]
        %v1755 = vld [vmem:[%s1600 + $0x58] sm:$0xf]
        %v1756 = vld [vmem:[%s1600 + $0x5c] sm:$0x1]
        %v1757 = vld [vmem:[%s1600 + $0x60] sm:$0xf]
        %v1758 = vld [vmem:[%s1600 + $0x64] sm:$0xf]
        %v1759 = vld [vmem:[%s1600 + $0x68] sm:$0x1]
        %v1760 = vld [vmem:[%s1600 + $0x6c] sm:$0xf]
        %v1761 = vld [vmem:[%s1600 + $0x70] sm:$0xf]
        %v1762 = vld [vmem:[%s1600 + $0x74] sm:$0x1]
        %v1763 = vld [vmem:[%s1600 + $0x78] sm:$0xf]
        %v1764 = vld [vmem:[%s1600 + $0x7c] sm:$0xf]
        %v1765 = vld [vmem:[%s1600 + $0x80] sm:$0x1]
        %v1766 = vld [vmem:[%s1600 + $0x84] sm:$0xf]
        %v1767 = vld [vmem:[%s1600 + $0x88] sm:$0xf]
        %v1768 = vld [vmem:[%s1600 + $0x8c] sm:$0x1]
        %v1769 = vld [vmem:[%s1600 + $0x90] sm:$0xf]
        %v1770 = vld [vmem:[%s1600 + $0x94] sm:$0xf]
        %v1771 = vld [vmem:[%s1600 + $0x98] sm:$0x1]
        %v1772 = vld [vmem:[%s1600 + $0x9c] sm:$0xf]
        %v1773 = vld [vmem:[%s1600 + $0xa0] sm:$0xf]
        %v1774 = vld [vmem:[%s1600 + $0xa4] sm:$0x1]
        %v1775 = vld [vmem:[%s1600 + $0xa8] sm:$0xf]
        %v1776 = vld [vmem:[%s1600 + $0xac] sm:$0xf]
        %v1777 = vld [vmem:[%s1600 + $0xb0] sm:$0x1]
        %v1778 = vld [vmem:[%s1600 + $0xb4] sm:$0xf]
        %v1779 = vld [vmem:[%s1600 + $0xb8] sm:$0xf]
        %v1780 = vld [vmem:[%s1600 + $0xbc] sm:$0x1]
        %v1781 = vld [vmem:[%s1600 + $0xc0] sm:$0xf]
        %v1782 = vld [vmem:[%s1600 + $0xc4] sm:$0xf]
        %v1783 = vld [vmem:[%s1600 + $0xc8] sm:$0x1]
        %v1784 = vld [vmem:[%s1600 + $0xcc] sm:$0xf]
        %v1785 = vld [vmem:[%s1600 + $0xd0] sm:$0xf]
        %v1786 = vld [vmem:[%s1600 + $0xd4] sm:$0x1]
        %vm1787 = vsmask.f32 3328
        %vm1788 = vsmask.f32 7440
        %vm1789 = vmor %vm1787, %vm1788
        %v1791 = vshrl.u32 %v1733, 16
        %v1793 = vrot.slane %v1791, 4
        %v1794 = vshll.u32 %v1733, 16
        %v1796 = vrot.slane %v1794, 5
        %v1797 = vor.u32 %v1793, %v1796
        %v1798 = vrot.slane %v1797, 4
        %v1800 = vshll.u32 %v1734, 16
        %v1802 = vrot.slane %v1800, 5
        %v1803 = vsel %vm1789, %v1798, %v1802
        %v1804 = vshrl.u32 %v1734, 16
        %v1806 = vrot.slane %v1804, 4
        %v1807 = vor.u32 %v1806, %v1802
        %v1808 = vrot.slane %v1807, 4
        %v1810 = vshll.u32 %v1735, 16
        %v1812 = vrot.slane %v1810, 5
        %v1813 = vsel %vm1789, %v1808, %v1812
        %v1815 = vshrl.u32 %v1736, 16
        %v1817 = vrot.slane %v1815, 4
        %v1818 = vshll.u32 %v1736, 16
        %v1820 = vrot.slane %v1818, 5
        %v1821 = vor.u32 %v1817, %v1820
        %v1822 = vrot.slane %v1821, 4
        %v1824 = vshll.u32 %v1737, 16
        %v1826 = vrot.slane %v1824, 5
        %v1827 = vsel %vm1789, %v1822, %v1826
        %v1828 = vshrl.u32 %v1737, 16
        %v1830 = vrot.slane %v1828, 4
        %v1831 = vor.u32 %v1830, %v1826
        %v1832 = vrot.slane %v1831, 4
        %v1834 = vshll.u32 %v1738, 16
        %v1836 = vrot.slane %v1834, 5
        %v1837 = vsel %vm1789, %v1832, %v1836
        %v1839 = vshrl.u32 %v1739, 16
        %v1841 = vrot.slane %v1839, 4
        %v1842 = vshll.u32 %v1739, 16
        %v1844 = vrot.slane %v1842, 5
        %v1845 = vor.u32 %v1841, %v1844
        %v1846 = vrot.slane %v1845, 4
        %v1848 = vshll.u32 %v1740, 16
        %v1850 = vrot.slane %v1848, 5
        %v1851 = vsel %vm1789, %v1846, %v1850
        %v1852 = vshrl.u32 %v1740, 16
        %v1854 = vrot.slane %v1852, 4
        %v1855 = vor.u32 %v1854, %v1850
        %v1856 = vrot.slane %v1855, 4
        %v1858 = vshll.u32 %v1741, 16
        %v1860 = vrot.slane %v1858, 5
        %v1861 = vsel %vm1789, %v1856, %v1860
        %v1863 = vshrl.u32 %v1742, 16
        %v1865 = vrot.slane %v1863, 4
        %v1866 = vshll.u32 %v1742, 16
        %v1868 = vrot.slane %v1866, 5
        %v1869 = vor.u32 %v1865, %v1868
        %v1870 = vrot.slane %v1869, 4
        %v1872 = vshll.u32 %v1743, 16
        %v1874 = vrot.slane %v1872, 5
        %v1875 = vsel %vm1789, %v1870, %v1874
        %v1876 = vshrl.u32 %v1743, 16
        %v1878 = vrot.slane %v1876, 4
        %v1879 = vor.u32 %v1878, %v1874
        %v1880 = vrot.slane %v1879, 4
        %v1882 = vshll.u32 %v1744, 16
        %v1884 = vrot.slane %v1882, 5
        %v1885 = vsel %vm1789, %v1880, %v1884
        %v1887 = vshrl.u32 %v1745, 16
        %v1889 = vrot.slane %v1887, 4
        %v1890 = vshll.u32 %v1745, 16
        %v1892 = vrot.slane %v1890, 5
        %v1893 = vor.u32 %v1889, %v1892
        %v1894 = vrot.slane %v1893, 4
        %v1896 = vshll.u32 %v1746, 16
        %v1898 = vrot.slane %v1896, 5
        %v1899 = vsel %vm1789, %v1894, %v1898
        %v1900 = vshrl.u32 %v1746, 16
        %v1902 = vrot.slane %v1900, 4
        %v1903 = vor.u32 %v1902, %v1898
        %v1904 = vrot.slane %v1903, 4
        %v1906 = vshll.u32 %v1747, 16
        %v1908 = vrot.slane %v1906, 5
        %v1909 = vsel %vm1789, %v1904, %v1908
        %v1911 = vshrl.u32 %v1748, 16
        %v1913 = vrot.slane %v1911, 4
        %v1914 = vshll.u32 %v1748, 16
        %v1916 = vrot.slane %v1914, 5
        %v1917 = vor.u32 %v1913, %v1916
        %v1918 = vrot.slane %v1917, 4
        %v1920 = vshll.u32 %v1749, 16
        %v1922 = vrot.slane %v1920, 5
        %v1923 = vsel %vm1789, %v1918, %v1922
        %v1924 = vshrl.u32 %v1749, 16
        %v1926 = vrot.slane %v1924, 4
        %v1927 = vor.u32 %v1926, %v1922
        %v1928 = vrot.slane %v1927, 4
        %v1930 = vshll.u32 %v1750, 16
        %v1932 = vrot.slane %v1930, 5
        %v1933 = vsel %vm1789, %v1928, %v1932
        %v1935 = vshrl.u32 %v1751, 16
        %v1937 = vrot.slane %v1935, 4
        %v1938 = vshll.u32 %v1751, 16
        %v1940 = vrot.slane %v1938, 5
        %v1941 = vor.u32 %v1937, %v1940
        %v1942 = vrot.slane %v1941, 4
        %v1944 = vshll.u32 %v1752, 16
        %v1946 = vrot.slane %v1944, 5
        %v1947 = vsel %vm1789, %v1942, %v1946
        %v1948 = vshrl.u32 %v1752, 16
        %v1950 = vrot.slane %v1948, 4
        %v1951 = vor.u32 %v1950, %v1946
        %v1952 = vrot.slane %v1951, 4
        %v1954 = vshll.u32 %v1753, 16
        %v1956 = vrot.slane %v1954, 5
        %v1957 = vsel %vm1789, %v1952, %v1956
        %v1959 = vshrl.u32 %v1754, 16
        %v1961 = vrot.slane %v1959, 4
        %v1962 = vshll.u32 %v1754, 16
        %v1964 = vrot.slane %v1962, 5
        %v1965 = vor.u32 %v1961, %v1964
        %v1966 = vrot.slane %v1965, 4
        %v1968 = vshll.u32 %v1755, 16
        %v1970 = vrot.slane %v1968, 5
        %v1971 = vsel %vm1789, %v1966, %v1970
        %v1972 = vshrl.u32 %v1755, 16
        %v1974 = vrot.slane %v1972, 4
        %v1975 = vor.u32 %v1974, %v1970
        %v1976 = vrot.slane %v1975, 4
        %v1978 = vshll.u32 %v1756, 16
        %v1980 = vrot.slane %v1978, 5
        %v1981 = vsel %vm1789, %v1976, %v1980
        %v1983 = vshrl.u32 %v1757, 16
        %v1985 = vrot.slane %v1983, 4
        %v1986 = vshll.u32 %v1757, 16
        %v1988 = vrot.slane %v1986, 5
        %v1989 = vor.u32 %v1985, %v1988
        %v1990 = vrot.slane %v1989, 4
        %v1992 = vshll.u32 %v1758, 16
        %v1994 = vrot.slane %v1992, 5
        %v1995 = vsel %vm1789, %v1990, %v1994
        %v1996 = vshrl.u32 %v1758, 16
        %v1998 = vrot.slane %v1996, 4
        %v1999 = vor.u32 %v1998, %v1994
        %v2000 = vrot.slane %v1999, 4
        %v2002 = vshll.u32 %v1759, 16
        %v2004 = vrot.slane %v2002, 5
        %v2005 = vsel %vm1789, %v2000, %v2004
        %v2007 = vshrl.u32 %v1760, 16
        %v2009 = vrot.slane %v2007, 4
        %v2010 = vshll.u32 %v1760, 16
        %v2012 = vrot.slane %v2010, 5
        %v2013 = vor.u32 %v2009, %v2012
        %v2014 = vrot.slane %v2013, 4
        %v2016 = vshll.u32 %v1761, 16
        %v2018 = vrot.slane %v2016, 5
        %v2019 = vsel %vm1789, %v2014, %v2018
        %v2020 = vshrl.u32 %v1761, 16
        %v2022 = vrot.slane %v2020, 4
        %v2023 = vor.u32 %v2022, %v2018
        %v2024 = vrot.slane %v2023, 4
        %v2026 = vshll.u32 %v1762, 16
        %v2028 = vrot.slane %v2026, 5
        %v2029 = vsel %vm1789, %v2024, %v2028
        %v2031 = vshrl.u32 %v1763, 16
        %v2033 = vrot.slane %v2031, 4
        %v2034 = vshll.u32 %v1763, 16
        %v2036 = vrot.slane %v2034, 5
        %v2037 = vor.u32 %v2033, %v2036
        %v2038 = vrot.slane %v2037, 4
        %v2040 = vshll.u32 %v1764, 16
        %v2042 = vrot.slane %v2040, 5
        %v2043 = vsel %vm1789, %v2038, %v2042
        %v2044 = vshrl.u32 %v1764, 16
        %v2046 = vrot.slane %v2044, 4
        %v2047 = vor.u32 %v2046, %v2042
        %v2048 = vrot.slane %v2047, 4
        %v2050 = vshll.u32 %v1765, 16
        %v2052 = vrot.slane %v2050, 5
        %v2053 = vsel %vm1789, %v2048, %v2052
        %v2055 = vshrl.u32 %v1766, 16
        %v2057 = vrot.slane %v2055, 4
        %v2058 = vshll.u32 %v1766, 16
        %v2060 = vrot.slane %v2058, 5
        %v2061 = vor.u32 %v2057, %v2060
        %v2062 = vrot.slane %v2061, 4
        %v2064 = vshll.u32 %v1767, 16
        %v2066 = vrot.slane %v2064, 5
        %v2067 = vsel %vm1789, %v2062, %v2066
        %v2068 = vshrl.u32 %v1767, 16
        %v2070 = vrot.slane %v2068, 4
        %v2071 = vor.u32 %v2070, %v2066
        %v2072 = vrot.slane %v2071, 4
        %v2074 = vshll.u32 %v1768, 16
        %v2076 = vrot.slane %v2074, 5
        %v2077 = vsel %vm1789, %v2072, %v2076
        %v2079 = vshrl.u32 %v1769, 16
        %v2081 = vrot.slane %v2079, 4
        %v2082 = vshll.u32 %v1769, 16
        %v2084 = vrot.slane %v2082, 5
        %v2085 = vor.u32 %v2081, %v2084
        %v2086 = vrot.slane %v2085, 4
        %v2088 = vshll.u32 %v1770, 16
        %v2090 = vrot.slane %v2088, 5
        %v2091 = vsel %vm1789, %v2086, %v2090
        %v2092 = vshrl.u32 %v1770, 16
        %v2094 = vrot.slane %v2092, 4
        %v2095 = vor.u32 %v2094, %v2090
        %v2096 = vrot.slane %v2095, 4
        %v2098 = vshll.u32 %v1771, 16
        %v2100 = vrot.slane %v2098, 5
        %v2101 = vsel %vm1789, %v2096, %v2100
        %v2103 = vshrl.u32 %v1772, 16
        %v2105 = vrot.slane %v2103, 4
        %v2106 = vshll.u32 %v1772, 16
        %v2108 = vrot.slane %v2106, 5
        %v2109 = vor.u32 %v2105, %v2108
        %v2110 = vrot.slane %v2109, 4
        %v2112 = vshll.u32 %v1773, 16
        %v2114 = vrot.slane %v2112, 5
        %v2115 = vsel %vm1789, %v2110, %v2114
        %v2116 = vshrl.u32 %v1773, 16
        %v2118 = vrot.slane %v2116, 4
        %v2119 = vor.u32 %v2118, %v2114
        %v2120 = vrot.slane %v2119, 4
        %v2122 = vshll.u32 %v1774, 16
        %v2124 = vrot.slane %v2122, 5
        %v2125 = vsel %vm1789, %v2120, %v2124
        %v2127 = vshrl.u32 %v1775, 16
        %v2129 = vrot.slane %v2127, 4
        %v2130 = vshll.u32 %v1775, 16
        %v2132 = vrot.slane %v2130, 5
        %v2133 = vor.u32 %v2129, %v2132
        %v2134 = vrot.slane %v2133, 4
        %v2136 = vshll.u32 %v1776, 16
        %v2138 = vrot.slane %v2136, 5
        %v2139 = vsel %vm1789, %v2134, %v2138
        %v2140 = vshrl.u32 %v1776, 16
        %v2142 = vrot.slane %v2140, 4
        %v2143 = vor.u32 %v2142, %v2138
        %v2144 = vrot.slane %v2143, 4
        %v2146 = vshll.u32 %v1777, 16
        %v2148 = vrot.slane %v2146, 5
        %v2149 = vsel %vm1789, %v2144, %v2148
        %v2151 = vshrl.u32 %v1778, 16
        %v2153 = vrot.slane %v2151, 4
        %v2154 = vshll.u32 %v1778, 16
        %v2156 = vrot.slane %v2154, 5
        %v2157 = vor.u32 %v2153, %v2156
        %v2158 = vrot.slane %v2157, 4
        %v2160 = vshll.u32 %v1779, 16
        %v2162 = vrot.slane %v2160, 5
        %v2163 = vsel %vm1789, %v2158, %v2162
        %v2164 = vshrl.u32 %v1779, 16
        %v2166 = vrot.slane %v2164, 4
        %v2167 = vor.u32 %v2166, %v2162
        %v2168 = vrot.slane %v2167, 4
        %v2170 = vshll.u32 %v1780, 16
        %v2172 = vrot.slane %v2170, 5
        %v2173 = vsel %vm1789, %v2168, %v2172
        %2206 = vst [vmem:[#allocation3 + $0x4] sm:$0xf] %v1803
        %2207 = vst [vmem:[#allocation3 + $0x28] sm:$0xf] %v1813
        %2208 = vst [vmem:[#allocation3 + $0x4c] sm:$0xf] %v1827
        %2209 = vst [vmem:[#allocation3 + $0x70] sm:$0xf] %v1837
        %2210 = vst [vmem:[#allocation3 + $0x94] sm:$0xf] %v1851
        %2211 = vst [vmem:[#allocation3 + $0xb8] sm:$0xf] %v1861
        %2212 = vst [vmem:[#allocation3 + $0xdc] sm:$0xf] %v1875
        %2213 = vst [vmem:[#allocation3 + $0x100] sm:$0xf] %v1885
        %2214 = vst [vmem:[#allocation3 + $0x124] sm:$0xf] %v1899
        %2215 = vst [vmem:[#allocation3 + $0x148] sm:$0xf] %v1909
        %2216 = vst [vmem:[#allocation3 + $0x16c] sm:$0xf] %v1923
        %2217 = vst [vmem:[#allocation3 + $0x190] sm:$0xf] %v1933
        %2218 = vst [vmem:[#allocation3 + $0x1b4] sm:$0xf] %v1947
        %2219 = vst [vmem:[#allocation3 + $0x1d8] sm:$0xf] %v1957
        %2220 = vst [vmem:[#allocation3 + $0x1fc] sm:$0xf] %v1971
        %2221 = vst [vmem:[#allocation3 + $0x220] sm:$0xf] %v1981
        %2222 = vst [vmem:[#allocation3 + $0x244] sm:$0xf] %v1995
        %2223 = vst [vmem:[#allocation3 + $0x268] sm:$0xf] %v2005
        %2224 = vst [vmem:[#allocation3 + $0x28c] sm:$0xf] %v2019
        %2225 = vst [vmem:[#allocation3 + $0x2b0] sm:$0xf] %v2029
        %2226 = vst [vmem:[#allocation3 + $0x2d4] sm:$0xf] %v2043
        %2227 = vst [vmem:[#allocation3 + $0x2f8] sm:$0xf] %v2053
        %2228 = vst [vmem:[#allocation3 + $0x31c] sm:$0xf] %v2067
        %2229 = vst [vmem:[#allocation3 + $0x340] sm:$0xf] %v2077
        %2230 = vst [vmem:[#allocation3 + $0x364] sm:$0xf] %v2091
        %2231 = vst [vmem:[#allocation3 + $0x388] sm:$0xf] %v2101
        %2232 = vst [vmem:[#allocation3 + $0x3ac] sm:$0xf] %v2115
        %2233 = vst [vmem:[#allocation3 + $0x3d0] sm:$0xf] %v2125
        %2234 = vst [vmem:[#allocation3 + $0x3f4] sm:$0xf] %v2139
        %2235 = vst [vmem:[#allocation3 + $0x418] sm:$0xf] %v2149
        %2236 = vst [vmem:[#allocation3 + $0x43c] sm:$0xf] %v2163
        %2237 = vst [vmem:[#allocation3 + $0x460] sm:$0xf] %v2173
        %v2239 = vshrl.u32 %v1781, 16
        %v2241 = vrot.slane %v2239, 4
        %v2242 = vshll.u32 %v1781, 16
        %v2244 = vrot.slane %v2242, 5
        %v2245 = vor.u32 %v2241, %v2244
        %v2246 = vrot.slane %v2245, 4
        %v2248 = vshll.u32 %v1782, 16
        %v2250 = vrot.slane %v2248, 5
        %v2251 = vsel %vm1789, %v2246, %v2250
        %v2252 = vshrl.u32 %v1782, 16
        %v2254 = vrot.slane %v2252, 4
        %v2255 = vor.u32 %v2254, %v2250
        %v2256 = vrot.slane %v2255, 4
        %v2258 = vshll.u32 %v1783, 16
        %v2260 = vrot.slane %v2258, 5
        %v2261 = vsel %vm1789, %v2256, %v2260
        %2264 = vst [vmem:[#allocation3 + $0x10] sm:$0xf] %v1827
        %2265 = vst [vmem:[#allocation3 + $0x34] sm:$0xf] %v1837
        %2266 = vst [vmem:[#allocation3 + $0x58] sm:$0xf] %v1851
        %2267 = vst [vmem:[#allocation3 + $0x7c] sm:$0xf] %v1861
        %2268 = vst [vmem:[#allocation3 + $0xa0] sm:$0xf] %v1875
        %2269 = vst [vmem:[#allocation3 + $0xc4] sm:$0xf] %v1885
        %2270 = vst [vmem:[#allocation3 + $0xe8] sm:$0xf] %v1899
        %2271 = vst [vmem:[#allocation3 + $0x10c] sm:$0xf] %v1909
        %2272 = vst [vmem:[#allocation3 + $0x130] sm:$0xf] %v1923
        %2273 = vst [vmem:[#allocation3 + $0x154] sm:$0xf] %v1933
        %2274 = vst [vmem:[#allocation3 + $0x178] sm:$0xf] %v1947
        %2275 = vst [vmem:[#allocation3 + $0x19c] sm:$0xf] %v1957
        %2276 = vst [vmem:[#allocation3 + $0x1c0] sm:$0xf] %v1971
        %2277 = vst [vmem:[#allocation3 + $0x1e4] sm:$0xf] %v1981
        %2278 = vst [vmem:[#allocation3 + $0x208] sm:$0xf] %v1995
        %2279 = vst [vmem:[#allocation3 + $0x22c] sm:$0xf] %v2005
        %2280 = vst [vmem:[#allocation3 + $0x250] sm:$0xf] %v2019
        %2281 = vst [vmem:[#allocation3 + $0x274] sm:$0xf] %v2029
        %2282 = vst [vmem:[#allocation3 + $0x298] sm:$0xf] %v2043
        %2283 = vst [vmem:[#allocation3 + $0x2bc] sm:$0xf] %v2053
        %2284 = vst [vmem:[#allocation3 + $0x2e0] sm:$0xf] %v2067
        %2285 = vst [vmem:[#allocation3 + $0x304] sm:$0xf] %v2077
        %2286 = vst [vmem:[#allocation3 + $0x328] sm:$0xf] %v2091
        %2287 = vst [vmem:[#allocation3 + $0x34c] sm:$0xf] %v2101
        %2288 = vst [vmem:[#allocation3 + $0x370] sm:$0xf] %v2115
        %2289 = vst [vmem:[#allocation3 + $0x394] sm:$0xf] %v2125
        %2290 = vst [vmem:[#allocation3 + $0x3b8] sm:$0xf] %v2139
        %2291 = vst [vmem:[#allocation3 + $0x3dc] sm:$0xf] %v2149
        %2292 = vst [vmem:[#allocation3 + $0x400] sm:$0xf] %v2163
        %2293 = vst [vmem:[#allocation3 + $0x424] sm:$0xf] %v2173
        %2294 = vst [vmem:[#allocation3 + $0x448] sm:$0xf] %v2251
        %2295 = vst [vmem:[#allocation3 + $0x46c] sm:$0xf] %v2261
        %v2297 = vshrl.u32 %v1784, 16
        %v2299 = vrot.slane %v2297, 4
        %v2300 = vshll.u32 %v1784, 16
        %v2302 = vrot.slane %v2300, 5
        %v2303 = vor.u32 %v2299, %v2302
        %v2304 = vrot.slane %v2303, 4
        %v2306 = vshll.u32 %v1785, 16
        %v2308 = vrot.slane %v2306, 5
        %v2309 = vsel %vm1789, %v2304, %v2308
        %v2310 = vshrl.u32 %v1785, 16
        %v2312 = vrot.slane %v2310, 4
        %v2313 = vor.u32 %v2312, %v2308
        %v2314 = vrot.slane %v2313, 4
        %v2316 = vshll.u32 %v1786, 16
        %v2318 = vrot.slane %v2316, 5
        %v2319 = vsel %vm1789, %v2314, %v2318
        %2322 = vst [vmem:[#allocation3 + $0x1c] sm:$0xf] %v1851
        %2323 = vst [vmem:[#allocation3 + $0x40] sm:$0xf] %v1861
        %2324 = vst [vmem:[#allocation3 + $0x64] sm:$0xf] %v1875
        %2325 = vst [vmem:[#allocation3 + $0x88] sm:$0xf] %v1885
        %2326 = vst [vmem:[#allocation3 + $0xac] sm:$0xf] %v1899
        %2327 = vst [vmem:[#allocation3 + $0xd0] sm:$0xf] %v1909
        %2328 = vst [vmem:[#allocation3 + $0xf4] sm:$0xf] %v1923
        %2329 = vst [vmem:[#allocation3 + $0x118] sm:$0xf] %v1933
        %2330 = vst [vmem:[#allocation3 + $0x13c] sm:$0xf] %v1947
        %2331 = vst [vmem:[#allocation3 + $0x160] sm:$0xf] %v1957
        %2332 = vst [vmem:[#allocation3 + $0x184] sm:$0xf] %v1971
        %2333 = vst [vmem:[#allocation3 + $0x1a8] sm:$0xf] %v1981
        %2334 = vst [vmem:[#allocation3 + $0x1cc] sm:$0xf] %v1995
        %2335 = vst [vmem:[#allocation3 + $0x1f0] sm:$0xf] %v2005
        %2336 = vst [vmem:[#allocation3 + $0x214] sm:$0xf] %v2019
        %2337 = vst [vmem:[#allocation3 + $0x238] sm:$0xf] %v2029
        %2338 = vst [vmem:[#allocation3 + $0x25c] sm:$0xf] %v2043
        %2339 = vst [vmem:[#allocation3 + $0x280] sm:$0xf] %v2053
        %2340 = vst [vmem:[#allocation3 + $0x2a4] sm:$0xf] %v2067
        %2341 = vst [vmem:[#allocation3 + $0x2c8] sm:$0xf] %v2077
        %2342 = vst [vmem:[#allocation3 + $0x2ec] sm:$0xf] %v2091
        %2343 = vst [vmem:[#allocation3 + $0x310] sm:$0xf] %v2101
        %2344 = vst [vmem:[#allocation3 + $0x334] sm:$0xf] %v2115
        %2345 = vst [vmem:[#allocation3 + $0x358] sm:$0xf] %v2125
        %2346 = vst [vmem:[#allocation3 + $0x37c] sm:$0xf] %v2139
        %2347 = vst [vmem:[#allocation3 + $0x3a0] sm:$0xf] %v2149
        %2348 = vst [vmem:[#allocation3 + $0x3c4] sm:$0xf] %v2163
        %2349 = vst [vmem:[#allocation3 + $0x3e8] sm:$0xf] %v2173
        %2350 = vst [vmem:[#allocation3 + $0x40c] sm:$0xf] %v2251
        %2351 = vst [vmem:[#allocation3 + $0x430] sm:$0xf] %v2261
        %2352 = vst [vmem:[#allocation3 + $0x454] sm:$0xf] %v2309
        %2353 = vst [vmem:[#allocation3 + $0x478] sm:$0xf] %v2319
        %v2354 = vld [vmem:[%s1600] sm:$0xe]
        %v2355 = vld [vmem:[%s1600 + $0x4] sm:$0xf]
        %v2356 = vld [vmem:[%s1600 + $0x8] sm:$0x1]
        %v2357 = vld [vmem:[%s1600 + $0xc] sm:$0xe]
        %v2358 = vld [vmem:[%s1600 + $0x10] sm:$0xf]
        %v2359 = vld [vmem:[%s1600 + $0x14] sm:$0x1]
        %v2360 = vld [vmem:[%s1600 + $0x18] sm:$0xe]
        %v2361 = vld [vmem:[%s1600 + $0x1c] sm:$0xf]
        %v2362 = vld [vmem:[%s1600 + $0x20] sm:$0x1]
        %v2363 = vld [vmem:[%s1600 + $0x24] sm:$0xe]
        %v2364 = vld [vmem:[%s1600 + $0x28] sm:$0xf]
        %v2365 = vld [vmem:[%s1600 + $0x2c] sm:$0x1]
        %v2366 = vld [vmem:[%s1600 + $0x30] sm:$0xe]
        %v2367 = vld [vmem:[%s1600 + $0x34] sm:$0xf]
        %v2368 = vld [vmem:[%s1600 + $0x38] sm:$0x1]
        %v2369 = vld [vmem:[%s1600 + $0x3c] sm:$0xe]
        %v2370 = vld [vmem:[%s1600 + $0x40] sm:$0xf]
        %v2371 = vld [vmem:[%s1600 + $0x44] sm:$0x1]
        %v2372 = vld [vmem:[%s1600 + $0x48] sm:$0xe]
        %v2373 = vld [vmem:[%s1600 + $0x4c] sm:$0xf]
        %v2374 = vld [vmem:[%s1600 + $0x50] sm:$0x1]
        %v2375 = vld [vmem:[%s1600 + $0x54] sm:$0xe]
        %v2376 = vld [vmem:[%s1600 + $0x58] sm:$0xf]
        %v2377 = vld [vmem:[%s1600 + $0x5c] sm:$0x1]
        %v2378 = vld [vmem:[%s1600 + $0x60] sm:$0xe]
        %v2379 = vld [vmem:[%s1600 + $0x64] sm:$0xf]
        %v2380 = vld [vmem:[%s1600 + $0x68] sm:$0x1]
        %v2381 = vld [vmem:[%s1600 + $0x6c] sm:$0xe]
        %v2382 = vld [vmem:[%s1600 + $0x70] sm:$0xf]
        %v2383 = vld [vmem:[%s1600 + $0x74] sm:$0x1]
        %v2384 = vld [vmem:[%s1600 + $0x78] sm:$0xe]
        %v2385 = vld [vmem:[%s1600 + $0x7c] sm:$0xf]
        %v2386 = vld [vmem:[%s1600 + $0x80] sm:$0x1]
        %v2387 = vld [vmem:[%s1600 + $0x84] sm:$0xe]
        %v2388 = vld [vmem:[%s1600 + $0x88] sm:$0xf]
        %v2389 = vld [vmem:[%s1600 + $0x8c] sm:$0x1]
        %v2390 = vld [vmem:[%s1600 + $0x90] sm:$0xe]
        %v2391 = vld [vmem:[%s1600 + $0x94] sm:$0xf]
        %v2392 = vld [vmem:[%s1600 + $0x98] sm:$0x1]
        %v2393 = vld [vmem:[%s1600 + $0x9c] sm:$0xe]
        %v2394 = vld [vmem:[%s1600 + $0xa0] sm:$0xf]
        %v2395 = vld [vmem:[%s1600 + $0xa4] sm:$0x1]
        %v2396 = vld [vmem:[%s1600 + $0xa8] sm:$0xe]
        %v2397 = vld [vmem:[%s1600 + $0xac] sm:$0xf]
        %v2398 = vld [vmem:[%s1600 + $0xb0] sm:$0x1]
        %v2399 = vld [vmem:[%s1600 + $0xb4] sm:$0xe]
        %v2400 = vld [vmem:[%s1600 + $0xb8] sm:$0xf]
        %v2401 = vld [vmem:[%s1600 + $0xbc] sm:$0x1]
        %v2402 = vld [vmem:[%s1600 + $0xc0] sm:$0xe]
        %v2403 = vld [vmem:[%s1600 + $0xc4] sm:$0xf]
        %v2404 = vld [vmem:[%s1600 + $0xc8] sm:$0x1]
        %v2405 = vld [vmem:[%s1600 + $0xcc] sm:$0xe]
        %v2406 = vld [vmem:[%s1600 + $0xd0] sm:$0xf]
        %v2407 = vld [vmem:[%s1600 + $0xd4] sm:$0x1]
        %vm2456 = vcmask 1042432
        %vm2457 = vcmask 1046532
        %vm2458 = vmor %vm2456, %vm2457
        %v2459 = vrot.slane %v2354, 5
        %v2460 = vrot.slane %v2459, 4
        %v2461 = vrot.slane %v2355, 5
        %v2462 = vsel %vm2458, %v2460, %v2461
        %v2463 = vrot.slane %v2461, 4
        %v2464 = vrot.slane %v2356, 5
        %v2465 = vsel %vm2458, %v2463, %v2464
        %v2466 = vrot.slane %v2357, 5
        %v2467 = vrot.slane %v2466, 4
        %v2468 = vrot.slane %v2358, 5
        %v2469 = vsel %vm2458, %v2467, %v2468
        %v2470 = vrot.slane %v2468, 4
        %v2471 = vrot.slane %v2359, 5
        %v2472 = vsel %vm2458, %v2470, %v2471
        %v2473 = vrot.slane %v2360, 5
        %v2474 = vrot.slane %v2473, 4
        %v2475 = vrot.slane %v2361, 5
        %v2476 = vsel %vm2458, %v2474, %v2475
        %v2477 = vrot.slane %v2475, 4
        %v2478 = vrot.slane %v2362, 5
        %v2479 = vsel %vm2458, %v2477, %v2478
        %v2480 = vrot.slane %v2363, 5
        %v2481 = vrot.slane %v2480, 4
        %v2482 = vrot.slane %v2364, 5
        %v2483 = vsel %vm2458, %v2481, %v2482
        %v2484 = vrot.slane %v2482, 4
        %v2485 = vrot.slane %v2365, 5
        %v2486 = vsel %vm2458, %v2484, %v2485
        %v2487 = vrot.slane %v2366, 5
        %v2488 = vrot.slane %v2487, 4
        %v2489 = vrot.slane %v2367, 5
        %v2490 = vsel %vm2458, %v2488, %v2489
        %v2491 = vrot.slane %v2489, 4
        %v2492 = vrot.slane %v2368, 5
        %v2493 = vsel %vm2458, %v2491, %v2492
        %v2494 = vrot.slane %v2369, 5
        %v2495 = vrot.slane %v2494, 4
        %v2496 = vrot.slane %v2370, 5
        %v2497 = vsel %vm2458, %v2495, %v2496
        %v2498 = vrot.slane %v2496, 4
        %v2499 = vrot.slane %v2371, 5
        %v2500 = vsel %vm2458, %v2498, %v2499
        %v2501 = vrot.slane %v2372, 5
        %v2502 = vrot.slane %v2501, 4
        %v2503 = vrot.slane %v2373, 5
        %v2504 = vsel %vm2458, %v2502, %v2503
        %v2505 = vrot.slane %v2503, 4
        %v2506 = vrot.slane %v2374, 5
        %v2507 = vsel %vm2458, %v2505, %v2506
        %v2508 = vrot.slane %v2375, 5
        %v2509 = vrot.slane %v2508, 4
        %v2510 = vrot.slane %v2376, 5
        %v2511 = vsel %vm2458, %v2509, %v2510
        %v2512 = vrot.slane %v2510, 4
        %v2513 = vrot.slane %v2377, 5
        %v2514 = vsel %vm2458, %v2512, %v2513
        %v2515 = vrot.slane %v2378, 5
        %v2516 = vrot.slane %v2515, 4
        %v2517 = vrot.slane %v2379, 5
        %v2518 = vsel %vm2458, %v2516, %v2517
        %v2519 = vrot.slane %v2517, 4
        %v2520 = vrot.slane %v2380, 5
        %v2521 = vsel %vm2458, %v2519, %v2520
        %v2522 = vrot.slane %v2381, 5
        %v2523 = vrot.slane %v2522, 4
        %v2524 = vrot.slane %v2382, 5
        %v2525 = vsel %vm2458, %v2523, %v2524
        %v2526 = vrot.slane %v2524, 4
        %v2527 = vrot.slane %v2383, 5
        %v2528 = vsel %vm2458, %v2526, %v2527
        %v2529 = vrot.slane %v2384, 5
        %v2530 = vrot.slane %v2529, 4
        %v2531 = vrot.slane %v2385, 5
        %v2532 = vsel %vm2458, %v2530, %v2531
        %v2533 = vrot.slane %v2531, 4
        %v2534 = vrot.slane %v2386, 5
        %v2535 = vsel %vm2458, %v2533, %v2534
        %v2536 = vrot.slane %v2387, 5
        %v2537 = vrot.slane %v2536, 4
        %v2538 = vrot.slane %v2388, 5
        %v2539 = vsel %vm2458, %v2537, %v2538
        %v2540 = vrot.slane %v2538, 4
        %v2541 = vrot.slane %v2389, 5
        %v2542 = vsel %vm2458, %v2540, %v2541
        %v2543 = vrot.slane %v2390, 5
        %v2544 = vrot.slane %v2543, 4
        %v2545 = vrot.slane %v2391, 5
        %v2546 = vsel %vm2458, %v2544, %v2545
        %v2547 = vrot.slane %v2545, 4
        %v2548 = vrot.slane %v2392, 5
        %v2549 = vsel %vm2458, %v2547, %v2548
        %v2550 = vrot.slane %v2393, 5
        %v2551 = vrot.slane %v2550, 4
        %v2552 = vrot.slane %v2394, 5
        %v2553 = vsel %vm2458, %v2551, %v2552
        %v2554 = vrot.slane %v2552, 4
        %v2555 = vrot.slane %v2395, 5
        %v2556 = vsel %vm2458, %v2554, %v2555
        %v2557 = vrot.slane %v2396, 5
        %v2558 = vrot.slane %v2557, 4
        %v2559 = vrot.slane %v2397, 5
        %v2560 = vsel %vm2458, %v2558, %v2559
        %v2561 = vrot.slane %v2559, 4
        %v2562 = vrot.slane %v2398, 5
        %v2563 = vsel %vm2458, %v2561, %v2562
        %v2564 = vrot.slane %v2399, 5
        %v2565 = vrot.slane %v2564, 4
        %v2566 = vrot.slane %v2400, 5
        %v2567 = vsel %vm2458, %v2565, %v2566
        %v2568 = vrot.slane %v2566, 4
        %v2569 = vrot.slane %v2401, 5
        %v2570 = vsel %vm2458, %v2568, %v2569
        %2603 = vst [vmem:[#allocation3 + $0x8] sm:$0xf] %v2462
        %2604 = vst [vmem:[#allocation3 + $0x2c] sm:$0xf] %v2465
        %2605 = vst [vmem:[#allocation3 + $0x50] sm:$0xf] %v2469
        %2606 = vst [vmem:[#allocation3 + $0x74] sm:$0xf] %v2472
        %2607 = vst [vmem:[#allocation3 + $0x98] sm:$0xf] %v2476
        %2608 = vst [vmem:[#allocation3 + $0xbc] sm:$0xf] %v2479
        %2609 = vst [vmem:[#allocation3 + $0xe0] sm:$0xf] %v2483
        %2610 = vst [vmem:[#allocation3 + $0x104] sm:$0xf] %v2486
        %2611 = vst [vmem:[#allocation3 + $0x128] sm:$0xf] %v2490
        %2612 = vst [vmem:[#allocation3 + $0x14c] sm:$0xf] %v2493
        %2613 = vst [vmem:[#allocation3 + $0x170] sm:$0xf] %v2497
        %2614 = vst [vmem:[#allocation3 + $0x194] sm:$0xf] %v2500
        %2615 = vst [vmem:[#allocation3 + $0x1b8] sm:$0xf] %v2504
        %2616 = vst [vmem:[#allocation3 + $0x1dc] sm:$0xf] %v2507
        %2617 = vst [vmem:[#allocation3 + $0x200] sm:$0xf] %v2511
        %2618 = vst [vmem:[#allocation3 + $0x224] sm:$0xf] %v2514
        %2619 = vst [vmem:[#allocation3 + $0x248] sm:$0xf] %v2518
        %2620 = vst [vmem:[#allocation3 + $0x26c] sm:$0xf] %v2521
        %2621 = vst [vmem:[#allocation3 + $0x290] sm:$0xf] %v2525
        %2622 = vst [vmem:[#allocation3 + $0x2b4] sm:$0xf] %v2528
        %2623 = vst [vmem:[#allocation3 + $0x2d8] sm:$0xf] %v2532
        %2624 = vst [vmem:[#allocation3 + $0x2fc] sm:$0xf] %v2535
        %2625 = vst [vmem:[#allocation3 + $0x320] sm:$0xf] %v2539
        %2626 = vst [vmem:[#allocation3 + $0x344] sm:$0xf] %v2542
        %2627 = vst [vmem:[#allocation3 + $0x368] sm:$0xf] %v2546
        %2628 = vst [vmem:[#allocation3 + $0x38c] sm:$0xf] %v2549
        %2629 = vst [vmem:[#allocation3 + $0x3b0] sm:$0xf] %v2553
        %2630 = vst [vmem:[#allocation3 + $0x3d4] sm:$0xf] %v2556
        %2631 = vst [vmem:[#allocation3 + $0x3f8] sm:$0xf] %v2560
        %2632 = vst [vmem:[#allocation3 + $0x41c] sm:$0xf] %v2563
        %2633 = vst [vmem:[#allocation3 + $0x440] sm:$0xf] %v2567
        %2634 = vst [vmem:[#allocation3 + $0x464] sm:$0xf] %v2570
        %v2638 = vrot.slane %v2402, 5
        %v2639 = vrot.slane %v2638, 4
        %v2640 = vrot.slane %v2403, 5
        %v2641 = vsel %vm2458, %v2639, %v2640
        %v2642 = vrot.slane %v2640, 4
        %v2643 = vrot.slane %v2404, 5
        %v2644 = vsel %vm2458, %v2642, %v2643
        %2647 = vst [vmem:[#allocation3 + $0x14] sm:$0xf] %v2469
        %2648 = vst [vmem:[#allocation3 + $0x38] sm:$0xf] %v2472
        %2649 = vst [vmem:[#allocation3 + $0x5c] sm:$0xf] %v2476
        %2650 = vst [vmem:[#allocation3 + $0x80] sm:$0xf] %v2479
        %2651 = vst [vmem:[#allocation3 + $0xa4] sm:$0xf] %v2483
        %2652 = vst [vmem:[#allocation3 + $0xc8] sm:$0xf] %v2486
        %2653 = vst [vmem:[#allocation3 + $0xec] sm:$0xf] %v2490
        %2654 = vst [vmem:[#allocation3 + $0x110] sm:$0xf] %v2493
        %2655 = vst [vmem:[#allocation3 + $0x134] sm:$0xf] %v2497
        %2656 = vst [vmem:[#allocation3 + $0x158] sm:$0xf] %v2500
        %2657 = vst [vmem:[#allocation3 + $0x17c] sm:$0xf] %v2504
        %2658 = vst [vmem:[#allocation3 + $0x1a0] sm:$0xf] %v2507
        %2659 = vst [vmem:[#allocation3 + $0x1c4] sm:$0xf] %v2511
        %2660 = vst [vmem:[#allocation3 + $0x1e8] sm:$0xf] %v2514
        %2661 = vst [vmem:[#allocation3 + $0x20c] sm:$0xf] %v2518
        %2662 = vst [vmem:[#allocation3 + $0x230] sm:$0xf] %v2521
        %2663 = vst [vmem:[#allocation3 + $0x254] sm:$0xf] %v2525
        %2664 = vst [vmem:[#allocation3 + $0x278] sm:$0xf] %v2528
        %2665 = vst [vmem:[#allocation3 + $0x29c] sm:$0xf] %v2532
        %2666 = vst [vmem:[#allocation3 + $0x2c0] sm:$0xf] %v2535
        %2667 = vst [vmem:[#allocation3 + $0x2e4] sm:$0xf] %v2539
        %2668 = vst [vmem:[#allocation3 + $0x308] sm:$0xf] %v2542
        %2669 = vst [vmem:[#allocation3 + $0x32c] sm:$0xf] %v2546
        %2670 = vst [vmem:[#allocation3 + $0x350] sm:$0xf] %v2549
        %2671 = vst [vmem:[#allocation3 + $0x374] sm:$0xf] %v2553
        %2672 = vst [vmem:[#allocation3 + $0x398] sm:$0xf] %v2556
        %2673 = vst [vmem:[#allocation3 + $0x3bc] sm:$0xf] %v2560
        %2674 = vst [vmem:[#allocation3 + $0x3e0] sm:$0xf] %v2563
        %2675 = vst [vmem:[#allocation3 + $0x404] sm:$0xf] %v2567
        %2676 = vst [vmem:[#allocation3 + $0x428] sm:$0xf] %v2570
        %2677 = vst [vmem:[#allocation3 + $0x44c] sm:$0xf] %v2641
        %2678 = vst [vmem:[#allocation3 + $0x470] sm:$0xf] %v2644
        %v2682 = vrot.slane %v2405, 5
        %v2683 = vrot.slane %v2682, 4
        %v2684 = vrot.slane %v2406, 5
        %v2685 = vsel %vm2458, %v2683, %v2684
        %v2686 = vrot.slane %v2684, 4
        %v2687 = vrot.slane %v2407, 5
        %v2688 = vsel %vm2458, %v2686, %v2687
        %2691 = vst [vmem:[#allocation3 + $0x20] sm:$0xf] %v2476
        %2692 = vst [vmem:[#allocation3 + $0x44] sm:$0xf] %v2479
        %2693 = vst [vmem:[#allocation3 + $0x68] sm:$0xf] %v2483
        %2694 = vst [vmem:[#allocation3 + $0x8c] sm:$0xf] %v2486
        %2695 = vst [vmem:[#allocation3 + $0xb0] sm:$0xf] %v2490
        %2696 = vst [vmem:[#allocation3 + $0xd4] sm:$0xf] %v2493
        %2697 = vst [vmem:[#allocation3 + $0xf8] sm:$0xf] %v2497
        %2698 = vst [vmem:[#allocation3 + $0x11c] sm:$0xf] %v2500
        %2699 = vst [vmem:[#allocation3 + $0x140] sm:$0xf] %v2504
        %2700 = vst [vmem:[#allocation3 + $0x164] sm:$0xf] %v2507
        %2701 = vst [vmem:[#allocation3 + $0x188] sm:$0xf] %v2511
        %2702 = vst [vmem:[#allocation3 + $0x1ac] sm:$0xf] %v2514
        %2703 = vst [vmem:[#allocation3 + $0x1d0] sm:$0xf] %v2518
        %2704 = vst [vmem:[#allocation3 + $0x1f4] sm:$0xf] %v2521
        %2705 = vst [vmem:[#allocation3 + $0x218] sm:$0xf] %v2525
        %2706 = vst [vmem:[#allocation3 + $0x23c] sm:$0xf] %v2528
        %2707 = vst [vmem:[#allocation3 + $0x260] sm:$0xf] %v2532
        %2708 = vst [vmem:[#allocation3 + $0x284] sm:$0xf] %v2535
        %2709 = vst [vmem:[#allocation3 + $0x2a8] sm:$0xf] %v2539
        %2710 = vst [vmem:[#allocation3 + $0x2cc] sm:$0xf] %v2542
        %2711 = vst [vmem:[#allocation3 + $0x2f0] sm:$0xf] %v2546
        %2712 = vst [vmem:[#allocation3 + $0x314] sm:$0xf] %v2549
        %2713 = vst [vmem:[#allocation3 + $0x338] sm:$0xf] %v2553
        %2714 = vst [vmem:[#allocation3 + $0x35c] sm:$0xf] %v2556
        %2715 = vst [vmem:[#allocation3 + $0x380] sm:$0xf] %v2560
        %2716 = vst [vmem:[#allocation3 + $0x3a4] sm:$0xf] %v2563
        %2717 = vst [vmem:[#allocation3 + $0x3c8] sm:$0xf] %v2567
        %2718 = vst [vmem:[#allocation3 + $0x3ec] sm:$0xf] %v2570
        %2719 = vst [vmem:[#allocation3 + $0x410] sm:$0xf] %v2641
        %2720 = vst [vmem:[#allocation3 + $0x434] sm:$0xf] %v2644
        %2721 = vst [vmem:[#allocation3 + $0x458] sm:$0xf] %v2685
        %2722 = vst [vmem:[#allocation3 + $0x47c] sm:$0xf] %v2688
      $region40: #{repblock_forward_nchw.1} parent=31 // pred_fallthru
        _
      %v2723 = vld [vmem:[#allocation3] sm:$0xff]
      %v2724 = vld [vmem:[#allocation3 + $0x8] sm:$0xff]
      %v2725 = vld [vmem:[#allocation3 + $0x10] sm:$0xff]
      %v2726 = vld [vmem:[#allocation3 + $0x18] sm:$0xff]
      %v2727 = vld [vmem:[#allocation3 + $0x20] sm:$0xf]
      %v2728 = vld [vmem:[#allocation3 + $0x24] sm:$0xff]
      %v2729 = vld [vmem:[#allocation3 + $0x2c] sm:$0xff]
      %v2730 = vld [vmem:[#allocation3 + $0x34] sm:$0xff]
      %v2731 = vld [vmem:[#allocation3 + $0x3c] sm:$0xff]
      %v2732 = vld [vmem:[#allocation3 + $0x44] sm:$0xf]
      %v2733 = vld [vmem:[#allocation3 + $0x48] sm:$0xff]
      %v2734 = vld [vmem:[#allocation3 + $0x50] sm:$0xff]
      %v2735 = vld [vmem:[#allocation3 + $0x58] sm:$0xff]
      %v2736 = vld [vmem:[#allocation3 + $0x60] sm:$0xff]
      %v2737 = vld [vmem:[#allocation3 + $0x68] sm:$0xf]
      %v2738 = vld [vmem:[#allocation3 + $0x6c] sm:$0xff]
      %v2739 = vld [vmem:[#allocation3 + $0x74] sm:$0xff]
      %v2740 = vld [vmem:[#allocation3 + $0x7c] sm:$0xff]
      %v2741 = vld [vmem:[#allocation3 + $0x84] sm:$0xff]
      %v2742 = vld [vmem:[#allocation3 + $0x8c] sm:$0xf]
      %v2743 = vld [vmem:[#allocation3 + $0x90] sm:$0xff]
      %v2744 = vld [vmem:[#allocation3 + $0x98] sm:$0xff]
      %v2745 = vld [vmem:[#allocation3 + $0xa0] sm:$0xff]
      %v2746 = vld [vmem:[#allocation3 + $0xa8] sm:$0xff]
      %v2747 = vld [vmem:[#allocation3 + $0xb0] sm:$0xf]
      %v2748 = vld [vmem:[#allocation3 + $0xb4] sm:$0xff]
      %v2749 = vld [vmem:[#allocation3 + $0xbc] sm:$0xff]
      %v2750 = vld [vmem:[#allocation3 + $0xc4] sm:$0xff]
      %v2751 = vld [vmem:[#allocation3 + $0xcc] sm:$0xff]
      %v2752 = vld [vmem:[#allocation3 + $0xd4] sm:$0xf]
      %v2753 = vld [vmem:[#allocation3 + $0xd8] sm:$0xff]
      %v2754 = vld [vmem:[#allocation3 + $0xe0] sm:$0xff]
      %v2755 = vld [vmem:[#allocation3 + $0xe8] sm:$0xff]
      %v2756 = vld [vmem:[#allocation3 + $0xf0] sm:$0xff]
      %v2757 = vld [vmem:[#allocation3 + $0xf8] sm:$0xf]
      %v2758 = vld [vmem:[#allocation3 + $0xfc] sm:$0xff]
      %v2759 = vld [vmem:[#allocation3 + $0x104] sm:$0xff]
      %v2760 = vld [vmem:[#allocation3 + $0x10c] sm:$0xff]
      %v2761 = vld [vmem:[#allocation3 + $0x114] sm:$0xff]
      %v2762 = vld [vmem:[#allocation3 + $0x11c] sm:$0xf]
      %v2763 = vld [vmem:[#allocation3 + $0x120] sm:$0xff]
      %v2764 = vld [vmem:[#allocation3 + $0x128] sm:$0xff]
      %v2765 = vld [vmem:[#allocation3 + $0x130] sm:$0xff]
      %v2766 = vld [vmem:[#allocation3 + $0x138] sm:$0xff]
      %v2767 = vld [vmem:[#allocation3 + $0x140] sm:$0xf]
      %v2768 = vld [vmem:[#allocation3 + $0x144] sm:$0xff]
      %v2769 = vld [vmem:[#allocation3 + $0x14c] sm:$0xff]
      %v2770 = vld [vmem:[#allocation3 + $0x154] sm:$0xff]
      %v2771 = vld [vmem:[#allocation3 + $0x15c] sm:$0xff]
      %v2772 = vld [vmem:[#allocation3 + $0x164] sm:$0xf]
      %v2773 = vld [vmem:[#allocation3 + $0x168] sm:$0xff]
      %v2774 = vld [vmem:[#allocation3 + $0x170] sm:$0xff]
      %v2775 = vld [vmem:[#allocation3 + $0x178] sm:$0xff]
      %v2776 = vld [vmem:[#allocation3 + $0x180] sm:$0xff]
      %v2777 = vld [vmem:[#allocation3 + $0x188] sm:$0xf]
      %v2778 = vld [vmem:[#allocation3 + $0x18c] sm:$0xff]
      %v2779 = vld [vmem:[#allocation3 + $0x194] sm:$0xff]
      %v2780 = vld [vmem:[#allocation3 + $0x19c] sm:$0xff]
      %v2781 = vld [vmem:[#allocation3 + $0x1a4] sm:$0xff]
      %v2782 = vld [vmem:[#allocation3 + $0x1ac] sm:$0xf]
      %v2783 = vld [vmem:[#allocation3 + $0x1b0] sm:$0xff]
      %v2784 = vld [vmem:[#allocation3 + $0x1b8] sm:$0xff]
      %v2785 = vld [vmem:[#allocation3 + $0x1c0] sm:$0xff]
      %v2786 = vld [vmem:[#allocation3 + $0x1c8] sm:$0xff]
      %v2787 = vld [vmem:[#allocation3 + $0x1d0] sm:$0xf]
      %v2788 = vld [vmem:[#allocation3 + $0x1d4] sm:$0xff]
      %v2789 = vld [vmem:[#allocation3 + $0x1dc] sm:$0xff]
      %v2790 = vld [vmem:[#allocation3 + $0x1e4] sm:$0xff]
      %v2791 = vld [vmem:[#allocation3 + $0x1ec] sm:$0xff]
      %v2792 = vld [vmem:[#allocation3 + $0x1f4] sm:$0xf]
      %v2793 = vld [vmem:[#allocation3 + $0x1f8] sm:$0xff]
      %v2794 = vld [vmem:[#allocation3 + $0x200] sm:$0xff]
      %v2795 = vld [vmem:[#allocation3 + $0x208] sm:$0xff]
      %v2796 = vld [vmem:[#allocation3 + $0x210] sm:$0xff]
      %v2797 = vld [vmem:[#allocation3 + $0x218] sm:$0xf]
      %v2798 = vld [vmem:[#allocation3 + $0x21c] sm:$0xff]
      %v2799 = vld [vmem:[#allocation3 + $0x224] sm:$0xff]
      %v2800 = vld [vmem:[#allocation3 + $0x22c] sm:$0xff]
      %v2801 = vld [vmem:[#allocation3 + $0x234] sm:$0xff]
      %v2802 = vld [vmem:[#allocation3 + $0x23c] sm:$0xf]
      %v2803 = vld [vmem:[#allocation3 + $0x240] sm:$0xff]
      %v2804 = vld [vmem:[#allocation3 + $0x248] sm:$0xff]
      %v2805 = vld [vmem:[#allocation3 + $0x250] sm:$0xff]
      %v2806 = vld [vmem:[#allocation3 + $0x258] sm:$0xff]
      %v2807 = vld [vmem:[#allocation3 + $0x260] sm:$0xf]
      %v2808 = vld [vmem:[#allocation3 + $0x264] sm:$0xff]
      %v2809 = vld [vmem:[#allocation3 + $0x26c] sm:$0xff]
      %v2810 = vld [vmem:[#allocation3 + $0x274] sm:$0xff]
      %v2811 = vld [vmem:[#allocation3 + $0x27c] sm:$0xff]
      %v2812 = vld [vmem:[#allocation3 + $0x284] sm:$0xf]
      %v2813 = vld [vmem:[#allocation3 + $0x288] sm:$0xff]
      %v2814 = vld [vmem:[#allocation3 + $0x290] sm:$0xff]
      %v2815 = vld [vmem:[#allocation3 + $0x298] sm:$0xff]
      %v2816 = vld [vmem:[#allocation3 + $0x2a0] sm:$0xff]
      %v2817 = vld [vmem:[#allocation3 + $0x2a8] sm:$0xf]
      %v2818 = vld [vmem:[#allocation3 + $0x2ac] sm:$0xff]
      %v2819 = vld [vmem:[#allocation3 + $0x2b4] sm:$0xff]
      %v2820 = vld [vmem:[#allocation3 + $0x2bc] sm:$0xff]
      %v2821 = vld [vmem:[#allocation3 + $0x2c4] sm:$0xff]
      %v2822 = vld [vmem:[#allocation3 + $0x2cc] sm:$0xf]
      %v2823 = vld [vmem:[#allocation3 + $0x2d0] sm:$0xff]
      %v2824 = vld [vmem:[#allocation3 + $0x2d8] sm:$0xff]
      %v2825 = vld [vmem:[#allocation3 + $0x2e0] sm:$0xff]
      %v2826 = vld [vmem:[#allocation3 + $0x2e8] sm:$0xff]
      %v2827 = vld [vmem:[#allocation3 + $0x2f0] sm:$0xf]
      %v2828 = vld [vmem:[#allocation3 + $0x2f4] sm:$0xff]
      %v2829 = vld [vmem:[#allocation3 + $0x2fc] sm:$0xff]
      %v2830 = vld [vmem:[#allocation3 + $0x304] sm:$0xff]
      %v2831 = vld [vmem:[#allocation3 + $0x30c] sm:$0xff]
      %v2832 = vld [vmem:[#allocation3 + $0x314] sm:$0xf]
      %v2833 = vld [vmem:[#allocation3 + $0x318] sm:$0xff]
      %v2834 = vld [vmem:[#allocation3 + $0x320] sm:$0xff]
      %v2835 = vld [vmem:[#allocation3 + $0x328] sm:$0xff]
      %v2836 = vld [vmem:[#allocation3 + $0x330] sm:$0xff]
      %v2837 = vld [vmem:[#allocation3 + $0x338] sm:$0xf]
      %v2838 = vld [vmem:[#allocation3 + $0x33c] sm:$0xff]
      %v2839 = vld [vmem:[#allocation3 + $0x344] sm:$0xff]
      %v2840 = vld [vmem:[#allocation3 + $0x34c] sm:$0xff]
      %v2841 = vld [vmem:[#allocation3 + $0x354] sm:$0xff]
      %v2842 = vld [vmem:[#allocation3 + $0x35c] sm:$0xf]
      %v2843 = vld [vmem:[#allocation3 + $0x360] sm:$0xff]
      %v2844 = vld [vmem:[#allocation3 + $0x368] sm:$0xff]
      %v2845 = vld [vmem:[#allocation3 + $0x370] sm:$0xff]
      %v2846 = vld [vmem:[#allocation3 + $0x378] sm:$0xff]
      %v2847 = vld [vmem:[#allocation3 + $0x380] sm:$0xf]
      %v2848 = vld [vmem:[#allocation3 + $0x384] sm:$0xff]
      %v2849 = vld [vmem:[#allocation3 + $0x38c] sm:$0xff]
      %v2850 = vld [vmem:[#allocation3 + $0x394] sm:$0xff]
      %v2851 = vld [vmem:[#allocation3 + $0x39c] sm:$0xff]
      %v2852 = vld [vmem:[#allocation3 + $0x3a4] sm:$0xf]
      %v2853 = vld [vmem:[#allocation3 + $0x3a8] sm:$0xff]
      %v2854 = vld [vmem:[#allocation3 + $0x3b0] sm:$0xff]
      %v2855 = vld [vmem:[#allocation3 + $0x3b8] sm:$0xff]
      %v2856 = vld [vmem:[#allocation3 + $0x3c0] sm:$0xff]
      %v2857 = vld [vmem:[#allocation3 + $0x3c8] sm:$0xf]
      %v2858 = vld [vmem:[#allocation3 + $0x3cc] sm:$0xff]
      %v2859 = vld [vmem:[#allocation3 + $0x3d4] sm:$0xff]
      %v2860 = vld [vmem:[#allocation3 + $0x3dc] sm:$0xff]
      %v2861 = vld [vmem:[#allocation3 + $0x3e4] sm:$0xff]
      %v2862 = vld [vmem:[#allocation3 + $0x3ec] sm:$0xf]
      %v2863 = vld [vmem:[#allocation3 + $0x3f0] sm:$0xff]
      %v2864 = vld [vmem:[#allocation3 + $0x3f8] sm:$0xff]
      %v2865 = vld [vmem:[#allocation3 + $0x400] sm:$0xff]
      %v2866 = vld [vmem:[#allocation3 + $0x408] sm:$0xff]
      %v2867 = vld [vmem:[#allocation3 + $0x410] sm:$0xf]
      %v2868 = vld [vmem:[#allocation3 + $0x414] sm:$0xff]
      %v2869 = vld [vmem:[#allocation3 + $0x41c] sm:$0xff]
      %v2870 = vld [vmem:[#allocation3 + $0x424] sm:$0xff]
      %v2871 = vld [vmem:[#allocation3 + $0x42c] sm:$0xff]
      %v2872 = vld [vmem:[#allocation3 + $0x434] sm:$0xf]
      %v2873 = vld [vmem:[#allocation3 + $0x438] sm:$0xff]
      %v2874 = vld [vmem:[#allocation3 + $0x440] sm:$0xff]
      %v2875 = vld [vmem:[#allocation3 + $0x448] sm:$0xff]
      %v2876 = vld [vmem:[#allocation3 + $0x450] sm:$0xff]
      %v2877 = vld [vmem:[#allocation3 + $0x458] sm:$0xf]
      %v2878 = vld [vmem:[#allocation3 + $0x45c] sm:$0xff]
      %v2879 = vld [vmem:[#allocation3 + $0x464] sm:$0xff]
      %v2880 = vld [vmem:[#allocation3 + $0x46c] sm:$0xff]
      %v2881 = vld [vmem:[#allocation3 + $0x474] sm:$0xff]
      %v2882 = vld [vmem:[#allocation3 + $0x47c] sm:$0xf]
      %v2883 = vld [vmem:[%s208] sm:$0xf]
      %v2884 = vld [vmem:[%s208 + $0x4] sm:$0xf]
      %v2885 = vld [vmem:[%s208 + $0x8] sm:$0xf]
      %v2886 = vld [vmem:[%s208 + $0xc] sm:$0xf]
      %v2887 = vld [vmem:[%s208 + $0x10] sm:$0xf]
      %v2888 = vld [vmem:[%s208 + $0x14] sm:$0xf]
      %v2889 = vld [vmem:[%s208 + $0x18] sm:$0xf]
      %v2890 = vld [vmem:[%s208 + $0x1c] sm:$0xf]
      %v2891 = vld [vmem:[%s208 + $0x20] sm:$0xf]
      %v2892 = vld [vmem:[%s208 + $0x24] sm:$0xf]
      %v2893 = vld [vmem:[%s208 + $0x28] sm:$0xf]
      %v2894 = vld [vmem:[%s208 + $0x2c] sm:$0xf]
      %v2895 = vld [vmem:[%s208 + $0x30] sm:$0xf]
      %v2896 = vld [vmem:[%s208 + $0x34] sm:$0xf]
      %v2897 = vld [vmem:[%s208 + $0x38] sm:$0xf]
      %v2898 = vld [vmem:[%s208 + $0x3c] sm:$0xf]
      %v2899 = vld [vmem:[%s208 + $0x40] sm:$0xf]
      %v2900 = vld [vmem:[%s208 + $0x44] sm:$0xf]
      %v2901 = vld [vmem:[%s208 + $0x48] sm:$0xf]
      %v2902 = vld [vmem:[%s208 + $0x4c] sm:$0xf]
      %v2903 = vld [vmem:[%s208 + $0x50] sm:$0xf]
      %v2904 = vld [vmem:[%s208 + $0x54] sm:$0xf]
      %v2905 = vld [vmem:[%s208 + $0x58] sm:$0xf]
      %v2906 = vld [vmem:[%s208 + $0x5c] sm:$0xf]
      %v2907 = vld [vmem:[%s208 + $0x60] sm:$0xf]
      %v2908 = vld [vmem:[%s208 + $0x64] sm:$0xf]
      %v2909 = vld [vmem:[%s208 + $0x68] sm:$0xf]
      %v2910 = vld [vmem:[%s208 + $0x6c] sm:$0xf]
      %v2911 = vld [vmem:[%s208 + $0x70] sm:$0xf]
      %v2912 = vld [vmem:[%s208 + $0x74] sm:$0xf]
      %v2913 = vld [vmem:[%s208 + $0x78] sm:$0xf]
      %v2914 = vld [vmem:[%s208 + $0x7c] sm:$0xf]
      %v2915 = vld [vmem:[%s208 + $0x80] sm:$0xf]
      %v2916 = vld [vmem:[%s208 + $0x84] sm:$0xf]
      %v2917 = vld [vmem:[%s208 + $0x88] sm:$0xf]
      %v2918 = vld [vmem:[%s208 + $0x8c] sm:$0xf]
      %v2919 = vld [vmem:[%s208 + $0x90] sm:$0xf]
      %v2920 = vld [vmem:[%s208 + $0x94] sm:$0xf]
      %v2921 = vld [vmem:[%s208 + $0x98] sm:$0xf]
      %v2922 = vld [vmem:[%s208 + $0x9c] sm:$0xf]
      %v2923 = vld [vmem:[%s208 + $0xa0] sm:$0xf]
      %v2924 = vld [vmem:[%s208 + $0xa4] sm:$0xf]
      %v2925 = vld [vmem:[%s208 + $0xa8] sm:$0xf]
      %v2926 = vld [vmem:[%s208 + $0xac] sm:$0xf]
      %v2927 = vld [vmem:[%s208 + $0xb0] sm:$0xf]
      %v2928 = vld [vmem:[%s208 + $0xb4] sm:$0xf]
      %v2929 = vld [vmem:[%s208 + $0xb8] sm:$0xf]
      %v2930 = vld [vmem:[%s208 + $0xbc] sm:$0xf]
      %v2931 = vld [vmem:[%s208 + $0xc0] sm:$0xf]
      %v2932 = vld [vmem:[%s208 + $0xc4] sm:$0xf]
      %v2933 = vld [vmem:[%s208 + $0xc8] sm:$0xf]
      %v2934 = vld [vmem:[%s208 + $0xcc] sm:$0xf]
      %v2935 = vld [vmem:[%s208 + $0xd0] sm:$0xf]
      %v2936 = vld [vmem:[%s208 + $0xd4] sm:$0xf]
      %v2937 = vld [vmem:[%s208 + $0xd8] sm:$0xf]
      %v2938 = vld [vmem:[%s208 + $0xdc] sm:$0xf]
      %v2939 = vld [vmem:[%s208 + $0xe0] sm:$0xf]
      %v2940 = vld [vmem:[%s208 + $0xe4] sm:$0xf]
      %v2941 = vld [vmem:[%s208 + $0xe8] sm:$0xf]
      %v2942 = vld [vmem:[%s208 + $0xec] sm:$0xf]
      %v2943 = vld [vmem:[%s208 + $0xf0] sm:$0xf]
      %v2944 = vld [vmem:[%s208 + $0xf4] sm:$0xf]
      %v2945 = vld [vmem:[%s208 + $0xf8] sm:$0xf]
      %v2946 = vld [vmem:[%s208 + $0xfc] sm:$0xf]
      %v2947 = vld [vmem:[%s208 + $0x100] sm:$0xf]
      %v2948 = vld [vmem:[%s208 + $0x104] sm:$0xf]
      %v2949 = vld [vmem:[%s208 + $0x108] sm:$0xf]
      %v2950 = vld [vmem:[%s208 + $0x10c] sm:$0xf]
      %v2951 = vld [vmem:[%s208 + $0x110] sm:$0xf]
      %v2952 = vld [vmem:[%s208 + $0x114] sm:$0xf]
      %v2953 = vld [vmem:[%s208 + $0x118] sm:$0xf]
      %v2954 = vld [vmem:[%s208 + $0x11c] sm:$0xf]
      %v2955 = vld [vmem:[%s208 + $0x120] sm:$0xf]
      %v2956 = vld [vmem:[%s208 + $0x124] sm:$0xf]
      %v2957 = vld [vmem:[%s208 + $0x128] sm:$0xf]
      %v2958 = vld [vmem:[%s208 + $0x12c] sm:$0xf]
      %v2959 = vld [vmem:[%s208 + $0x130] sm:$0xf]
      %v2960 = vld [vmem:[%s208 + $0x134] sm:$0xf]
      %v2961 = vld [vmem:[%s208 + $0x138] sm:$0xf]
      %v2962 = vld [vmem:[%s208 + $0x13c] sm:$0xf]
      %v2963 = vld [vmem:[%s208 + $0x140] sm:$0xf]
      %v2964 = vld [vmem:[%s208 + $0x144] sm:$0xf]
      %v2965 = vld [vmem:[%s208 + $0x148] sm:$0xf]
      %v2966 = vld [vmem:[%s208 + $0x14c] sm:$0xf]
      %v2967 = vld [vmem:[%s208 + $0x150] sm:$0xf]
      %v2968 = vld [vmem:[%s208 + $0x154] sm:$0xf]
      %v2969 = vld [vmem:[%s208 + $0x158] sm:$0xf]
      %v2970 = vld [vmem:[%s208 + $0x15c] sm:$0xf]
      %v2971 = vld [vmem:[%s208 + $0x160] sm:$0xf]
      %v2972 = vld [vmem:[%s208 + $0x164] sm:$0xf]
      %v2973 = vld [vmem:[%s208 + $0x168] sm:$0xf]
      %v2974 = vld [vmem:[%s208 + $0x16c] sm:$0xf]
      %v2975 = vld [vmem:[%s208 + $0x170] sm:$0xf]
      %v2976 = vld [vmem:[%s208 + $0x174] sm:$0xf]
      %v2977 = vld [vmem:[%s208 + $0x178] sm:$0xf]
      %v2978 = vld [vmem:[%s208 + $0x17c] sm:$0xf]
      %v2979 = vld [vmem:[%s208 + $0x180] sm:$0xf]
      %v2980 = vld [vmem:[%s208 + $0x184] sm:$0xf]
      %v2981 = vld [vmem:[%s208 + $0x188] sm:$0xf]
      %v2982 = vld [vmem:[%s208 + $0x18c] sm:$0xf]
      %v2983 = vld [vmem:[%s208 + $0x190] sm:$0xf]
      %v2984 = vld [vmem:[%s208 + $0x194] sm:$0xf]
      %v2985 = vld [vmem:[%s208 + $0x198] sm:$0xf]
      %v2986 = vld [vmem:[%s208 + $0x19c] sm:$0xf]
      %v2987 = vld [vmem:[%s208 + $0x1a0] sm:$0xf]
      %v2988 = vld [vmem:[%s208 + $0x1a4] sm:$0xf]
      %v2989 = vld [vmem:[%s208 + $0x1a8] sm:$0xf]
      %v2990 = vld [vmem:[%s208 + $0x1ac] sm:$0xf]
      %v2991 = vld [vmem:[%s208 + $0x1b0] sm:$0xf]
      %v2992 = vld [vmem:[%s208 + $0x1b4] sm:$0xf]
      %v2993 = vld [vmem:[%s208 + $0x1b8] sm:$0xf]
      %v2994 = vld [vmem:[%s208 + $0x1bc] sm:$0xf]
      %v2995 = vld [vmem:[%s208 + $0x1c0] sm:$0xf]
      %v2996 = vld [vmem:[%s208 + $0x1c4] sm:$0xf]
      %v2997 = vld [vmem:[%s208 + $0x1c8] sm:$0xf]
      %v2998 = vld [vmem:[%s208 + $0x1cc] sm:$0xf]
      %v2999 = vld [vmem:[%s208 + $0x1d0] sm:$0xf]
      %v3000 = vld [vmem:[%s208 + $0x1d4] sm:$0xf]
      %v3001 = vld [vmem:[%s208 + $0x1d8] sm:$0xf]
      %v3002 = vld [vmem:[%s208 + $0x1dc] sm:$0xf]
      %v3003 = vld [vmem:[%s208 + $0x1e0] sm:$0xf]
      %v3004 = vld [vmem:[%s208 + $0x1e4] sm:$0xf]
      %v3005 = vld [vmem:[%s208 + $0x1e8] sm:$0xf]
      %v3006 = vld [vmem:[%s208 + $0x1ec] sm:$0xf]
      %v3007 = vld [vmem:[%s208 + $0x1f0] sm:$0xf]
      %v3008 = vld [vmem:[%s208 + $0x1f4] sm:$0xf]
      %v3009 = vld [vmem:[%s208 + $0x1f8] sm:$0xf]
      %v3010 = vld [vmem:[%s208 + $0x1fc] sm:$0xf]
      %v3011 = vld [vmem:[%s208 + $0x200] sm:$0xf]
      %v3012 = vld [vmem:[%s208 + $0x204] sm:$0xf]
      %v3013 = vld [vmem:[%s208 + $0x208] sm:$0xf]
      %v3014 = vld [vmem:[%s208 + $0x20c] sm:$0xf]
      %v3015 = vld [vmem:[%s208 + $0x210] sm:$0xf]
      %v3016 = vld [vmem:[%s208 + $0x214] sm:$0xf]
      %v3017 = vld [vmem:[%s208 + $0x218] sm:$0xf]
      %v3018 = vld [vmem:[%s208 + $0x21c] sm:$0xf]
      %v3019 = vld [vmem:[%s208 + $0x220] sm:$0xf]
      %v3020 = vld [vmem:[%s208 + $0x224] sm:$0xf]
      %v3021 = vld [vmem:[%s208 + $0x228] sm:$0xf]
      %v3022 = vld [vmem:[%s208 + $0x22c] sm:$0xf]
      %v3023 = vld [vmem:[%s208 + $0x230] sm:$0xf]
      %v3024 = vld [vmem:[%s208 + $0x234] sm:$0xf]
      %v3025 = vld [vmem:[%s208 + $0x238] sm:$0xf]
      %v3026 = vld [vmem:[%s208 + $0x23c] sm:$0xf]
      %v3027 = vld [vmem:[%s211] sm:$0x1]
      %v3029 = vperm.slane %v3027, 0
      %v3191 = vunpack.c.l.b16 %v2723
      %v3192 = vunpack.c.h.b16 %v2723
      %v3193 = vunpack.c.l.b16 %v2724
      %v3194 = vunpack.c.h.b16 %v2724
      %v3195 = vunpack.c.l.b16 %v2725
      %v3196 = vunpack.c.h.b16 %v2725
      %v3197 = vunpack.c.l.b16 %v2726
      %v3198 = vunpack.c.h.b16 %v2726
      %v3199 = vunpack.c.l.b16 %v2727
      %v3200 = vunpack.c.l.b16 %v2728
      %v3201 = vunpack.c.h.b16 %v2728
      %v3202 = vunpack.c.l.b16 %v2729
      %v3203 = vunpack.c.h.b16 %v2729
      %v3204 = vunpack.c.l.b16 %v2730
      %v3205 = vunpack.c.h.b16 %v2730
      %v3206 = vunpack.c.l.b16 %v2731
      %v3207 = vunpack.c.h.b16 %v2731
      %v3208 = vunpack.c.l.b16 %v2732
      %v3209 = vunpack.c.l.b16 %v2733
      %v3210 = vunpack.c.h.b16 %v2733
      %v3211 = vunpack.c.l.b16 %v2734
      %v3212 = vunpack.c.h.b16 %v2734
      %v3213 = vunpack.c.l.b16 %v2735
      %v3214 = vunpack.c.h.b16 %v2735
      %v3215 = vunpack.c.l.b16 %v2736
      %v3216 = vunpack.c.h.b16 %v2736
      %v3217 = vunpack.c.l.b16 %v2737
      %v3218 = vunpack.c.l.b16 %v2738
      %v3219 = vunpack.c.h.b16 %v2738
      %v3220 = vunpack.c.l.b16 %v2739
      %v3221 = vunpack.c.h.b16 %v2739
      %v3222 = vunpack.c.l.b16 %v2740
      %v3223 = vunpack.c.h.b16 %v2740
      %v3224 = vunpack.c.l.b16 %v2741
      %v3225 = vunpack.c.h.b16 %v2741
      %v3226 = vunpack.c.l.b16 %v2742
      %v3227 = vunpack.c.l.b16 %v2743
      %v3228 = vunpack.c.h.b16 %v2743
      %v3229 = vunpack.c.l.b16 %v2744
      %v3230 = vunpack.c.h.b16 %v2744
      %v3231 = vunpack.c.l.b16 %v2745
      %v3232 = vunpack.c.h.b16 %v2745
      %v3233 = vunpack.c.l.b16 %v2746
      %v3234 = vunpack.c.h.b16 %v2746
      %v3235 = vunpack.c.l.b16 %v2747
      %v3236 = vunpack.c.l.b16 %v2748
      %v3237 = vunpack.c.h.b16 %v2748
      %v3238 = vunpack.c.l.b16 %v2749
      %v3239 = vunpack.c.h.b16 %v2749
      %v3240 = vunpack.c.l.b16 %v2750
      %v3241 = vunpack.c.h.b16 %v2750
      %v3242 = vunpack.c.l.b16 %v2751
      %v3243 = vunpack.c.h.b16 %v2751
      %v3244 = vunpack.c.l.b16 %v2752
      %v3245 = vunpack.c.l.b16 %v2753
      %v3246 = vunpack.c.h.b16 %v2753
      %v3247 = vunpack.c.l.b16 %v2754
      %v3248 = vunpack.c.h.b16 %v2754
      %v3249 = vunpack.c.l.b16 %v2755
      %v3250 = vunpack.c.h.b16 %v2755
      %v3251 = vunpack.c.l.b16 %v2756
      %v3252 = vunpack.c.h.b16 %v2756
      %v3253 = vunpack.c.l.b16 %v2757
      %v3254 = vunpack.c.l.b16 %v2758
      %v3255 = vunpack.c.h.b16 %v2758
      %v3256 = vunpack.c.l.b16 %v2759
      %v3257 = vunpack.c.h.b16 %v2759
      %v3258 = vunpack.c.l.b16 %v2760
      %v3259 = vunpack.c.h.b16 %v2760
      %v3260 = vunpack.c.l.b16 %v2761
      %v3261 = vunpack.c.h.b16 %v2761
      %v3262 = vunpack.c.l.b16 %v2762
      %v3263 = vunpack.c.l.b16 %v2763
      %v3264 = vunpack.c.h.b16 %v2763
      %v3265 = vunpack.c.l.b16 %v2764
      %v3266 = vunpack.c.h.b16 %v2764
      %v3267 = vunpack.c.l.b16 %v2765
      %v3268 = vunpack.c.h.b16 %v2765
      %v3269 = vunpack.c.l.b16 %v2766
      %v3270 = vunpack.c.h.b16 %v2766
      %v3271 = vunpack.c.l.b16 %v2767
      %v3272 = vunpack.c.l.b16 %v2768
      %v3273 = vunpack.c.h.b16 %v2768
      %v3274 = vunpack.c.l.b16 %v2769
      %v3275 = vunpack.c.h.b16 %v2769
      %v3276 = vunpack.c.l.b16 %v2770
      %v3277 = vunpack.c.h.b16 %v2770
      %v3278 = vunpack.c.l.b16 %v2771
      %v3279 = vunpack.c.h.b16 %v2771
      %v3280 = vunpack.c.l.b16 %v2772
      %v3281 = vunpack.c.l.b16 %v2773
      %v3282 = vunpack.c.h.b16 %v2773
      %v3283 = vunpack.c.l.b16 %v2774
      %v3284 = vunpack.c.h.b16 %v2774
      %v3285 = vunpack.c.l.b16 %v2775
      %v3286 = vunpack.c.h.b16 %v2775
      %v3287 = vunpack.c.l.b16 %v2776
      %v3288 = vunpack.c.h.b16 %v2776
      %v3289 = vunpack.c.l.b16 %v2777
      %v3290 = vunpack.c.l.b16 %v2778
      %v3291 = vunpack.c.h.b16 %v2778
      %v3292 = vunpack.c.l.b16 %v2779
      %v3293 = vunpack.c.h.b16 %v2779
      %v3294 = vunpack.c.l.b16 %v2780
      %v3295 = vunpack.c.h.b16 %v2780
      %v3296 = vunpack.c.l.b16 %v2781
      %v3297 = vunpack.c.h.b16 %v2781
      %v3298 = vunpack.c.l.b16 %v2782
      %v3299 = vunpack.c.l.b16 %v2783
      %v3300 = vunpack.c.h.b16 %v2783
      %v3301 = vunpack.c.l.b16 %v2784
      %v3302 = vunpack.c.h.b16 %v2784
      %v3303 = vunpack.c.l.b16 %v2785
      %v3304 = vunpack.c.h.b16 %v2785
      %v3305 = vunpack.c.l.b16 %v2786
      %v3306 = vunpack.c.h.b16 %v2786
      %v3307 = vunpack.c.l.b16 %v2787
      %v3308 = vunpack.c.l.b16 %v2788
      %v3309 = vunpack.c.h.b16 %v2788
      %v3310 = vunpack.c.l.b16 %v2789
      %v3311 = vunpack.c.h.b16 %v2789
      %v3312 = vunpack.c.l.b16 %v2790
      %v3313 = vunpack.c.h.b16 %v2790
      %v3314 = vunpack.c.l.b16 %v2791
      %v3315 = vunpack.c.h.b16 %v2791
      %v3316 = vunpack.c.l.b16 %v2792
      %v3317 = vunpack.c.l.b16 %v2793
      %v3318 = vunpack.c.h.b16 %v2793
      %v3319 = vunpack.c.l.b16 %v2794
      %v3320 = vunpack.c.h.b16 %v2794
      %v3321 = vunpack.c.l.b16 %v2795
      %v3322 = vunpack.c.h.b16 %v2795
      %v3323 = vunpack.c.l.b16 %v2796
      %v3324 = vunpack.c.h.b16 %v2796
      %v3325 = vunpack.c.l.b16 %v2797
      %v3326 = vunpack.c.l.b16 %v2798
      %v3327 = vunpack.c.h.b16 %v2798
      %v3328 = vunpack.c.l.b16 %v2799
      %v3329 = vunpack.c.h.b16 %v2799
      %v3330 = vunpack.c.l.b16 %v2800
      %v3331 = vunpack.c.h.b16 %v2800
      %v3332 = vunpack.c.l.b16 %v2801
      %v3333 = vunpack.c.h.b16 %v2801
      %v3334 = vunpack.c.l.b16 %v2802
      %v3335 = vunpack.c.l.b16 %v2803
      %v3336 = vunpack.c.h.b16 %v2803
      %v3337 = vunpack.c.l.b16 %v2804
      %v3338 = vunpack.c.h.b16 %v2804
      %v3339 = vunpack.c.l.b16 %v2805
      %v3340 = vunpack.c.h.b16 %v2805
      %v3341 = vunpack.c.l.b16 %v2806
      %v3342 = vunpack.c.h.b16 %v2806
      %v3343 = vunpack.c.l.b16 %v2807
      %v3344 = vunpack.c.l.b16 %v2808
      %v3345 = vunpack.c.h.b16 %v2808
      %v3346 = vunpack.c.l.b16 %v2809
      %v3347 = vunpack.c.h.b16 %v2809
      %v3348 = vunpack.c.l.b16 %v2810
      %v3349 = vunpack.c.h.b16 %v2810
      %v3350 = vunpack.c.l.b16 %v2811
      %v3351 = vunpack.c.h.b16 %v2811
      %v3352 = vunpack.c.l.b16 %v2812
      %v3353 = vunpack.c.l.b16 %v2813
      %v3354 = vunpack.c.h.b16 %v2813
      %v3355 = vunpack.c.l.b16 %v2814
      %v3356 = vunpack.c.h.b16 %v2814
      %v3357 = vunpack.c.l.b16 %v2815
      %v3358 = vunpack.c.h.b16 %v2815
      %v3359 = vunpack.c.l.b16 %v2816
      %v3360 = vunpack.c.h.b16 %v2816
      %v3361 = vunpack.c.l.b16 %v2817
      %v3362 = vunpack.c.l.b16 %v2818
      %v3363 = vunpack.c.h.b16 %v2818
      %v3364 = vunpack.c.l.b16 %v2819
      %v3365 = vunpack.c.h.b16 %v2819
      %v3366 = vunpack.c.l.b16 %v2820
      %v3367 = vunpack.c.h.b16 %v2820
      %v3368 = vunpack.c.l.b16 %v2821
      %v3369 = vunpack.c.h.b16 %v2821
      %v3370 = vunpack.c.l.b16 %v2822
      %v3371 = vunpack.c.l.b16 %v2823
      %v3372 = vunpack.c.h.b16 %v2823
      %v3373 = vunpack.c.l.b16 %v2824
      %v3374 = vunpack.c.h.b16 %v2824
      %v3375 = vunpack.c.l.b16 %v2825
      %v3376 = vunpack.c.h.b16 %v2825
      %v3377 = vunpack.c.l.b16 %v2826
      %v3378 = vunpack.c.h.b16 %v2826
      %v3379 = vunpack.c.l.b16 %v2827
      %v3380 = vunpack.c.l.b16 %v2828
      %v3381 = vunpack.c.h.b16 %v2828
      %v3382 = vunpack.c.l.b16 %v2829
      %v3383 = vunpack.c.h.b16 %v2829
      %v3384 = vunpack.c.l.b16 %v2830
      %v3385 = vunpack.c.h.b16 %v2830
      %v3386 = vunpack.c.l.b16 %v2831
      %v3387 = vunpack.c.h.b16 %v2831
      %v3388 = vunpack.c.l.b16 %v2832
      %v3389 = vunpack.c.l.b16 %v2833
      %v3390 = vunpack.c.h.b16 %v2833
      %v3391 = vunpack.c.l.b16 %v2834
      %v3392 = vunpack.c.h.b16 %v2834
      %v3393 = vunpack.c.l.b16 %v2835
      %v3394 = vunpack.c.h.b16 %v2835
      %v3395 = vunpack.c.l.b16 %v2836
      %v3396 = vunpack.c.h.b16 %v2836
      %v3397 = vunpack.c.l.b16 %v2837
      %v3398 = vunpack.c.l.b16 %v2838
      %v3399 = vunpack.c.h.b16 %v2838
      %v3400 = vunpack.c.l.b16 %v2839
      %v3401 = vunpack.c.h.b16 %v2839
      %v3402 = vunpack.c.l.b16 %v2840
      %v3403 = vunpack.c.h.b16 %v2840
      %v3404 = vunpack.c.l.b16 %v2841
      %v3405 = vunpack.c.h.b16 %v2841
      %v3406 = vunpack.c.l.b16 %v2842
      %v3407 = vunpack.c.l.b16 %v2843
      %v3408 = vunpack.c.h.b16 %v2843
      %v3409 = vunpack.c.l.b16 %v2844
      %v3410 = vunpack.c.h.b16 %v2844
      %v3411 = vunpack.c.l.b16 %v2845
      %v3412 = vunpack.c.h.b16 %v2845
      %v3413 = vunpack.c.l.b16 %v2846
      %v3414 = vunpack.c.h.b16 %v2846
      %v3415 = vunpack.c.l.b16 %v2847
      %v3416 = vunpack.c.l.b16 %v2848
      %v3417 = vunpack.c.h.b16 %v2848
      %v3418 = vunpack.c.l.b16 %v2849
      %v3419 = vunpack.c.h.b16 %v2849
      %v3420 = vunpack.c.l.b16 %v2850
      %v3421 = vunpack.c.h.b16 %v2850
      %v3422 = vunpack.c.l.b16 %v2851
      %v3423 = vunpack.c.h.b16 %v2851
      %v3424 = vunpack.c.l.b16 %v2852
      %v3425 = vunpack.c.l.b16 %v2853
      %v3426 = vunpack.c.h.b16 %v2853
      %v3427 = vunpack.c.l.b16 %v2854
      %v3428 = vunpack.c.h.b16 %v2854
      %v3429 = vunpack.c.l.b16 %v2855
      %v3430 = vunpack.c.h.b16 %v2855
      %v3431 = vunpack.c.l.b16 %v2856
      %v3432 = vunpack.c.h.b16 %v2856
      %v3433 = vunpack.c.l.b16 %v2857
      %v3434 = vunpack.c.l.b16 %v2858
      %v3435 = vunpack.c.h.b16 %v2858
      %v3436 = vunpack.c.l.b16 %v2859
      %v3437 = vunpack.c.h.b16 %v2859
      %v3438 = vunpack.c.l.b16 %v2860
      %v3439 = vunpack.c.h.b16 %v2860
      %v3440 = vunpack.c.l.b16 %v2861
      %v3441 = vunpack.c.h.b16 %v2861
      %v3442 = vunpack.c.l.b16 %v2862
      %v3443 = vunpack.c.l.b16 %v2863
      %v3444 = vunpack.c.h.b16 %v2863
      %v3445 = vunpack.c.l.b16 %v2864
      %v3446 = vunpack.c.h.b16 %v2864
      %v3447 = vunpack.c.l.b16 %v2865
      %v3448 = vunpack.c.h.b16 %v2865
      %v3449 = vunpack.c.l.b16 %v2866
      %v3450 = vunpack.c.h.b16 %v2866
      %v3451 = vunpack.c.l.b16 %v2867
      %v3452 = vunpack.c.l.b16 %v2868
      %v3453 = vunpack.c.h.b16 %v2868
      %v3454 = vunpack.c.l.b16 %v2869
      %v3455 = vunpack.c.h.b16 %v2869
      %v3456 = vunpack.c.l.b16 %v2870
      %v3457 = vunpack.c.h.b16 %v2870
      %v3458 = vunpack.c.l.b16 %v2871
      %v3459 = vunpack.c.h.b16 %v2871
      %v3460 = vunpack.c.l.b16 %v2872
      %v3461 = vunpack.c.l.b16 %v2873
      %v3462 = vunpack.c.h.b16 %v2873
      %v3463 = vunpack.c.l.b16 %v2874
      %v3464 = vunpack.c.h.b16 %v2874
      %v3465 = vunpack.c.l.b16 %v2875
      %v3466 = vunpack.c.h.b16 %v2875
      %v3467 = vunpack.c.l.b16 %v2876
      %v3468 = vunpack.c.h.b16 %v2876
      %v3469 = vunpack.c.l.b16 %v2877
      %v3470 = vunpack.c.l.b16 %v2878
      %v3471 = vunpack.c.h.b16 %v2878
      %v3472 = vunpack.c.l.b16 %v2879
      %v3473 = vunpack.c.h.b16 %v2879
      %v3474 = vunpack.c.l.b16 %v2880
      %v3475 = vunpack.c.h.b16 %v2880
      %v3476 = vunpack.c.l.b16 %v2881
      %v3477 = vunpack.c.h.b16 %v2881
      %v3478 = vunpack.c.l.b16 %v2882
      %v3479 = vpack.c.b16 %v3200, %v3191
      %v3480 = vpack.c.b16 %v3201, %v3192
      %v3481 = vpack.c.b16 %v3202, %v3193
      %v3482 = vpack.c.b16 %v3203, %v3194
      %v3483 = vpack.c.b16 %v3204, %v3195
      %v3484 = vpack.c.b16 %v3205, %v3196
      %v3485 = vpack.c.b16 %v3206, %v3197
      %v3486 = vpack.c.b16 %v3207, %v3198
      %v3487 = vpack.c.b16 %v3208, %v3199
      %v3488 = vpack.c.b16 %v3218, %v3209
      %v3489 = vpack.c.b16 %v3219, %v3210
      %v3490 = vpack.c.b16 %v3220, %v3211
      %v3491 = vpack.c.b16 %v3221, %v3212
      %v3492 = vpack.c.b16 %v3222, %v3213
      %v3493 = vpack.c.b16 %v3223, %v3214
      %v3494 = vpack.c.b16 %v3224, %v3215
      %v3495 = vpack.c.b16 %v3225, %v3216
      %v3496 = vpack.c.b16 %v3226, %v3217
      %v3497 = vpack.c.b16 %v3236, %v3227
      %v3498 = vpack.c.b16 %v3237, %v3228
      %v3499 = vpack.c.b16 %v3238, %v3229
      %v3500 = vpack.c.b16 %v3239, %v3230
      %v3501 = vpack.c.b16 %v3240, %v3231
      %v3502 = vpack.c.b16 %v3241, %v3232
      %v3503 = vpack.c.b16 %v3242, %v3233
      %v3504 = vpack.c.b16 %v3243, %v3234
      %v3505 = vpack.c.b16 %v3244, %v3235
      %v3506 = vpack.c.b16 %v3254, %v3245
      %v3507 = vpack.c.b16 %v3255, %v3246
      %v3508 = vpack.c.b16 %v3256, %v3247
      %v3509 = vpack.c.b16 %v3257, %v3248
      %v3510 = vpack.c.b16 %v3258, %v3249
      %v3511 = vpack.c.b16 %v3259, %v3250
      %v3512 = vpack.c.b16 %v3260, %v3251
      %v3513 = vpack.c.b16 %v3261, %v3252
      %v3514 = vpack.c.b16 %v3262, %v3253
      %v3515 = vpack.c.b16 %v3272, %v3263
      %v3516 = vpack.c.b16 %v3273, %v3264
      %v3517 = vpack.c.b16 %v3274, %v3265
      %v3518 = vpack.c.b16 %v3275, %v3266
      %v3519 = vpack.c.b16 %v3276, %v3267
      %v3520 = vpack.c.b16 %v3277, %v3268
      %v3521 = vpack.c.b16 %v3278, %v3269
      %v3522 = vpack.c.b16 %v3279, %v3270
      %v3523 = vpack.c.b16 %v3280, %v3271
      %v3524 = vpack.c.b16 %v3290, %v3281
      %v3525 = vpack.c.b16 %v3291, %v3282
      %v3526 = vpack.c.b16 %v3292, %v3283
      %v3527 = vpack.c.b16 %v3293, %v3284
      %v3528 = vpack.c.b16 %v3294, %v3285
      %v3529 = vpack.c.b16 %v3295, %v3286
      %v3530 = vpack.c.b16 %v3296, %v3287
      %v3531 = vpack.c.b16 %v3297, %v3288
      %v3532 = vpack.c.b16 %v3298, %v3289
      %v3533 = vpack.c.b16 %v3308, %v3299
      %v3534 = vpack.c.b16 %v3309, %v3300
      %v3535 = vpack.c.b16 %v3310, %v3301
      %v3536 = vpack.c.b16 %v3311, %v3302
      %v3537 = vpack.c.b16 %v3312, %v3303
      %v3538 = vpack.c.b16 %v3313, %v3304
      %v3539 = vpack.c.b16 %v3314, %v3305
      %v3540 = vpack.c.b16 %v3315, %v3306
      %v3541 = vpack.c.b16 %v3316, %v3307
      %v3542 = vpack.c.b16 %v3326, %v3317
      %v3543 = vpack.c.b16 %v3327, %v3318
      %v3544 = vpack.c.b16 %v3328, %v3319
      %v3545 = vpack.c.b16 %v3329, %v3320
      %v3546 = vpack.c.b16 %v3330, %v3321
      %v3547 = vpack.c.b16 %v3331, %v3322
      %v3548 = vpack.c.b16 %v3332, %v3323
      %v3549 = vpack.c.b16 %v3333, %v3324
      %v3550 = vpack.c.b16 %v3334, %v3325
      %v3551 = vpack.c.b16 %v3344, %v3335
      %v3552 = vpack.c.b16 %v3345, %v3336
      %v3553 = vpack.c.b16 %v3346, %v3337
      %v3554 = vpack.c.b16 %v3347, %v3338
      %v3555 = vpack.c.b16 %v3348, %v3339
      %v3556 = vpack.c.b16 %v3349, %v3340
      %v3557 = vpack.c.b16 %v3350, %v3341
      %v3558 = vpack.c.b16 %v3351, %v3342
      %v3559 = vpack.c.b16 %v3352, %v3343
      %v3560 = vpack.c.b16 %v3362, %v3353
      %v3561 = vpack.c.b16 %v3363, %v3354
      %v3562 = vpack.c.b16 %v3364, %v3355
      %v3563 = vpack.c.b16 %v3365, %v3356
      %v3564 = vpack.c.b16 %v3366, %v3357
      %v3565 = vpack.c.b16 %v3367, %v3358
      %v3566 = vpack.c.b16 %v3368, %v3359
      %v3567 = vpack.c.b16 %v3369, %v3360
      %v3568 = vpack.c.b16 %v3370, %v3361
      %v3569 = vpack.c.b16 %v3380, %v3371
      %v3570 = vpack.c.b16 %v3381, %v3372
      %v3571 = vpack.c.b16 %v3382, %v3373
      %v3572 = vpack.c.b16 %v3383, %v3374
      %v3573 = vpack.c.b16 %v3384, %v3375
      %v3574 = vpack.c.b16 %v3385, %v3376
      %v3575 = vpack.c.b16 %v3386, %v3377
      %v3576 = vpack.c.b16 %v3387, %v3378
      %v3577 = vpack.c.b16 %v3388, %v3379
      %v3578 = vpack.c.b16 %v3398, %v3389
      %v3579 = vpack.c.b16 %v3399, %v3390
      %v3580 = vpack.c.b16 %v3400, %v3391
      %v3581 = vpack.c.b16 %v3401, %v3392
      %v3582 = vpack.c.b16 %v3402, %v3393
      %v3583 = vpack.c.b16 %v3403, %v3394
      %v3584 = vpack.c.b16 %v3404, %v3395
      %v3585 = vpack.c.b16 %v3405, %v3396
      %v3586 = vpack.c.b16 %v3406, %v3397
      %v3587 = vpack.c.b16 %v3416, %v3407
      %v3588 = vpack.c.b16 %v3417, %v3408
      %v3589 = vpack.c.b16 %v3418, %v3409
      %v3590 = vpack.c.b16 %v3419, %v3410
      %v3591 = vpack.c.b16 %v3420, %v3411
      %v3592 = vpack.c.b16 %v3421, %v3412
      %v3593 = vpack.c.b16 %v3422, %v3413
      %v3594 = vpack.c.b16 %v3423, %v3414
      %v3595 = vpack.c.b16 %v3424, %v3415
      %v3596 = vpack.c.b16 %v3434, %v3425
      %v3597 = vpack.c.b16 %v3435, %v3426
      %v3598 = vpack.c.b16 %v3436, %v3427
      %v3599 = vpack.c.b16 %v3437, %v3428
      %v3600 = vpack.c.b16 %v3438, %v3429
      %v3601 = vpack.c.b16 %v3439, %v3430
      %v3602 = vpack.c.b16 %v3440, %v3431
      %v3603 = vpack.c.b16 %v3441, %v3432
      %v3604 = vpack.c.b16 %v3442, %v3433
      %v3605 = vpack.c.b16 %v3452, %v3443
      %v3606 = vpack.c.b16 %v3453, %v3444
      %v3607 = vpack.c.b16 %v3454, %v3445
      %v3608 = vpack.c.b16 %v3455, %v3446
      %v3609 = vpack.c.b16 %v3456, %v3447
      %v3610 = vpack.c.b16 %v3457, %v3448
      %v3611 = vpack.c.b16 %v3458, %v3449
      %v3612 = vpack.c.b16 %v3459, %v3450
      %v3613 = vpack.c.b16 %v3460, %v3451
      %v3614 = vpack.c.b16 %v3470, %v3461
      %v3615 = vpack.c.b16 %v3471, %v3462
      %v3616 = vpack.c.b16 %v3472, %v3463
      %v3617 = vpack.c.b16 %v3473, %v3464
      %v3618 = vpack.c.b16 %v3474, %v3465
      %v3619 = vpack.c.b16 %v3475, %v3466
      %v3620 = vpack.c.b16 %v3476, %v3467
      %v3621 = vpack.c.b16 %v3477, %v3468
      %v3622 = vpack.c.b16 %v3478, %v3469
      %v3911 = vunpack.c.l.b16 %v2883
      %v3912 = vunpack.c.l.b16 %v2884
      %v3913 = vunpack.c.l.b16 %v2885
      %v3914 = vunpack.c.l.b16 %v2886
      %v3915 = vunpack.c.l.b16 %v2887
      %v3916 = vunpack.c.l.b16 %v2888
      %v3917 = vunpack.c.l.b16 %v2889
      %v3918 = vunpack.c.l.b16 %v2890
      %v3919 = vunpack.c.l.b16 %v2891
      %v3920 = vunpack.c.l.b16 %v2892
      %v3921 = vunpack.c.l.b16 %v2893
      %v3922 = vunpack.c.l.b16 %v2894
      %v3923 = vunpack.c.l.b16 %v2895
      %v3924 = vunpack.c.l.b16 %v2896
      %v3925 = vunpack.c.l.b16 %v2897
      %v3926 = vunpack.c.l.b16 %v2898
      %v3927 = vunpack.c.l.b16 %v2899
      %v3928 = vunpack.c.l.b16 %v2900
      %v3929 = vunpack.c.l.b16 %v2901
      %v3930 = vunpack.c.l.b16 %v2902
      %v3931 = vunpack.c.l.b16 %v2903
      %v3932 = vunpack.c.l.b16 %v2904
      %v3933 = vunpack.c.l.b16 %v2905
      %v3934 = vunpack.c.l.b16 %v2906
      %v3935 = vunpack.c.l.b16 %v2907
      %v3936 = vunpack.c.l.b16 %v2908
      %v3937 = vunpack.c.l.b16 %v2909
      %v3938 = vunpack.c.l.b16 %v2910
      %v3939 = vunpack.c.l.b16 %v2911
      %v3940 = vunpack.c.l.b16 %v2912
      %v3941 = vunpack.c.l.b16 %v2913
      %v3942 = vunpack.c.l.b16 %v2914
      %v3943 = vunpack.c.l.b16 %v2915
      %v3944 = vunpack.c.l.b16 %v2916
      %v3945 = vunpack.c.l.b16 %v2917
      %v3946 = vunpack.c.l.b16 %v2918
      %v3947 = vunpack.c.l.b16 %v2919
      %v3948 = vunpack.c.l.b16 %v2920
      %v3949 = vunpack.c.l.b16 %v2921
      %v3950 = vunpack.c.l.b16 %v2922
      %v3951 = vunpack.c.l.b16 %v2923
      %v3952 = vunpack.c.l.b16 %v2924
      %v3953 = vunpack.c.l.b16 %v2925
      %v3954 = vunpack.c.l.b16 %v2926
      %v3955 = vunpack.c.l.b16 %v2927
      %v3956 = vunpack.c.l.b16 %v2928
      %v3957 = vunpack.c.l.b16 %v2929
      %v3958 = vunpack.c.l.b16 %v2930
      %v3959 = vunpack.c.l.b16 %v2931
      %v3960 = vunpack.c.l.b16 %v2932
      %v3961 = vunpack.c.l.b16 %v2933
      %v3962 = vunpack.c.l.b16 %v2934
      %v3963 = vunpack.c.l.b16 %v2935
      %v3964 = vunpack.c.l.b16 %v2936
      %v3965 = vunpack.c.l.b16 %v2937
      %v3966 = vunpack.c.l.b16 %v2938
      %v3967 = vunpack.c.l.b16 %v2939
      %v3968 = vunpack.c.l.b16 %v2940
      %v3969 = vunpack.c.l.b16 %v2941
      %v3970 = vunpack.c.l.b16 %v2942
      %v3971 = vunpack.c.l.b16 %v2943
      %v3972 = vunpack.c.l.b16 %v2944
      %v3973 = vunpack.c.l.b16 %v2945
      %v3974 = vunpack.c.l.b16 %v2946
      %v3975 = vunpack.c.l.b16 %v2947
      %v3976 = vunpack.c.l.b16 %v2948
      %v3977 = vunpack.c.l.b16 %v2949
      %v3978 = vunpack.c.l.b16 %v2950
      %v3979 = vunpack.c.l.b16 %v2951
      %v3980 = vunpack.c.l.b16 %v2952
      %v3981 = vunpack.c.l.b16 %v2953
      %v3982 = vunpack.c.l.b16 %v2954
      %v3983 = vunpack.c.l.b16 %v2955
      %v3984 = vunpack.c.l.b16 %v2956
      %v3985 = vunpack.c.l.b16 %v2957
      %v3986 = vunpack.c.l.b16 %v2958
      %v3987 = vunpack.c.l.b16 %v2959
      %v3988 = vunpack.c.l.b16 %v2960
      %v3989 = vunpack.c.l.b16 %v2961
      %v3990 = vunpack.c.l.b16 %v2962
      %v3991 = vunpack.c.l.b16 %v2963
      %v3992 = vunpack.c.l.b16 %v2964
      %v3993 = vunpack.c.l.b16 %v2965
      %v3994 = vunpack.c.l.b16 %v2966
      %v3995 = vunpack.c.l.b16 %v2967
      %v3996 = vunpack.c.l.b16 %v2968
      %v3997 = vunpack.c.l.b16 %v2969
      %v3998 = vunpack.c.l.b16 %v2970
      %v3999 = vunpack.c.l.b16 %v2971
      %v4000 = vunpack.c.l.b16 %v2972
      %v4001 = vunpack.c.l.b16 %v2973
      %v4002 = vunpack.c.l.b16 %v2974
      %v4003 = vunpack.c.l.b16 %v2975
      %v4004 = vunpack.c.l.b16 %v2976
      %v4005 = vunpack.c.l.b16 %v2977
      %v4006 = vunpack.c.l.b16 %v2978
      %v4007 = vunpack.c.l.b16 %v2979
      %v4008 = vunpack.c.l.b16 %v2980
      %v4009 = vunpack.c.l.b16 %v2981
      %v4010 = vunpack.c.l.b16 %v2982
      %v4011 = vunpack.c.l.b16 %v2983
      %v4012 = vunpack.c.l.b16 %v2984
      %v4013 = vunpack.c.l.b16 %v2985
      %v4014 = vunpack.c.l.b16 %v2986
      %v4015 = vunpack.c.l.b16 %v2987
      %v4016 = vunpack.c.l.b16 %v2988
      %v4017 = vunpack.c.l.b16 %v2989
      %v4018 = vunpack.c.l.b16 %v2990
      %v4019 = vunpack.c.l.b16 %v2991
      %v4020 = vunpack.c.l.b16 %v2992
      %v4021 = vunpack.c.l.b16 %v2993
      %v4022 = vunpack.c.l.b16 %v2994
      %v4023 = vunpack.c.l.b16 %v2995
      %v4024 = vunpack.c.l.b16 %v2996
      %v4025 = vunpack.c.l.b16 %v2997
      %v4026 = vunpack.c.l.b16 %v2998
      %v4027 = vunpack.c.l.b16 %v2999
      %v4028 = vunpack.c.l.b16 %v3000
      %v4029 = vunpack.c.l.b16 %v3001
      %v4030 = vunpack.c.l.b16 %v3002
      %v4031 = vunpack.c.l.b16 %v3003
      %v4032 = vunpack.c.l.b16 %v3004
      %v4033 = vunpack.c.l.b16 %v3005
      %v4034 = vunpack.c.l.b16 %v3006
      %v4035 = vunpack.c.l.b16 %v3007
      %v4036 = vunpack.c.l.b16 %v3008
      %v4037 = vunpack.c.l.b16 %v3009
      %v4038 = vunpack.c.l.b16 %v3010
      %v4039 = vunpack.c.l.b16 %v3011
      %v4040 = vunpack.c.l.b16 %v3012
      %v4041 = vunpack.c.l.b16 %v3013
      %v4042 = vunpack.c.l.b16 %v3014
      %v4043 = vunpack.c.l.b16 %v3015
      %v4044 = vunpack.c.l.b16 %v3016
      %v4045 = vunpack.c.l.b16 %v3017
      %v4046 = vunpack.c.l.b16 %v3018
      %v4047 = vunpack.c.l.b16 %v3019
      %v4048 = vunpack.c.l.b16 %v3020
      %v4049 = vunpack.c.l.b16 %v3021
      %v4050 = vunpack.c.l.b16 %v3022
      %v4051 = vunpack.c.l.b16 %v3023
      %v4052 = vunpack.c.l.b16 %v3024
      %v4053 = vunpack.c.l.b16 %v3025
      %v4054 = vunpack.c.l.b16 %v3026
      %v4055 = vpack.c.b16 %v3912, %v3911
      %v4056 = vpack.c.b16 %v3914, %v3913
      %v4057 = vpack.c.b16 %v3916, %v3915
      %v4058 = vpack.c.b16 %v3918, %v3917
      %v4059 = vpack.c.b16 %v3920, %v3919
      %v4060 = vpack.c.b16 %v3922, %v3921
      %v4061 = vpack.c.b16 %v3924, %v3923
      %v4062 = vpack.c.b16 %v3926, %v3925
      %v4063 = vpack.c.b16 %v3928, %v3927
      %v4064 = vpack.c.b16 %v3930, %v3929
      %v4065 = vpack.c.b16 %v3932, %v3931
      %v4066 = vpack.c.b16 %v3934, %v3933
      %v4067 = vpack.c.b16 %v3936, %v3935
      %v4068 = vpack.c.b16 %v3938, %v3937
      %v4069 = vpack.c.b16 %v3940, %v3939
      %v4070 = vpack.c.b16 %v3942, %v3941
      %v4071 = vpack.c.b16 %v3944, %v3943
      %v4072 = vpack.c.b16 %v3946, %v3945
      %v4073 = vpack.c.b16 %v3948, %v3947
      %v4074 = vpack.c.b16 %v3950, %v3949
      %v4075 = vpack.c.b16 %v3952, %v3951
      %v4076 = vpack.c.b16 %v3954, %v3953
      %v4077 = vpack.c.b16 %v3956, %v3955
      %v4078 = vpack.c.b16 %v3958, %v3957
      %v4079 = vpack.c.b16 %v3960, %v3959
      %v4080 = vpack.c.b16 %v3962, %v3961
      %v4081 = vpack.c.b16 %v3964, %v3963
      %v4082 = vpack.c.b16 %v3966, %v3965
      %v4083 = vpack.c.b16 %v3968, %v3967
      %v4084 = vpack.c.b16 %v3970, %v3969
      %v4085 = vpack.c.b16 %v3972, %v3971
      %v4086 = vpack.c.b16 %v3974, %v3973
      %v4087 = vpack.c.b16 %v3976, %v3975
      %v4088 = vpack.c.b16 %v3978, %v3977
      %v4089 = vpack.c.b16 %v3980, %v3979
      %v4090 = vpack.c.b16 %v3982, %v3981
      %v4091 = vpack.c.b16 %v3984, %v3983
      %v4092 = vpack.c.b16 %v3986, %v3985
      %v4093 = vpack.c.b16 %v3988, %v3987
      %v4094 = vpack.c.b16 %v3990, %v3989
      %v4095 = vpack.c.b16 %v3992, %v3991
      %v4096 = vpack.c.b16 %v3994, %v3993
      %v4097 = vpack.c.b16 %v3996, %v3995
      %v4098 = vpack.c.b16 %v3998, %v3997
      %v4099 = vpack.c.b16 %v4000, %v3999
      %v4100 = vpack.c.b16 %v4002, %v4001
      %v4101 = vpack.c.b16 %v4004, %v4003
      %v4102 = vpack.c.b16 %v4006, %v4005
      %v4103 = vpack.c.b16 %v4008, %v4007
      %v4104 = vpack.c.b16 %v4010, %v4009
      %v4105 = vpack.c.b16 %v4012, %v4011
      %v4106 = vpack.c.b16 %v4014, %v4013
      %v4107 = vpack.c.b16 %v4016, %v4015
      %v4108 = vpack.c.b16 %v4018, %v4017
      %v4109 = vpack.c.b16 %v4020, %v4019
      %v4110 = vpack.c.b16 %v4022, %v4021
      %v4111 = vpack.c.b16 %v4024, %v4023
      %v4112 = vpack.c.b16 %v4026, %v4025
      %v4113 = vpack.c.b16 %v4028, %v4027
      %v4114 = vpack.c.b16 %v4030, %v4029
      %v4115 = vpack.c.b16 %v4032, %v4031
      %v4116 = vpack.c.b16 %v4034, %v4033
      %v4117 = vpack.c.b16 %v4036, %v4035
      %v4118 = vpack.c.b16 %v4038, %v4037
      %v4119 = vpack.c.b16 %v4040, %v4039
      %v4120 = vpack.c.b16 %v4042, %v4041
      %v4121 = vpack.c.b16 %v4044, %v4043
      %v4122 = vpack.c.b16 %v4046, %v4045
      %v4123 = vpack.c.b16 %v4048, %v4047
      %v4124 = vpack.c.b16 %v4050, %v4049
      %v4125 = vpack.c.b16 %v4052, %v4051
      %v4126 = vpack.c.b16 %v4054, %v4053
      %4199 = vmatpush.bf16.msra.mxu0 %v4062
      %4200 = vmatpush.bf16.msra.mxu0 %v4061
      %4201 = vmatpush.bf16.msra.mxu0 %v4060
      %4202 = vmatpush.bf16.msra.mxu0 %v4059
      %4203 = vmatpush.bf16.msra.mxu0 %v4058
      %4204 = vmatpush.bf16.msra.mxu0 %v4057
      %4205 = vmatpush.bf16.msra.mxu0 %v4056
      %4206 = vmatpush.bf16.msra.mxu0 %v4055
      %4207 = vmatmul.bf16.gmra.mxu0 %v3479
      %v4208 = vpop.f32.mrf.mxu0
      %v4209 = vadd.f32 %v3029, %v4208
      %v4210 = vpop.f32.mrf.mxu0
      %v4211 = vadd.f32 %v3029, %v4210
      %4212 = vmatmul.bf16.gmra.mxu0 %v3488
      %v4213 = vpop.f32.mrf.mxu0
      %v4214 = vadd.f32 %v3029, %v4213
      %v4215 = vpop.f32.mrf.mxu0
      %v4216 = vadd.f32 %v3029, %v4215
      %4217 = vmatmul.bf16.gmra.mxu0 %v3497
      %v4218 = vpop.f32.mrf.mxu0
      %v4219 = vadd.f32 %v3029, %v4218
      %v4220 = vpop.f32.mrf.mxu0
      %v4221 = vadd.f32 %v3029, %v4220
      %4222 = vmatmul.bf16.gmra.mxu0 %v3506
      %v4223 = vpop.f32.mrf.mxu0
      %v4224 = vadd.f32 %v3029, %v4223
      %v4225 = vpop.f32.mrf.mxu0
      %v4226 = vadd.f32 %v3029, %v4225
      %4227 = vmatmul.bf16.gmra.mxu0 %v3515
      %v4228 = vpop.f32.mrf.mxu0
      %v4229 = vadd.f32 %v3029, %v4228
      %v4230 = vpop.f32.mrf.mxu0
      %v4231 = vadd.f32 %v3029, %v4230
      %4232 = vmatmul.bf16.gmra.mxu0 %v3524
      %v4233 = vpop.f32.mrf.mxu0
      %v4234 = vadd.f32 %v3029, %v4233
      %v4235 = vpop.f32.mrf.mxu0
      %v4236 = vadd.f32 %v3029, %v4235
      %4237 = vmatmul.bf16.gmra.mxu0 %v3533
      %v4238 = vpop.f32.mrf.mxu0
      %v4239 = vadd.f32 %v3029, %v4238
      %v4240 = vpop.f32.mrf.mxu0
      %v4241 = vadd.f32 %v3029, %v4240
      %4242 = vmatmul.bf16.gmra.mxu0 %v3542
      %v4243 = vpop.f32.mrf.mxu0
      %v4244 = vadd.f32 %v3029, %v4243
      %v4245 = vpop.f32.mrf.mxu0
      %v4246 = vadd.f32 %v3029, %v4245
      %4247 = vmatmul.bf16.gmra.mxu0 %v3551
      %v4248 = vpop.f32.mrf.mxu0
      %v4249 = vadd.f32 %v3029, %v4248
      %v4250 = vpop.f32.mrf.mxu0
      %v4251 = vadd.f32 %v3029, %v4250
      %4252 = vmatmul.bf16.gmra.mxu0 %v3560
      %v4253 = vpop.f32.mrf.mxu0
      %v4254 = vadd.f32 %v3029, %v4253
      %v4255 = vpop.f32.mrf.mxu0
      %v4256 = vadd.f32 %v3029, %v4255
      %4257 = vmatmul.bf16.gmra.mxu0 %v3569
      %v4258 = vpop.f32.mrf.mxu0
      %v4259 = vadd.f32 %v3029, %v4258
      %v4260 = vpop.f32.mrf.mxu0
      %v4261 = vadd.f32 %v3029, %v4260
      %4262 = vmatmul.bf16.gmra.mxu0 %v3578
      %v4263 = vpop.f32.mrf.mxu0
      %v4264 = vadd.f32 %v3029, %v4263
      %v4265 = vpop.f32.mrf.mxu0
      %v4266 = vadd.f32 %v3029, %v4265
      %4267 = vmatmul.bf16.gmra.mxu0 %v3587
      %v4268 = vpop.f32.mrf.mxu0
      %v4269 = vadd.f32 %v3029, %v4268
      %v4270 = vpop.f32.mrf.mxu0
      %v4271 = vadd.f32 %v3029, %v4270
      %4272 = vmatmul.bf16.gmra.mxu0 %v3596
      %v4273 = vpop.f32.mrf.mxu0
      %v4274 = vadd.f32 %v3029, %v4273
      %v4275 = vpop.f32.mrf.mxu0
      %v4276 = vadd.f32 %v3029, %v4275
      %4277 = vmatmul.bf16.gmra.mxu0 %v3605
      %v4278 = vpop.f32.mrf.mxu0
      %v4279 = vadd.f32 %v3029, %v4278
      %v4280 = vpop.f32.mrf.mxu0
      %v4281 = vadd.f32 %v3029, %v4280
      %4282 = vmatmul.bf16.gmra.mxu0 %v3614
      %v4283 = vpop.f32.mrf.mxu0
      %v4284 = vadd.f32 %v3029, %v4283
      %v4285 = vpop.f32.mrf.mxu0
      %v4286 = vadd.f32 %v3029, %v4285
      %4287 = vdwg.mxu0
      %4288 = vmatpush.bf16.msra.mxu0 %v4070
      %4289 = vmatpush.bf16.msra.mxu0 %v4069
      %4290 = vmatpush.bf16.msra.mxu0 %v4068
      %4291 = vmatpush.bf16.msra.mxu0 %v4067
      %4292 = vmatpush.bf16.msra.mxu0 %v4066
      %4293 = vmatpush.bf16.msra.mxu0 %v4065
      %4294 = vmatpush.bf16.msra.mxu0 %v4064
      %4295 = vmatpush.bf16.msra.mxu0 %v4063
      %4296 = vmatmul.bf16.gmra.mxu0 %v3480
      %v4297 = vpop.f32.mrf.mxu0
      %v4298 = vadd.f32 %v4209, %v4297
      %v4299 = vpop.f32.mrf.mxu0
      %v4300 = vadd.f32 %v4211, %v4299
      %4301 = vmatmul.bf16.gmra.mxu0 %v3489
      %v4302 = vpop.f32.mrf.mxu0
      %v4303 = vadd.f32 %v4214, %v4302
      %v4304 = vpop.f32.mrf.mxu0
      %v4305 = vadd.f32 %v4216, %v4304
      %4306 = vmatmul.bf16.gmra.mxu0 %v3498
      %v4307 = vpop.f32.mrf.mxu0
      %v4308 = vadd.f32 %v4219, %v4307
      %v4309 = vpop.f32.mrf.mxu0
      %v4310 = vadd.f32 %v4221, %v4309
      %4311 = vmatmul.bf16.gmra.mxu0 %v3507
      %v4312 = vpop.f32.mrf.mxu0
      %v4313 = vadd.f32 %v4224, %v4312
      %v4314 = vpop.f32.mrf.mxu0
      %v4315 = vadd.f32 %v4226, %v4314
      %4316 = vmatmul.bf16.gmra.mxu0 %v3516
      %v4317 = vpop.f32.mrf.mxu0
      %v4318 = vadd.f32 %v4229, %v4317
      %v4319 = vpop.f32.mrf.mxu0
      %v4320 = vadd.f32 %v4231, %v4319
      %4321 = vmatmul.bf16.gmra.mxu0 %v3525
      %v4322 = vpop.f32.mrf.mxu0
      %v4323 = vadd.f32 %v4234, %v4322
      %v4324 = vpop.f32.mrf.mxu0
      %v4325 = vadd.f32 %v4236, %v4324
      %4326 = vmatmul.bf16.gmra.mxu0 %v3534
      %v4327 = vpop.f32.mrf.mxu0
      %v4328 = vadd.f32 %v4239, %v4327
      %v4329 = vpop.f32.mrf.mxu0
      %v4330 = vadd.f32 %v4241, %v4329
      %4331 = vmatmul.bf16.gmra.mxu0 %v3543
      %v4332 = vpop.f32.mrf.mxu0
      %v4333 = vadd.f32 %v4244, %v4332
      %v4334 = vpop.f32.mrf.mxu0
      %v4335 = vadd.f32 %v4246, %v4334
      %4336 = vmatmul.bf16.gmra.mxu0 %v3552
      %v4337 = vpop.f32.mrf.mxu0
      %v4338 = vadd.f32 %v4249, %v4337
      %v4339 = vpop.f32.mrf.mxu0
      %v4340 = vadd.f32 %v4251, %v4339
      %4341 = vmatmul.bf16.gmra.mxu0 %v3561
      %v4342 = vpop.f32.mrf.mxu0
      %v4343 = vadd.f32 %v4254, %v4342
      %v4344 = vpop.f32.mrf.mxu0
      %v4345 = vadd.f32 %v4256, %v4344
      %4346 = vmatmul.bf16.gmra.mxu0 %v3570
      %v4347 = vpop.f32.mrf.mxu0
      %v4348 = vadd.f32 %v4259, %v4347
      %v4349 = vpop.f32.mrf.mxu0
      %v4350 = vadd.f32 %v4261, %v4349
      %4351 = vmatmul.bf16.gmra.mxu0 %v3579
      %v4352 = vpop.f32.mrf.mxu0
      %v4353 = vadd.f32 %v4264, %v4352
      %v4354 = vpop.f32.mrf.mxu0
      %v4355 = vadd.f32 %v4266, %v4354
      %4356 = vmatmul.bf16.gmra.mxu0 %v3588
      %v4357 = vpop.f32.mrf.mxu0
      %v4358 = vadd.f32 %v4269, %v4357
      %v4359 = vpop.f32.mrf.mxu0
      %v4360 = vadd.f32 %v4271, %v4359
      %4361 = vmatmul.bf16.gmra.mxu0 %v3597
      %v4362 = vpop.f32.mrf.mxu0
      %v4363 = vadd.f32 %v4274, %v4362
      %v4364 = vpop.f32.mrf.mxu0
      %v4365 = vadd.f32 %v4276, %v4364
      %4366 = vmatmul.bf16.gmra.mxu0 %v3606
      %v4367 = vpop.f32.mrf.mxu0
      %v4368 = vadd.f32 %v4279, %v4367
      %v4369 = vpop.f32.mrf.mxu0
      %v4370 = vadd.f32 %v4281, %v4369
      %4371 = vmatmul.bf16.gmra.mxu0 %v3615
      %v4372 = vpop.f32.mrf.mxu0
      %v4373 = vadd.f32 %v4284, %v4372
      %v4374 = vpop.f32.mrf.mxu0
      %v4375 = vadd.f32 %v4286, %v4374
      %4376 = vdwg.mxu0
      %4377 = vmatpush.bf16.msra.mxu0 %v4078
      %4378 = vmatpush.bf16.msra.mxu0 %v4077
      %4379 = vmatpush.bf16.msra.mxu0 %v4076
      %4380 = vmatpush.bf16.msra.mxu0 %v4075
      %4381 = vmatpush.bf16.msra.mxu0 %v4074
      %4382 = vmatpush.bf16.msra.mxu0 %v4073
      %4383 = vmatpush.bf16.msra.mxu0 %v4072
      %4384 = vmatpush.bf16.msra.mxu0 %v4071
      %4385 = vmatmul.bf16.gmra.mxu0 %v3481
      %v4386 = vpop.f32.mrf.mxu0
      %v4387 = vadd.f32 %v4298, %v4386
      %v4388 = vpop.f32.mrf.mxu0
      %v4389 = vadd.f32 %v4300, %v4388
      %4390 = vmatmul.bf16.gmra.mxu0 %v3490
      %v4391 = vpop.f32.mrf.mxu0
      %v4392 = vadd.f32 %v4303, %v4391
      %v4393 = vpop.f32.mrf.mxu0
      %v4394 = vadd.f32 %v4305, %v4393
      %4395 = vmatmul.bf16.gmra.mxu0 %v3499
      %v4396 = vpop.f32.mrf.mxu0
      %v4397 = vadd.f32 %v4308, %v4396
      %v4398 = vpop.f32.mrf.mxu0
      %v4399 = vadd.f32 %v4310, %v4398
      %4400 = vmatmul.bf16.gmra.mxu0 %v3508
      %v4401 = vpop.f32.mrf.mxu0
      %v4402 = vadd.f32 %v4313, %v4401
      %v4403 = vpop.f32.mrf.mxu0
      %v4404 = vadd.f32 %v4315, %v4403
      %4405 = vmatmul.bf16.gmra.mxu0 %v3517
      %v4406 = vpop.f32.mrf.mxu0
      %v4407 = vadd.f32 %v4318, %v4406
      %v4408 = vpop.f32.mrf.mxu0
      %v4409 = vadd.f32 %v4320, %v4408
      %4410 = vmatmul.bf16.gmra.mxu0 %v3526
      %v4411 = vpop.f32.mrf.mxu0
      %v4412 = vadd.f32 %v4323, %v4411
      %v4413 = vpop.f32.mrf.mxu0
      %v4414 = vadd.f32 %v4325, %v4413
      %4415 = vmatmul.bf16.gmra.mxu0 %v3535
      %v4416 = vpop.f32.mrf.mxu0
      %v4417 = vadd.f32 %v4328, %v4416
      %v4418 = vpop.f32.mrf.mxu0
      %v4419 = vadd.f32 %v4330, %v4418
      %4420 = vmatmul.bf16.gmra.mxu0 %v3544
      %v4421 = vpop.f32.mrf.mxu0
      %v4422 = vadd.f32 %v4333, %v4421
      %v4423 = vpop.f32.mrf.mxu0
      %v4424 = vadd.f32 %v4335, %v4423
      %4425 = vmatmul.bf16.gmra.mxu0 %v3553
      %v4426 = vpop.f32.mrf.mxu0
      %v4427 = vadd.f32 %v4338, %v4426
      %v4428 = vpop.f32.mrf.mxu0
      %v4429 = vadd.f32 %v4340, %v4428
      %4430 = vmatmul.bf16.gmra.mxu0 %v3562
      %v4431 = vpop.f32.mrf.mxu0
      %v4432 = vadd.f32 %v4343, %v4431
      %v4433 = vpop.f32.mrf.mxu0
      %v4434 = vadd.f32 %v4345, %v4433
      %4435 = vmatmul.bf16.gmra.mxu0 %v3571
      %v4436 = vpop.f32.mrf.mxu0
      %v4437 = vadd.f32 %v4348, %v4436
      %v4438 = vpop.f32.mrf.mxu0
      %v4439 = vadd.f32 %v4350, %v4438
      %4440 = vmatmul.bf16.gmra.mxu0 %v3580
      %v4441 = vpop.f32.mrf.mxu0
      %v4442 = vadd.f32 %v4353, %v4441
      %v4443 = vpop.f32.mrf.mxu0
      %v4444 = vadd.f32 %v4355, %v4443
      %4445 = vmatmul.bf16.gmra.mxu0 %v3589
      %v4446 = vpop.f32.mrf.mxu0
      %v4447 = vadd.f32 %v4358, %v4446
      %v4448 = vpop.f32.mrf.mxu0
      %v4449 = vadd.f32 %v4360, %v4448
      %4450 = vmatmul.bf16.gmra.mxu0 %v3598
      %v4451 = vpop.f32.mrf.mxu0
      %v4452 = vadd.f32 %v4363, %v4451
      %v4453 = vpop.f32.mrf.mxu0
      %v4454 = vadd.f32 %v4365, %v4453
      %4455 = vmatmul.bf16.gmra.mxu0 %v3607
      %v4456 = vpop.f32.mrf.mxu0
      %v4457 = vadd.f32 %v4368, %v4456
      %v4458 = vpop.f32.mrf.mxu0
      %v4459 = vadd.f32 %v4370, %v4458
      %4460 = vmatmul.bf16.gmra.mxu0 %v3616
      %v4461 = vpop.f32.mrf.mxu0
      %v4462 = vadd.f32 %v4373, %v4461
      %v4463 = vpop.f32.mrf.mxu0
      %v4464 = vadd.f32 %v4375, %v4463
      %4465 = vdwg.mxu0
      %4466 = vmatpush.bf16.msra.mxu0 %v4086
      %4467 = vmatpush.bf16.msra.mxu0 %v4085
      %4468 = vmatpush.bf16.msra.mxu0 %v4084
      %4469 = vmatpush.bf16.msra.mxu0 %v4083
      %4470 = vmatpush.bf16.msra.mxu0 %v4082
      %4471 = vmatpush.bf16.msra.mxu0 %v4081
      %4472 = vmatpush.bf16.msra.mxu0 %v4080
      %4473 = vmatpush.bf16.msra.mxu0 %v4079
      %4474 = vmatmul.bf16.gmra.mxu0 %v3482
      %v4475 = vpop.f32.mrf.mxu0
      %v4476 = vadd.f32 %v4387, %v4475
      %v4477 = vpop.f32.mrf.mxu0
      %v4478 = vadd.f32 %v4389, %v4477
      %4479 = vmatmul.bf16.gmra.mxu0 %v3491
      %v4480 = vpop.f32.mrf.mxu0
      %v4481 = vadd.f32 %v4392, %v4480
      %v4482 = vpop.f32.mrf.mxu0
      %v4483 = vadd.f32 %v4394, %v4482
      %4484 = vmatmul.bf16.gmra.mxu0 %v3500
      %v4485 = vpop.f32.mrf.mxu0
      %v4486 = vadd.f32 %v4397, %v4485
      %v4487 = vpop.f32.mrf.mxu0
      %v4488 = vadd.f32 %v4399, %v4487
      %4489 = vmatmul.bf16.gmra.mxu0 %v3509
      %v4490 = vpop.f32.mrf.mxu0
      %v4491 = vadd.f32 %v4402, %v4490
      %v4492 = vpop.f32.mrf.mxu0
      %v4493 = vadd.f32 %v4404, %v4492
      %4494 = vmatmul.bf16.gmra.mxu0 %v3518
      %v4495 = vpop.f32.mrf.mxu0
      %v4496 = vadd.f32 %v4407, %v4495
      %v4497 = vpop.f32.mrf.mxu0
      %v4498 = vadd.f32 %v4409, %v4497
      %4499 = vmatmul.bf16.gmra.mxu0 %v3527
      %v4500 = vpop.f32.mrf.mxu0
      %v4501 = vadd.f32 %v4412, %v4500
      %v4502 = vpop.f32.mrf.mxu0
      %v4503 = vadd.f32 %v4414, %v4502
      %4504 = vmatmul.bf16.gmra.mxu0 %v3536
      %v4505 = vpop.f32.mrf.mxu0
      %v4506 = vadd.f32 %v4417, %v4505
      %v4507 = vpop.f32.mrf.mxu0
      %v4508 = vadd.f32 %v4419, %v4507
      %4509 = vmatmul.bf16.gmra.mxu0 %v3545
      %v4510 = vpop.f32.mrf.mxu0
      %v4511 = vadd.f32 %v4422, %v4510
      %v4512 = vpop.f32.mrf.mxu0
      %v4513 = vadd.f32 %v4424, %v4512
      %4514 = vmatmul.bf16.gmra.mxu0 %v3554
      %v4515 = vpop.f32.mrf.mxu0
      %v4516 = vadd.f32 %v4427, %v4515
      %v4517 = vpop.f32.mrf.mxu0
      %v4518 = vadd.f32 %v4429, %v4517
      %4519 = vmatmul.bf16.gmra.mxu0 %v3563
      %v4520 = vpop.f32.mrf.mxu0
      %v4521 = vadd.f32 %v4432, %v4520
      %v4522 = vpop.f32.mrf.mxu0
      %v4523 = vadd.f32 %v4434, %v4522
      %4524 = vmatmul.bf16.gmra.mxu0 %v3572
      %v4525 = vpop.f32.mrf.mxu0
      %v4526 = vadd.f32 %v4437, %v4525
      %v4527 = vpop.f32.mrf.mxu0
      %v4528 = vadd.f32 %v4439, %v4527
      %4529 = vmatmul.bf16.gmra.mxu0 %v3581
      %v4530 = vpop.f32.mrf.mxu0
      %v4531 = vadd.f32 %v4442, %v4530
      %v4532 = vpop.f32.mrf.mxu0
      %v4533 = vadd.f32 %v4444, %v4532
      %4534 = vmatmul.bf16.gmra.mxu0 %v3590
      %v4535 = vpop.f32.mrf.mxu0
      %v4536 = vadd.f32 %v4447, %v4535
      %v4537 = vpop.f32.mrf.mxu0
      %v4538 = vadd.f32 %v4449, %v4537
      %4539 = vmatmul.bf16.gmra.mxu0 %v3599
      %v4540 = vpop.f32.mrf.mxu0
      %v4541 = vadd.f32 %v4452, %v4540
      %v4542 = vpop.f32.mrf.mxu0
      %v4543 = vadd.f32 %v4454, %v4542
      %4544 = vmatmul.bf16.gmra.mxu0 %v3608
      %v4545 = vpop.f32.mrf.mxu0
      %v4546 = vadd.f32 %v4457, %v4545
      %v4547 = vpop.f32.mrf.mxu0
      %v4548 = vadd.f32 %v4459, %v4547
      %4549 = vmatmul.bf16.gmra.mxu0 %v3617
      %v4550 = vpop.f32.mrf.mxu0
      %v4551 = vadd.f32 %v4462, %v4550
      %v4552 = vpop.f32.mrf.mxu0
      %v4553 = vadd.f32 %v4464, %v4552
      %4554 = vdwg.mxu0
      %4555 = vmatpush.bf16.msra.mxu0 %v4094
      %4556 = vmatpush.bf16.msra.mxu0 %v4093
      %4557 = vmatpush.bf16.msra.mxu0 %v4092
      %4558 = vmatpush.bf16.msra.mxu0 %v4091
      %4559 = vmatpush.bf16.msra.mxu0 %v4090
      %4560 = vmatpush.bf16.msra.mxu0 %v4089
      %4561 = vmatpush.bf16.msra.mxu0 %v4088
      %4562 = vmatpush.bf16.msra.mxu0 %v4087
      %4563 = vmatmul.bf16.gmra.mxu0 %v3483
      %v4564 = vpop.f32.mrf.mxu0
      %v4565 = vadd.f32 %v4476, %v4564
      %v4566 = vpop.f32.mrf.mxu0
      %v4567 = vadd.f32 %v4478, %v4566
      %4568 = vmatmul.bf16.gmra.mxu0 %v3492
      %v4569 = vpop.f32.mrf.mxu0
      %v4570 = vadd.f32 %v4481, %v4569
      %v4571 = vpop.f32.mrf.mxu0
      %v4572 = vadd.f32 %v4483, %v4571
      %4573 = vmatmul.bf16.gmra.mxu0 %v3501
      %v4574 = vpop.f32.mrf.mxu0
      %v4575 = vadd.f32 %v4486, %v4574
      %v4576 = vpop.f32.mrf.mxu0
      %v4577 = vadd.f32 %v4488, %v4576
      %4578 = vmatmul.bf16.gmra.mxu0 %v3510
      %v4579 = vpop.f32.mrf.mxu0
      %v4580 = vadd.f32 %v4491, %v4579
      %v4581 = vpop.f32.mrf.mxu0
      %v4582 = vadd.f32 %v4493, %v4581
      %4583 = vmatmul.bf16.gmra.mxu0 %v3519
      %v4584 = vpop.f32.mrf.mxu0
      %v4585 = vadd.f32 %v4496, %v4584
      %v4586 = vpop.f32.mrf.mxu0
      %v4587 = vadd.f32 %v4498, %v4586
      %4588 = vmatmul.bf16.gmra.mxu0 %v3528
      %v4589 = vpop.f32.mrf.mxu0
      %v4590 = vadd.f32 %v4501, %v4589
      %v4591 = vpop.f32.mrf.mxu0
      %v4592 = vadd.f32 %v4503, %v4591
      %4593 = vmatmul.bf16.gmra.mxu0 %v3537
      %v4594 = vpop.f32.mrf.mxu0
      %v4595 = vadd.f32 %v4506, %v4594
      %v4596 = vpop.f32.mrf.mxu0
      %v4597 = vadd.f32 %v4508, %v4596
      %4598 = vmatmul.bf16.gmra.mxu0 %v3546
      %v4599 = vpop.f32.mrf.mxu0
      %v4600 = vadd.f32 %v4511, %v4599
      %v4601 = vpop.f32.mrf.mxu0
      %v4602 = vadd.f32 %v4513, %v4601
      %4603 = vmatmul.bf16.gmra.mxu0 %v3555
      %v4604 = vpop.f32.mrf.mxu0
      %v4605 = vadd.f32 %v4516, %v4604
      %v4606 = vpop.f32.mrf.mxu0
      %v4607 = vadd.f32 %v4518, %v4606
      %4608 = vmatmul.bf16.gmra.mxu0 %v3564
      %v4609 = vpop.f32.mrf.mxu0
      %v4610 = vadd.f32 %v4521, %v4609
      %v4611 = vpop.f32.mrf.mxu0
      %v4612 = vadd.f32 %v4523, %v4611
      %4613 = vmatmul.bf16.gmra.mxu0 %v3573
      %v4614 = vpop.f32.mrf.mxu0
      %v4615 = vadd.f32 %v4526, %v4614
      %v4616 = vpop.f32.mrf.mxu0
      %v4617 = vadd.f32 %v4528, %v4616
      %4618 = vmatmul.bf16.gmra.mxu0 %v3582
      %v4619 = vpop.f32.mrf.mxu0
      %v4620 = vadd.f32 %v4531, %v4619
      %v4621 = vpop.f32.mrf.mxu0
      %v4622 = vadd.f32 %v4533, %v4621
      %4623 = vmatmul.bf16.gmra.mxu0 %v3591
      %v4624 = vpop.f32.mrf.mxu0
      %v4625 = vadd.f32 %v4536, %v4624
      %v4626 = vpop.f32.mrf.mxu0
      %v4627 = vadd.f32 %v4538, %v4626
      %4628 = vmatmul.bf16.gmra.mxu0 %v3600
      %v4629 = vpop.f32.mrf.mxu0
      %v4630 = vadd.f32 %v4541, %v4629
      %v4631 = vpop.f32.mrf.mxu0
      %v4632 = vadd.f32 %v4543, %v4631
      %4633 = vmatmul.bf16.gmra.mxu0 %v3609
      %v4634 = vpop.f32.mrf.mxu0
      %v4635 = vadd.f32 %v4546, %v4634
      %v4636 = vpop.f32.mrf.mxu0
      %v4637 = vadd.f32 %v4548, %v4636
      %4638 = vmatmul.bf16.gmra.mxu0 %v3618
      %v4639 = vpop.f32.mrf.mxu0
      %v4640 = vadd.f32 %v4551, %v4639
      %v4641 = vpop.f32.mrf.mxu0
      %v4642 = vadd.f32 %v4553, %v4641
      %4643 = vdwg.mxu0
      %4644 = vmatpush.bf16.msra.mxu0 %v4102
      %4645 = vmatpush.bf16.msra.mxu0 %v4101
      %4646 = vmatpush.bf16.msra.mxu0 %v4100
      %4647 = vmatpush.bf16.msra.mxu0 %v4099
      %4648 = vmatpush.bf16.msra.mxu0 %v4098
      %4649 = vmatpush.bf16.msra.mxu0 %v4097
      %4650 = vmatpush.bf16.msra.mxu0 %v4096
      %4651 = vmatpush.bf16.msra.mxu0 %v4095
      %4652 = vmatmul.bf16.gmra.mxu0 %v3484
      %v4653 = vpop.f32.mrf.mxu0
      %v4654 = vadd.f32 %v4565, %v4653
      %v4655 = vpop.f32.mrf.mxu0
      %v4656 = vadd.f32 %v4567, %v4655
      %4657 = vmatmul.bf16.gmra.mxu0 %v3493
      %v4658 = vpop.f32.mrf.mxu0
      %v4659 = vadd.f32 %v4570, %v4658
      %v4660 = vpop.f32.mrf.mxu0
      %v4661 = vadd.f32 %v4572, %v4660
      %4662 = vmatmul.bf16.gmra.mxu0 %v3502
      %v4663 = vpop.f32.mrf.mxu0
      %v4664 = vadd.f32 %v4575, %v4663
      %v4665 = vpop.f32.mrf.mxu0
      %v4666 = vadd.f32 %v4577, %v4665
      %4667 = vmatmul.bf16.gmra.mxu0 %v3511
      %v4668 = vpop.f32.mrf.mxu0
      %v4669 = vadd.f32 %v4580, %v4668
      %v4670 = vpop.f32.mrf.mxu0
      %v4671 = vadd.f32 %v4582, %v4670
      %4672 = vmatmul.bf16.gmra.mxu0 %v3520
      %v4673 = vpop.f32.mrf.mxu0
      %v4674 = vadd.f32 %v4585, %v4673
      %v4675 = vpop.f32.mrf.mxu0
      %v4676 = vadd.f32 %v4587, %v4675
      %4677 = vmatmul.bf16.gmra.mxu0 %v3529
      %v4678 = vpop.f32.mrf.mxu0
      %v4679 = vadd.f32 %v4590, %v4678
      %v4680 = vpop.f32.mrf.mxu0
      %v4681 = vadd.f32 %v4592, %v4680
      %4682 = vmatmul.bf16.gmra.mxu0 %v3538
      %v4683 = vpop.f32.mrf.mxu0
      %v4684 = vadd.f32 %v4595, %v4683
      %v4685 = vpop.f32.mrf.mxu0
      %v4686 = vadd.f32 %v4597, %v4685
      %4687 = vmatmul.bf16.gmra.mxu0 %v3547
      %v4688 = vpop.f32.mrf.mxu0
      %v4689 = vadd.f32 %v4600, %v4688
      %v4690 = vpop.f32.mrf.mxu0
      %v4691 = vadd.f32 %v4602, %v4690
      %4692 = vmatmul.bf16.gmra.mxu0 %v3556
      %v4693 = vpop.f32.mrf.mxu0
      %v4694 = vadd.f32 %v4605, %v4693
      %v4695 = vpop.f32.mrf.mxu0
      %v4696 = vadd.f32 %v4607, %v4695
      %4697 = vmatmul.bf16.gmra.mxu0 %v3565
      %v4698 = vpop.f32.mrf.mxu0
      %v4699 = vadd.f32 %v4610, %v4698
      %v4700 = vpop.f32.mrf.mxu0
      %v4701 = vadd.f32 %v4612, %v4700
      %4702 = vmatmul.bf16.gmra.mxu0 %v3574
      %v4703 = vpop.f32.mrf.mxu0
      %v4704 = vadd.f32 %v4615, %v4703
      %v4705 = vpop.f32.mrf.mxu0
      %v4706 = vadd.f32 %v4617, %v4705
      %4707 = vmatmul.bf16.gmra.mxu0 %v3583
      %v4708 = vpop.f32.mrf.mxu0
      %v4709 = vadd.f32 %v4620, %v4708
      %v4710 = vpop.f32.mrf.mxu0
      %v4711 = vadd.f32 %v4622, %v4710
      %4712 = vmatmul.bf16.gmra.mxu0 %v3592
      %v4713 = vpop.f32.mrf.mxu0
      %v4714 = vadd.f32 %v4625, %v4713
      %v4715 = vpop.f32.mrf.mxu0
      %v4716 = vadd.f32 %v4627, %v4715
      %4717 = vmatmul.bf16.gmra.mxu0 %v3601
      %v4718 = vpop.f32.mrf.mxu0
      %v4719 = vadd.f32 %v4630, %v4718
      %v4720 = vpop.f32.mrf.mxu0
      %v4721 = vadd.f32 %v4632, %v4720
      %4722 = vmatmul.bf16.gmra.mxu0 %v3610
      %v4723 = vpop.f32.mrf.mxu0
      %v4724 = vadd.f32 %v4635, %v4723
      %v4725 = vpop.f32.mrf.mxu0
      %v4726 = vadd.f32 %v4637, %v4725
      %4727 = vmatmul.bf16.gmra.mxu0 %v3619
      %v4728 = vpop.f32.mrf.mxu0
      %v4729 = vadd.f32 %v4640, %v4728
      %v4730 = vpop.f32.mrf.mxu0
      %v4731 = vadd.f32 %v4642, %v4730
      %4732 = vdwg.mxu0
      %4733 = vmatpush.bf16.msra.mxu0 %v4110
      %4734 = vmatpush.bf16.msra.mxu0 %v4109
      %4735 = vmatpush.bf16.msra.mxu0 %v4108
      %4736 = vmatpush.bf16.msra.mxu0 %v4107
      %4737 = vmatpush.bf16.msra.mxu0 %v4106
      %4738 = vmatpush.bf16.msra.mxu0 %v4105
      %4739 = vmatpush.bf16.msra.mxu0 %v4104
      %4740 = vmatpush.bf16.msra.mxu0 %v4103
      %4741 = vmatmul.bf16.gmra.mxu0 %v3485
      %v4742 = vpop.f32.mrf.mxu0
      %v4743 = vadd.f32 %v4654, %v4742
      %v4744 = vpop.f32.mrf.mxu0
      %v4745 = vadd.f32 %v4656, %v4744
      %4746 = vmatmul.bf16.gmra.mxu0 %v3494
      %v4747 = vpop.f32.mrf.mxu0
      %v4748 = vadd.f32 %v4659, %v4747
      %v4749 = vpop.f32.mrf.mxu0
      %v4750 = vadd.f32 %v4661, %v4749
      %4751 = vmatmul.bf16.gmra.mxu0 %v3503
      %v4752 = vpop.f32.mrf.mxu0
      %v4753 = vadd.f32 %v4664, %v4752
      %v4754 = vpop.f32.mrf.mxu0
      %v4755 = vadd.f32 %v4666, %v4754
      %4756 = vmatmul.bf16.gmra.mxu0 %v3512
      %v4757 = vpop.f32.mrf.mxu0
      %v4758 = vadd.f32 %v4669, %v4757
      %v4759 = vpop.f32.mrf.mxu0
      %v4760 = vadd.f32 %v4671, %v4759
      %4761 = vmatmul.bf16.gmra.mxu0 %v3521
      %v4762 = vpop.f32.mrf.mxu0
      %v4763 = vadd.f32 %v4674, %v4762
      %v4764 = vpop.f32.mrf.mxu0
      %v4765 = vadd.f32 %v4676, %v4764
      %4766 = vmatmul.bf16.gmra.mxu0 %v3530
      %v4767 = vpop.f32.mrf.mxu0
      %v4768 = vadd.f32 %v4679, %v4767
      %v4769 = vpop.f32.mrf.mxu0
      %v4770 = vadd.f32 %v4681, %v4769
      %4771 = vmatmul.bf16.gmra.mxu0 %v3539
      %v4772 = vpop.f32.mrf.mxu0
      %v4773 = vadd.f32 %v4684, %v4772
      %v4774 = vpop.f32.mrf.mxu0
      %v4775 = vadd.f32 %v4686, %v4774
      %4776 = vmatmul.bf16.gmra.mxu0 %v3548
      %v4777 = vpop.f32.mrf.mxu0
      %v4778 = vadd.f32 %v4689, %v4777
      %v4779 = vpop.f32.mrf.mxu0
      %v4780 = vadd.f32 %v4691, %v4779
      %4781 = vmatmul.bf16.gmra.mxu0 %v3557
      %v4782 = vpop.f32.mrf.mxu0
      %v4783 = vadd.f32 %v4694, %v4782
      %v4784 = vpop.f32.mrf.mxu0
      %v4785 = vadd.f32 %v4696, %v4784
      %4786 = vmatmul.bf16.gmra.mxu0 %v3566
      %v4787 = vpop.f32.mrf.mxu0
      %v4788 = vadd.f32 %v4699, %v4787
      %v4789 = vpop.f32.mrf.mxu0
      %v4790 = vadd.f32 %v4701, %v4789
      %4791 = vmatmul.bf16.gmra.mxu0 %v3575
      %v4792 = vpop.f32.mrf.mxu0
      %v4793 = vadd.f32 %v4704, %v4792
      %v4794 = vpop.f32.mrf.mxu0
      %v4795 = vadd.f32 %v4706, %v4794
      %4796 = vmatmul.bf16.gmra.mxu0 %v3584
      %v4797 = vpop.f32.mrf.mxu0
      %v4798 = vadd.f32 %v4709, %v4797
      %v4799 = vpop.f32.mrf.mxu0
      %v4800 = vadd.f32 %v4711, %v4799
      %4801 = vmatmul.bf16.gmra.mxu0 %v3593
      %v4802 = vpop.f32.mrf.mxu0
      %v4803 = vadd.f32 %v4714, %v4802
      %v4804 = vpop.f32.mrf.mxu0
      %v4805 = vadd.f32 %v4716, %v4804
      %4806 = vmatmul.bf16.gmra.mxu0 %v3602
      %v4807 = vpop.f32.mrf.mxu0
      %v4808 = vadd.f32 %v4719, %v4807
      %v4809 = vpop.f32.mrf.mxu0
      %v4810 = vadd.f32 %v4721, %v4809
      %4811 = vmatmul.bf16.gmra.mxu0 %v3611
      %v4812 = vpop.f32.mrf.mxu0
      %v4813 = vadd.f32 %v4724, %v4812
      %v4814 = vpop.f32.mrf.mxu0
      %v4815 = vadd.f32 %v4726, %v4814
      %4816 = vmatmul.bf16.gmra.mxu0 %v3620
      %v4817 = vpop.f32.mrf.mxu0
      %v4818 = vadd.f32 %v4729, %v4817
      %v4819 = vpop.f32.mrf.mxu0
      %v4820 = vadd.f32 %v4731, %v4819
      %4821 = vdwg.mxu0
      %4822 = vmatpush.bf16.msra.mxu0 %v4118
      %4823 = vmatpush.bf16.msra.mxu0 %v4117
      %4824 = vmatpush.bf16.msra.mxu0 %v4116
      %4825 = vmatpush.bf16.msra.mxu0 %v4115
      %4826 = vmatpush.bf16.msra.mxu0 %v4114
      %4827 = vmatpush.bf16.msra.mxu0 %v4113
      %4828 = vmatpush.bf16.msra.mxu0 %v4112
      %4829 = vmatpush.bf16.msra.mxu0 %v4111
      %4830 = vmatmul.bf16.gmra.mxu0 %v3486
      %v4831 = vpop.f32.mrf.mxu0
      %v4832 = vadd.f32 %v4743, %v4831
      %v4833 = vpop.f32.mrf.mxu0
      %v4834 = vadd.f32 %v4745, %v4833
      %4835 = vmatmul.bf16.gmra.mxu0 %v3495
      %v4836 = vpop.f32.mrf.mxu0
      %v4837 = vadd.f32 %v4748, %v4836
      %v4838 = vpop.f32.mrf.mxu0
      %v4839 = vadd.f32 %v4750, %v4838
      %4840 = vmatmul.bf16.gmra.mxu0 %v3504
      %v4841 = vpop.f32.mrf.mxu0
      %v4842 = vadd.f32 %v4753, %v4841
      %v4843 = vpop.f32.mrf.mxu0
      %v4844 = vadd.f32 %v4755, %v4843
      %4845 = vmatmul.bf16.gmra.mxu0 %v3513
      %v4846 = vpop.f32.mrf.mxu0
      %v4847 = vadd.f32 %v4758, %v4846
      %v4848 = vpop.f32.mrf.mxu0
      %v4849 = vadd.f32 %v4760, %v4848
      %4850 = vmatmul.bf16.gmra.mxu0 %v3522
      %v4851 = vpop.f32.mrf.mxu0
      %v4852 = vadd.f32 %v4763, %v4851
      %v4853 = vpop.f32.mrf.mxu0
      %v4854 = vadd.f32 %v4765, %v4853
      %4855 = vmatmul.bf16.gmra.mxu0 %v3531
      %v4856 = vpop.f32.mrf.mxu0
      %v4857 = vadd.f32 %v4768, %v4856
      %v4858 = vpop.f32.mrf.mxu0
      %v4859 = vadd.f32 %v4770, %v4858
      %4860 = vmatmul.bf16.gmra.mxu0 %v3540
      %v4861 = vpop.f32.mrf.mxu0
      %v4862 = vadd.f32 %v4773, %v4861
      %v4863 = vpop.f32.mrf.mxu0
      %v4864 = vadd.f32 %v4775, %v4863
      %4865 = vmatmul.bf16.gmra.mxu0 %v3549
      %v4866 = vpop.f32.mrf.mxu0
      %v4867 = vadd.f32 %v4778, %v4866
      %v4868 = vpop.f32.mrf.mxu0
      %v4869 = vadd.f32 %v4780, %v4868
      %4870 = vmatmul.bf16.gmra.mxu0 %v3558
      %v4871 = vpop.f32.mrf.mxu0
      %v4872 = vadd.f32 %v4783, %v4871
      %v4873 = vpop.f32.mrf.mxu0
      %v4874 = vadd.f32 %v4785, %v4873
      %4875 = vmatmul.bf16.gmra.mxu0 %v3567
      %v4876 = vpop.f32.mrf.mxu0
      %v4877 = vadd.f32 %v4788, %v4876
      %v4878 = vpop.f32.mrf.mxu0
      %v4879 = vadd.f32 %v4790, %v4878
      %4880 = vmatmul.bf16.gmra.mxu0 %v3576
      %v4881 = vpop.f32.mrf.mxu0
      %v4882 = vadd.f32 %v4793, %v4881
      %v4883 = vpop.f32.mrf.mxu0
      %v4884 = vadd.f32 %v4795, %v4883
      %4885 = vmatmul.bf16.gmra.mxu0 %v3585
      %v4886 = vpop.f32.mrf.mxu0
      %v4887 = vadd.f32 %v4798, %v4886
      %v4888 = vpop.f32.mrf.mxu0
      %v4889 = vadd.f32 %v4800, %v4888
      %4890 = vmatmul.bf16.gmra.mxu0 %v3594
      %v4891 = vpop.f32.mrf.mxu0
      %v4892 = vadd.f32 %v4803, %v4891
      %v4893 = vpop.f32.mrf.mxu0
      %v4894 = vadd.f32 %v4805, %v4893
      %4895 = vmatmul.bf16.gmra.mxu0 %v3603
      %v4896 = vpop.f32.mrf.mxu0
      %v4897 = vadd.f32 %v4808, %v4896
      %v4898 = vpop.f32.mrf.mxu0
      %v4899 = vadd.f32 %v4810, %v4898
      %4900 = vmatmul.bf16.gmra.mxu0 %v3612
      %v4901 = vpop.f32.mrf.mxu0
      %v4902 = vadd.f32 %v4813, %v4901
      %v4903 = vpop.f32.mrf.mxu0
      %v4904 = vadd.f32 %v4815, %v4903
      %4905 = vmatmul.bf16.gmra.mxu0 %v3621
      %v4906 = vpop.f32.mrf.mxu0
      %v4907 = vadd.f32 %v4818, %v4906
      %v4908 = vpop.f32.mrf.mxu0
      %v4909 = vadd.f32 %v4820, %v4908
      %4910 = vdwg.mxu0
      %4911 = vmatpush.bf16.msra.mxu0 %v4126
      %4912 = vmatpush.bf16.msra.mxu0 %v4125
      %4913 = vmatpush.bf16.msra.mxu0 %v4124
      %4914 = vmatpush.bf16.msra.mxu0 %v4123
      %4915 = vmatpush.bf16.msra.mxu0 %v4122
      %4916 = vmatpush.bf16.msra.mxu0 %v4121
      %4917 = vmatpush.bf16.msra.mxu0 %v4120
      %4918 = vmatpush.bf16.msra.mxu0 %v4119
      %4919 = vmatmul.bf16.gmra.mxu0 %v3487
      %v4920 = vpop.f32.mrf.mxu0
      %v4921 = vadd.f32 %v4832, %v4920
      %v4922 = vpop.f32.mrf.mxu0
      %v4923 = vadd.f32 %v4834, %v4922
      %4924 = vmatmul.bf16.gmra.mxu0 %v3496
      %v4925 = vpop.f32.mrf.mxu0
      %v4926 = vadd.f32 %v4837, %v4925
      %v4927 = vpop.f32.mrf.mxu0
      %v4928 = vadd.f32 %v4839, %v4927
      %4929 = vmatmul.bf16.gmra.mxu0 %v3505
      %v4930 = vpop.f32.mrf.mxu0
      %v4931 = vadd.f32 %v4842, %v4930
      %v4932 = vpop.f32.mrf.mxu0
      %v4933 = vadd.f32 %v4844, %v4932
      %4934 = vmatmul.bf16.gmra.mxu0 %v3514
      %v4935 = vpop.f32.mrf.mxu0
      %v4936 = vadd.f32 %v4847, %v4935
      %v4937 = vpop.f32.mrf.mxu0
      %v4938 = vadd.f32 %v4849, %v4937
      %4939 = vmatmul.bf16.gmra.mxu0 %v3523
      %v4940 = vpop.f32.mrf.mxu0
      %v4941 = vadd.f32 %v4852, %v4940
      %v4942 = vpop.f32.mrf.mxu0
      %v4943 = vadd.f32 %v4854, %v4942
      %4944 = vmatmul.bf16.gmra.mxu0 %v3532
      %v4945 = vpop.f32.mrf.mxu0
      %v4946 = vadd.f32 %v4857, %v4945
      %v4947 = vpop.f32.mrf.mxu0
      %v4948 = vadd.f32 %v4859, %v4947
      %4949 = vmatmul.bf16.gmra.mxu0 %v3541
      %v4950 = vpop.f32.mrf.mxu0
      %v4951 = vadd.f32 %v4862, %v4950
      %v4952 = vpop.f32.mrf.mxu0
      %v4953 = vadd.f32 %v4864, %v4952
      %4954 = vmatmul.bf16.gmra.mxu0 %v3550
      %v4955 = vpop.f32.mrf.mxu0
      %v4956 = vadd.f32 %v4867, %v4955
      %v4957 = vpop.f32.mrf.mxu0
      %v4958 = vadd.f32 %v4869, %v4957
      %4959 = vmatmul.bf16.gmra.mxu0 %v3559
      %v4960 = vpop.f32.mrf.mxu0
      %v4961 = vadd.f32 %v4872, %v4960
      %v4962 = vpop.f32.mrf.mxu0
      %v4963 = vadd.f32 %v4874, %v4962
      %4964 = vmatmul.bf16.gmra.mxu0 %v3568
      %v4965 = vpop.f32.mrf.mxu0
      %v4966 = vadd.f32 %v4877, %v4965
      %v4967 = vpop.f32.mrf.mxu0
      %v4968 = vadd.f32 %v4879, %v4967
      %4969 = vmatmul.bf16.gmra.mxu0 %v3577
      %v4970 = vpop.f32.mrf.mxu0
      %v4971 = vadd.f32 %v4882, %v4970
      %v4972 = vpop.f32.mrf.mxu0
      %v4973 = vadd.f32 %v4884, %v4972
      %4974 = vmatmul.bf16.gmra.mxu0 %v3586
      %v4975 = vpop.f32.mrf.mxu0
      %v4976 = vadd.f32 %v4887, %v4975
      %v4977 = vpop.f32.mrf.mxu0
      %v4978 = vadd.f32 %v4889, %v4977
      %4979 = vmatmul.bf16.gmra.mxu0 %v3595
      %v4980 = vpop.f32.mrf.mxu0
      %v4981 = vadd.f32 %v4892, %v4980
      %v4982 = vpop.f32.mrf.mxu0
      %v4983 = vadd.f32 %v4894, %v4982
      %4984 = vmatmul.bf16.gmra.mxu0 %v3604
      %v4985 = vpop.f32.mrf.mxu0
      %v4986 = vadd.f32 %v4897, %v4985
      %v4987 = vpop.f32.mrf.mxu0
      %v4988 = vadd.f32 %v4899, %v4987
      %4989 = vmatmul.bf16.gmra.mxu0 %v3613
      %v4990 = vpop.f32.mrf.mxu0
      %v4991 = vadd.f32 %v4902, %v4990
      %v4992 = vpop.f32.mrf.mxu0
      %v4993 = vadd.f32 %v4904, %v4992
      %4994 = vmatmul.bf16.gmra.mxu0 %v3622
      %v4995 = vpop.f32.mrf.mxu0
      %v4996 = vadd.f32 %v4907, %v4995
      %v4997 = vpop.f32.mrf.mxu0
      %v4998 = vadd.f32 %v4909, %v4997
      %4999 = vdwg.mxu0
      %v5000 = vmax.f32 %v4921, 0.0
      %v5001 = vmax.f32 %v4923, 0.0
      %v5002 = vmax.f32 %v4926, 0.0
      %v5003 = vmax.f32 %v4928, 0.0
      %v5004 = vmax.f32 %v4931, 0.0
      %v5005 = vmax.f32 %v4933, 0.0
      %v5006 = vmax.f32 %v4936, 0.0
      %v5007 = vmax.f32 %v4938, 0.0
      %v5008 = vmax.f32 %v4941, 0.0
      %v5009 = vmax.f32 %v4943, 0.0
      %v5010 = vmax.f32 %v4946, 0.0
      %v5011 = vmax.f32 %v4948, 0.0
      %v5012 = vmax.f32 %v4951, 0.0
      %v5013 = vmax.f32 %v4953, 0.0
      %v5014 = vmax.f32 %v4956, 0.0
      %v5015 = vmax.f32 %v4958, 0.0
      %v5016 = vmax.f32 %v4961, 0.0
      %v5017 = vmax.f32 %v4963, 0.0
      %v5018 = vmax.f32 %v4966, 0.0
      %v5019 = vmax.f32 %v4968, 0.0
      %v5020 = vmax.f32 %v4971, 0.0
      %v5021 = vmax.f32 %v4973, 0.0
      %v5022 = vmax.f32 %v4976, 0.0
      %v5023 = vmax.f32 %v4978, 0.0
      %v5024 = vmax.f32 %v4981, 0.0
      %v5025 = vmax.f32 %v4983, 0.0
      %v5026 = vmax.f32 %v4986, 0.0
      %v5027 = vmax.f32 %v4988, 0.0
      %v5028 = vmax.f32 %v4991, 0.0
      %v5029 = vmax.f32 %v4993, 0.0
      %v5030 = vmax.f32 %v4996, 0.0
      %v5031 = vmax.f32 %v4998, 0.0
      %p5032 = scmp.eq.s32.totalorder %s19, 1
      // Predicated region
      $region41: #{repblock_forward_nchw.1} parent=31 // pred_check
        %p5033 = pneg %p5032
      $region42: #{repblock_forward_nchw.1} parent=31 // pred_check_branch
        %5035 = sbr.rel (%p5033) target = $region44
      $region43: #{repblock_forward_nchw.1} parent=31 // pred_region
        %5036 = vst [vmem:[%s216] sm:$0xff] %v5000
        %5037 = vst [vmem:[%s216 + $0x8] sm:$0xff] %v5001
        %5038 = vst [vmem:[%s216 + $0x10] sm:$0xff] %v5002
        %5039 = vst [vmem:[%s216 + $0x18] sm:$0xff] %v5003
        %5040 = vst [vmem:[%s216 + $0x20] sm:$0xff] %v5004
        %5041 = vst [vmem:[%s216 + $0x28] sm:$0xff] %v5005
        %5042 = vst [vmem:[%s216 + $0x30] sm:$0xff] %v5006
        %5043 = vst [vmem:[%s216 + $0x38] sm:$0xff] %v5007
        %5044 = vst [vmem:[%s216 + $0x40] sm:$0xff] %v5008
        %5045 = vst [vmem:[%s216 + $0x48] sm:$0xff] %v5009
        %5046 = vst [vmem:[%s216 + $0x50] sm:$0xff] %v5010
        %5047 = vst [vmem:[%s216 + $0x58] sm:$0xff] %v5011
        %5048 = vst [vmem:[%s216 + $0x60] sm:$0xff] %v5012
        %5049 = vst [vmem:[%s216 + $0x68] sm:$0xff] %v5013
        %5050 = vst [vmem:[%s216 + $0x70] sm:$0xff] %v5014
        %5051 = vst [vmem:[%s216 + $0x78] sm:$0xff] %v5015
        %5052 = vst [vmem:[%s216 + $0x80] sm:$0xff] %v5016
        %5053 = vst [vmem:[%s216 + $0x88] sm:$0xff] %v5017
        %5054 = vst [vmem:[%s216 + $0x90] sm:$0xff] %v5018
        %5055 = vst [vmem:[%s216 + $0x98] sm:$0xff] %v5019
        %5056 = vst [vmem:[%s216 + $0xa0] sm:$0xff] %v5020
        %5057 = vst [vmem:[%s216 + $0xa8] sm:$0xff] %v5021
        %5058 = vst [vmem:[%s216 + $0xb0] sm:$0xff] %v5022
        %5059 = vst [vmem:[%s216 + $0xb8] sm:$0xff] %v5023
        %5060 = vst [vmem:[%s216 + $0xc0] sm:$0xff] %v5024
        %5061 = vst [vmem:[%s216 + $0xc8] sm:$0xff] %v5025
        %5062 = vst [vmem:[%s216 + $0xd0] sm:$0xff] %v5026
        %5063 = vst [vmem:[%s216 + $0xd8] sm:$0xff] %v5027
        %5064 = vst [vmem:[%s216 + $0xe0] sm:$0xff] %v5028
        %5065 = vst [vmem:[%s216 + $0xe8] sm:$0xff] %v5029
        %5066 = vst [vmem:[%s216 + $0xf0] sm:$0xff] %v5030
        %5067 = vst [vmem:[%s216 + $0xf8] sm:$0xff] %v5031
      $region44: #{repblock_forward_nchw.1} parent=31 // pred_fallthru
        _
      %p5068 = scmp.lt.s32.totalorder %s19, 1
      // Predicated region
      $region45: #{repblock_forward_nchw.1} parent=31 // pred_check
        %p5069 = pneg %p5068
      $region46: #{repblock_forward_nchw.1} parent=31 // pred_check_branch
        %5071 = sbr.rel (%p5069) target = $region48
      $region47: #{repblock_forward_nchw.1} parent=31 // pred_region
        %p5072 = scmp.lt.s32.totalorder %s19, 0
        %s5073 = ssub.s32 0, %s19
        %s5074 = scalar_select %p5072, %s5073, %s19
        %s5075 = sand.u32 %s5074, 1
        %s5076 = ssub.s32 0, %s5075
        %s5077 = scalar_select %p5072, %s5076, %s5075
        %p5078 = scmp.ne.s32.totalorder %s5077, 0
        %p5079 = scmp.lt.s32.totalorder %s5077, 0
        %p5080 = pnand %p5079, %p5078
        %p5081 = pneg %p5080
        %s5082 = sadd.s32 %s5077, 2
        %s5083 = scalar_select %p5081, %s5082, %s5077
        %v5084 = vpack.c.bf16 %v5000, %v5000
        %v5085 = vpack.c.bf16 %v5001, %v5001
        %v5086 = vpack.c.bf16 %v5002, %v5002
        %v5087 = vpack.c.bf16 %v5003, %v5003
        %v5088 = vpack.c.bf16 %v5004, %v5004
        %v5089 = vpack.c.bf16 %v5005, %v5005
        %v5090 = vpack.c.bf16 %v5006, %v5006
        %v5091 = vpack.c.bf16 %v5007, %v5007
        %v5092 = vpack.c.bf16 %v5008, %v5008
        %v5093 = vpack.c.bf16 %v5009, %v5009
        %v5094 = vpack.c.bf16 %v5010, %v5010
        %v5095 = vpack.c.bf16 %v5011, %v5011
        %v5096 = vpack.c.bf16 %v5012, %v5012
        %v5097 = vpack.c.bf16 %v5013, %v5013
        %v5098 = vpack.c.bf16 %v5014, %v5014
        %v5099 = vpack.c.bf16 %v5015, %v5015
        %v5100 = vpack.c.bf16 %v5016, %v5016
        %v5101 = vpack.c.bf16 %v5017, %v5017
        %v5102 = vpack.c.bf16 %v5018, %v5018
        %v5103 = vpack.c.bf16 %v5019, %v5019
        %v5104 = vpack.c.bf16 %v5020, %v5020
        %v5105 = vpack.c.bf16 %v5021, %v5021
        %v5106 = vpack.c.bf16 %v5022, %v5022
        %v5107 = vpack.c.bf16 %v5023, %v5023
        %v5108 = vpack.c.bf16 %v5024, %v5024
        %v5109 = vpack.c.bf16 %v5025, %v5025
        %v5110 = vpack.c.bf16 %v5026, %v5026
        %v5111 = vpack.c.bf16 %v5027, %v5027
        %v5112 = vpack.c.bf16 %v5028, %v5028
        %v5113 = vpack.c.bf16 %v5029, %v5029
        %v5114 = vpack.c.bf16 %v5030, %v5030
        %v5115 = vpack.c.bf16 %v5031, %v5031
        %s5116 = smul.u32 %s5083, 54
        %s5117 = smul.addr %s5116, 4
        %s5118 = scalar_lea.vmem [#allocation2], %s5117
        %vm5119 = vsmask.f32 256
        %vm5120 = vsmask.f32 4368
        %vm5121 = vmor %vm5119, %vm5120
        %v5123 = vshrl.u32 %v5084, 16
        %v5125 = vrot.slane %v5123, 7
        %v5126 = vshll.u32 %v5084, 16
        %v5128 = vor.u32 %v5125, %v5126
        %v5129 = vrot.slane %v5125, 4
        %v5131 = vshrl.u32 %v5085, 16
        %v5133 = vrot.slane %v5131, 7
        %v5134 = vshll.u32 %v5085, 16
        %v5136 = vor.u32 %v5133, %v5134
        %v5137 = vsel %vm5121, %v5129, %v5136
        %v5138 = vrot.slane %v5133, 4
        %v5140 = vshrl.u32 %v5086, 16
        %v5142 = vrot.slane %v5140, 7
        %v5143 = vshll.u32 %v5086, 16
        %v5145 = vor.u32 %v5142, %v5143
        %v5146 = vrot.slane %v5142, 4
        %v5148 = vshrl.u32 %v5087, 16
        %v5150 = vrot.slane %v5148, 7
        %v5151 = vshll.u32 %v5087, 16
        %v5153 = vor.u32 %v5150, %v5151
        %v5154 = vsel %vm5121, %v5146, %v5153
        %v5155 = vrot.slane %v5150, 4
        %v5157 = vshrl.u32 %v5088, 16
        %v5159 = vrot.slane %v5157, 7
        %v5160 = vshll.u32 %v5088, 16
        %v5162 = vor.u32 %v5159, %v5160
        %v5163 = vrot.slane %v5159, 4
        %v5165 = vshrl.u32 %v5089, 16
        %v5167 = vrot.slane %v5165, 7
        %v5168 = vshll.u32 %v5089, 16
        %v5170 = vor.u32 %v5167, %v5168
        %v5171 = vsel %vm5121, %v5163, %v5170
        %v5172 = vrot.slane %v5167, 4
        %v5174 = vshrl.u32 %v5090, 16
        %v5176 = vrot.slane %v5174, 7
        %v5177 = vshll.u32 %v5090, 16
        %v5179 = vor.u32 %v5176, %v5177
        %v5180 = vrot.slane %v5176, 4
        %v5182 = vshrl.u32 %v5091, 16
        %v5184 = vrot.slane %v5182, 7
        %v5185 = vshll.u32 %v5091, 16
        %v5187 = vor.u32 %v5184, %v5185
        %v5188 = vsel %vm5121, %v5180, %v5187
        %v5189 = vrot.slane %v5184, 4
        %v5191 = vshrl.u32 %v5092, 16
        %v5193 = vrot.slane %v5191, 7
        %v5194 = vshll.u32 %v5092, 16
        %v5196 = vor.u32 %v5193, %v5194
        %v5197 = vrot.slane %v5193, 4
        %v5199 = vshrl.u32 %v5093, 16
        %v5201 = vrot.slane %v5199, 7
        %v5202 = vshll.u32 %v5093, 16
        %v5204 = vor.u32 %v5201, %v5202
        %v5205 = vsel %vm5121, %v5197, %v5204
        %v5206 = vrot.slane %v5201, 4
        %v5208 = vshrl.u32 %v5094, 16
        %v5210 = vrot.slane %v5208, 7
        %v5211 = vshll.u32 %v5094, 16
        %v5213 = vor.u32 %v5210, %v5211
        %v5214 = vrot.slane %v5210, 4
        %v5216 = vshrl.u32 %v5095, 16
        %v5218 = vrot.slane %v5216, 7
        %v5219 = vshll.u32 %v5095, 16
        %v5221 = vor.u32 %v5218, %v5219
        %v5222 = vsel %vm5121, %v5214, %v5221
        %v5223 = vrot.slane %v5218, 4
        %v5225 = vshrl.u32 %v5096, 16
        %v5227 = vrot.slane %v5225, 7
        %v5228 = vshll.u32 %v5096, 16
        %v5230 = vor.u32 %v5227, %v5228
        %v5231 = vrot.slane %v5227, 4
        %v5233 = vshrl.u32 %v5097, 16
        %v5235 = vrot.slane %v5233, 7
        %v5236 = vshll.u32 %v5097, 16
        %v5238 = vor.u32 %v5235, %v5236
        %v5239 = vsel %vm5121, %v5231, %v5238
        %v5240 = vrot.slane %v5235, 4
        %v5242 = vshrl.u32 %v5098, 16
        %v5244 = vrot.slane %v5242, 7
        %v5245 = vshll.u32 %v5098, 16
        %v5247 = vor.u32 %v5244, %v5245
        %v5248 = vrot.slane %v5244, 4
        %v5250 = vshrl.u32 %v5099, 16
        %v5252 = vrot.slane %v5250, 7
        %v5253 = vshll.u32 %v5099, 16
        %v5255 = vor.u32 %v5252, %v5253
        %v5256 = vsel %vm5121, %v5248, %v5255
        %v5257 = vrot.slane %v5252, 4
        %v5259 = vshrl.u32 %v5100, 16
        %v5261 = vrot.slane %v5259, 7
        %v5262 = vshll.u32 %v5100, 16
        %v5264 = vor.u32 %v5261, %v5262
        %v5265 = vrot.slane %v5261, 4
        %v5267 = vshrl.u32 %v5101, 16
        %v5269 = vrot.slane %v5267, 7
        %v5270 = vshll.u32 %v5101, 16
        %v5272 = vor.u32 %v5269, %v5270
        %v5273 = vsel %vm5121, %v5265, %v5272
        %v5274 = vrot.slane %v5269, 4
        %v5276 = vshrl.u32 %v5102, 16
        %v5278 = vrot.slane %v5276, 7
        %v5279 = vshll.u32 %v5102, 16
        %v5281 = vor.u32 %v5278, %v5279
        %v5282 = vrot.slane %v5278, 4
        %v5284 = vshrl.u32 %v5103, 16
        %v5286 = vrot.slane %v5284, 7
        %v5287 = vshll.u32 %v5103, 16
        %v5289 = vor.u32 %v5286, %v5287
        %v5290 = vsel %vm5121, %v5282, %v5289
        %v5291 = vrot.slane %v5286, 4
        %v5293 = vshrl.u32 %v5104, 16
        %v5295 = vrot.slane %v5293, 7
        %v5296 = vshll.u32 %v5104, 16
        %v5298 = vor.u32 %v5295, %v5296
        %v5299 = vrot.slane %v5295, 4
        %v5301 = vshrl.u32 %v5105, 16
        %v5303 = vrot.slane %v5301, 7
        %v5304 = vshll.u32 %v5105, 16
        %v5306 = vor.u32 %v5303, %v5304
        %v5307 = vsel %vm5121, %v5299, %v5306
        %v5308 = vrot.slane %v5303, 4
        %v5310 = vshrl.u32 %v5106, 16
        %v5312 = vrot.slane %v5310, 7
        %v5313 = vshll.u32 %v5106, 16
        %v5315 = vor.u32 %v5312, %v5313
        %v5316 = vrot.slane %v5312, 4
        %v5318 = vshrl.u32 %v5107, 16
        %v5320 = vrot.slane %v5318, 7
        %v5321 = vshll.u32 %v5107, 16
        %v5323 = vor.u32 %v5320, %v5321
        %v5324 = vsel %vm5121, %v5316, %v5323
        %v5325 = vrot.slane %v5320, 4
        %v5327 = vshrl.u32 %v5108, 16
        %v5329 = vrot.slane %v5327, 7
        %v5330 = vshll.u32 %v5108, 16
        %v5332 = vor.u32 %v5329, %v5330
        %v5333 = vrot.slane %v5329, 4
        %v5335 = vshrl.u32 %v5109, 16
        %v5337 = vrot.slane %v5335, 7
        %v5338 = vshll.u32 %v5109, 16
        %v5340 = vor.u32 %v5337, %v5338
        %v5341 = vsel %vm5121, %v5333, %v5340
        %v5342 = vrot.slane %v5337, 4
        %v5344 = vshrl.u32 %v5110, 16
        %v5346 = vrot.slane %v5344, 7
        %v5347 = vshll.u32 %v5110, 16
        %v5349 = vor.u32 %v5346, %v5347
        %v5350 = vrot.slane %v5346, 4
        %v5352 = vshrl.u32 %v5111, 16
        %v5354 = vrot.slane %v5352, 7
        %v5355 = vshll.u32 %v5111, 16
        %v5357 = vor.u32 %v5354, %v5355
        %v5358 = vsel %vm5121, %v5350, %v5357
        %v5359 = vrot.slane %v5354, 4
        %v5361 = vshrl.u32 %v5112, 16
        %v5363 = vrot.slane %v5361, 7
        %v5364 = vshll.u32 %v5112, 16
        %v5366 = vor.u32 %v5363, %v5364
        %v5367 = vrot.slane %v5363, 4
        %v5369 = vshrl.u32 %v5113, 16
        %v5371 = vrot.slane %v5369, 7
        %v5372 = vshll.u32 %v5113, 16
        %v5374 = vor.u32 %v5371, %v5372
        %v5375 = vsel %vm5121, %v5367, %v5374
        %v5376 = vrot.slane %v5371, 4
        %v5378 = vshrl.u32 %v5114, 16
        %v5380 = vrot.slane %v5378, 7
        %v5381 = vshll.u32 %v5114, 16
        %v5383 = vor.u32 %v5380, %v5381
        %v5384 = vrot.slane %v5380, 4
        %v5386 = vshrl.u32 %v5115, 16
        %v5388 = vrot.slane %v5386, 7
        %v5389 = vshll.u32 %v5115, 16
        %v5391 = vor.u32 %v5388, %v5389
        %v5392 = vsel %vm5121, %v5384, %v5391
        %v5393 = vrot.slane %v5388, 4
        %s5442 = scalar_lea.vmem %s5118, 12 [#allocation2]
        %vm5443 = vcmask 1043456
        %vm5444 = vsmask.f32 7938
        %vm5445 = vmand %vm5443, %vm5444
        %v5446 = vld [vmem:[%s5442] sm:$0xf]
        %v5447 = vsel %vm5445, %v5128, %v5446
        %5448 = vst [vmem:[%s5442] sm:$0xf] %v5447
        %5449 = vst [vmem:[%s5442 + $0x4] sm:$0xf] %v5137
        %vm5450 = vcmask 1040384
        %vm5451 = vmand %vm5450, %vm5119
        %v5452 = vld [vmem:[%s5442 + $0x8] sm:$0x1]
        %v5453 = vsel %vm5451, %v5138, %v5452
        %5454 = vst [vmem:[%s5442 + $0x8] sm:$0x1] %v5453
        %v5455 = vld [vmem:[%s5442 + $0xc] sm:$0xf]
        %v5456 = vsel %vm5445, %v5145, %v5455
        %5457 = vst [vmem:[%s5442 + $0xc] sm:$0xf] %v5456
        %5458 = vst [vmem:[%s5442 + $0x10] sm:$0xf] %v5154
        %v5459 = vld [vmem:[%s5442 + $0x14] sm:$0x1]
        %v5460 = vsel %vm5451, %v5155, %v5459
        %5461 = vst [vmem:[%s5442 + $0x14] sm:$0x1] %v5460
        %v5462 = vld [vmem:[%s5442 + $0x18] sm:$0xf]
        %v5463 = vsel %vm5445, %v5162, %v5462
        %5464 = vst [vmem:[%s5442 + $0x18] sm:$0xf] %v5463
        %5465 = vst [vmem:[%s5442 + $0x1c] sm:$0xf] %v5171
        %v5466 = vld [vmem:[%s5442 + $0x20] sm:$0x1]
        %v5467 = vsel %vm5451, %v5172, %v5466
        %5468 = vst [vmem:[%s5442 + $0x20] sm:$0x1] %v5467
        %v5469 = vld [vmem:[%s5442 + $0x24] sm:$0xf]
        %v5470 = vsel %vm5445, %v5179, %v5469
        %5471 = vst [vmem:[%s5442 + $0x24] sm:$0xf] %v5470
        %5472 = vst [vmem:[%s5442 + $0x28] sm:$0xf] %v5188
        %v5473 = vld [vmem:[%s5442 + $0x2c] sm:$0x1]
        %v5474 = vsel %vm5451, %v5189, %v5473
        %5475 = vst [vmem:[%s5442 + $0x2c] sm:$0x1] %v5474
        %v5476 = vld [vmem:[%s5442 + $0x30] sm:$0xf]
        %v5477 = vsel %vm5445, %v5196, %v5476
        %5478 = vst [vmem:[%s5442 + $0x30] sm:$0xf] %v5477
        %5479 = vst [vmem:[%s5442 + $0x34] sm:$0xf] %v5205
        %v5480 = vld [vmem:[%s5442 + $0x38] sm:$0x1]
        %v5481 = vsel %vm5451, %v5206, %v5480
        %5482 = vst [vmem:[%s5442 + $0x38] sm:$0x1] %v5481
        %v5483 = vld [vmem:[%s5442 + $0x3c] sm:$0xf]
        %v5484 = vsel %vm5445, %v5213, %v5483
        %5485 = vst [vmem:[%s5442 + $0x3c] sm:$0xf] %v5484
        %5486 = vst [vmem:[%s5442 + $0x40] sm:$0xf] %v5222
        %v5487 = vld [vmem:[%s5442 + $0x44] sm:$0x1]
        %v5488 = vsel %vm5451, %v5223, %v5487
        %5489 = vst [vmem:[%s5442 + $0x44] sm:$0x1] %v5488
        %v5490 = vld [vmem:[%s5442 + $0x48] sm:$0xf]
        %v5491 = vsel %vm5445, %v5230, %v5490
        %5492 = vst [vmem:[%s5442 + $0x48] sm:$0xf] %v5491
        %5493 = vst [vmem:[%s5442 + $0x4c] sm:$0xf] %v5239
        %v5494 = vld [vmem:[%s5442 + $0x50] sm:$0x1]
        %v5495 = vsel %vm5451, %v5240, %v5494
        %5496 = vst [vmem:[%s5442 + $0x50] sm:$0x1] %v5495
        %v5497 = vld [vmem:[%s5442 + $0x54] sm:$0xf]
        %v5498 = vsel %vm5445, %v5247, %v5497
        %5499 = vst [vmem:[%s5442 + $0x54] sm:$0xf] %v5498
        %5500 = vst [vmem:[%s5442 + $0x58] sm:$0xf] %v5256
        %v5501 = vld [vmem:[%s5442 + $0x5c] sm:$0x1]
        %v5502 = vsel %vm5451, %v5257, %v5501
        %5503 = vst [vmem:[%s5442 + $0x5c] sm:$0x1] %v5502
        %v5504 = vld [vmem:[%s5442 + $0x60] sm:$0xf]
        %v5505 = vsel %vm5445, %v5264, %v5504
        %5506 = vst [vmem:[%s5442 + $0x60] sm:$0xf] %v5505
        %5507 = vst [vmem:[%s5442 + $0x64] sm:$0xf] %v5273
        %v5508 = vld [vmem:[%s5442 + $0x68] sm:$0x1]
        %v5509 = vsel %vm5451, %v5274, %v5508
        %5510 = vst [vmem:[%s5442 + $0x68] sm:$0x1] %v5509
        %v5511 = vld [vmem:[%s5442 + $0x6c] sm:$0xf]
        %v5512 = vsel %vm5445, %v5281, %v5511
        %5513 = vst [vmem:[%s5442 + $0x6c] sm:$0xf] %v5512
        %5514 = vst [vmem:[%s5442 + $0x70] sm:$0xf] %v5290
        %v5515 = vld [vmem:[%s5442 + $0x74] sm:$0x1]
        %v5516 = vsel %vm5451, %v5291, %v5515
        %5517 = vst [vmem:[%s5442 + $0x74] sm:$0x1] %v5516
        %v5518 = vld [vmem:[%s5442 + $0x78] sm:$0xf]
        %v5519 = vsel %vm5445, %v5298, %v5518
        %5520 = vst [vmem:[%s5442 + $0x78] sm:$0xf] %v5519
        %5521 = vst [vmem:[%s5442 + $0x7c] sm:$0xf] %v5307
        %v5522 = vld [vmem:[%s5442 + $0x80] sm:$0x1]
        %v5523 = vsel %vm5451, %v5308, %v5522
        %5524 = vst [vmem:[%s5442 + $0x80] sm:$0x1] %v5523
        %v5525 = vld [vmem:[%s5442 + $0x84] sm:$0xf]
        %v5526 = vsel %vm5445, %v5315, %v5525
        %5527 = vst [vmem:[%s5442 + $0x84] sm:$0xf] %v5526
        %5528 = vst [vmem:[%s5442 + $0x88] sm:$0xf] %v5324
        %v5529 = vld [vmem:[%s5442 + $0x8c] sm:$0x1]
        %v5530 = vsel %vm5451, %v5325, %v5529
        %5531 = vst [vmem:[%s5442 + $0x8c] sm:$0x1] %v5530
        %v5532 = vld [vmem:[%s5442 + $0x90] sm:$0xf]
        %v5533 = vsel %vm5445, %v5332, %v5532
        %5534 = vst [vmem:[%s5442 + $0x90] sm:$0xf] %v5533
        %5535 = vst [vmem:[%s5442 + $0x94] sm:$0xf] %v5341
        %v5536 = vld [vmem:[%s5442 + $0x98] sm:$0x1]
        %v5537 = vsel %vm5451, %v5342, %v5536
        %5538 = vst [vmem:[%s5442 + $0x98] sm:$0x1] %v5537
        %v5539 = vld [vmem:[%s5442 + $0x9c] sm:$0xf]
        %v5540 = vsel %vm5445, %v5349, %v5539
        %5541 = vst [vmem:[%s5442 + $0x9c] sm:$0xf] %v5540
        %5542 = vst [vmem:[%s5442 + $0xa0] sm:$0xf] %v5358
        %v5543 = vld [vmem:[%s5442 + $0xa4] sm:$0x1]
        %v5544 = vsel %vm5451, %v5359, %v5543
        %5545 = vst [vmem:[%s5442 + $0xa4] sm:$0x1] %v5544
        %v5546 = vld [vmem:[%s5442 + $0xa8] sm:$0xf]
        %v5547 = vsel %vm5445, %v5366, %v5546
        %5548 = vst [vmem:[%s5442 + $0xa8] sm:$0xf] %v5547
        %5549 = vst [vmem:[%s5442 + $0xac] sm:$0xf] %v5375
        %v5550 = vld [vmem:[%s5442 + $0xb0] sm:$0x1]
        %v5551 = vsel %vm5451, %v5376, %v5550
        %5552 = vst [vmem:[%s5442 + $0xb0] sm:$0x1] %v5551
        %v5553 = vld [vmem:[%s5442 + $0xb4] sm:$0xf]
        %v5554 = vsel %vm5445, %v5383, %v5553
        %5555 = vst [vmem:[%s5442 + $0xb4] sm:$0xf] %v5554
        %5556 = vst [vmem:[%s5442 + $0xb8] sm:$0xf] %v5392
        %v5557 = vld [vmem:[%s5442 + $0xbc] sm:$0x1]
        %v5558 = vsel %vm5451, %v5393, %v5557
        %5559 = vst [vmem:[%s5442 + $0xbc] sm:$0x1] %v5558
      $region48: #{repblock_forward_nchw.1} parent=31 // pred_fallthru
        _
      %p5560 = scmp.lt.s32.totalorder %s18, 1
      %s5561 = scalar_select %p5560, %s18, 1
      %s5562 = smul.addr %s5561, 32
      %s5563 = smul.addr %s5562, 8
      %s5564 = scalar_lea.vmem %s3, %s5563
      // Predicated region
      $region49: #{repblock_forward_nchw.1} parent=31 // pred_check
        %p5565 = pneg %p122
      $region50: #{repblock_forward_nchw.1} parent=31 // pred_check_branch
        %5567 = sbr.rel (%p5565) target = $region52
      $region51: #{repblock_forward_nchw.1} parent=31 // pred_region
        _
      $region52: #{repblock_forward_nchw.1} parent=31 // pred_fallthru
        _
    $region32: #{repblock_forward_nchw.1} parent=5 // pred_fallthru
      _
    %p5568 = scmp.le.s32.totalorder 2, %s9
    // Predicated region
    $region53: #{repblock_forward_nchw.1} parent=5 // pred_check
      %p5569 = pneg %p5568
    $region54: #{repblock_forward_nchw.1} parent=5 // pred_check_branch
      %5571 = sbr.rel (%p5569) target = $region56
    $region55: #{repblock_forward_nchw.1} parent=5 // pred_region
      %s5572 = ssub.s32 %s9, 2
      // Predicated region
      $region57: #{repblock_forward_nchw.1} parent=55 // pred_check
        %p5573 = pneg %p128
      $region58: #{repblock_forward_nchw.1} parent=55 // pred_check_branch
        %5575 = sbr.rel (%p5573) target = $region60
      $region59: #{repblock_forward_nchw.1} parent=55 // pred_region
        %p5576 = scmp.lt.s32.totalorder %s20, 1
        %s5577 = scalar_select %p5576, %s20, 1
        %s5578 = smul.addr %s5577, 32
        %s5579 = smul.addr %s5578, 8
        %s5580 = scalar_lea.vmem %s3, %s5579
      $region60: #{repblock_forward_nchw.1} parent=55 // pred_fallthru
        _
    $region56: #{repblock_forward_nchw.1} parent=5 // pred_fallthru
      _
  $region6: #{repblock_forward_nchw.1} parent=0 // loop_footer
    %s13 = sadd.s32 1, %s9
  $region7: #{repblock_forward_nchw.1} parent=0 // loop_footer_branch
    %8 = sbr.rel target = $region3
  $region8: #{repblock_forward_nchw.1} parent=0 // loop_exit
    _

</llo_original>
